<compile_context>
chip_gen: v7x
topology: tpu7x:2x2x1
jax: 0.10.0
libtpu: 0.0.40
codegen_flags: <defaults>
</compile_context>

<pallas_src>
import functools
import math

import jax
import jax.numpy as jnp
from jax.experimental import pallas as pl
from jax.experimental.pallas import tpu as pltpu

F32 = jnp.float32
BF16 = jnp.bfloat16
_EPS = 1e-5
_SQRT2_INV = 0.7071067811865476
_NEG = -1e30
_LANE = 128
_SUB = 8


def _rup(n, m):
    return ((n + m - 1) // m) * m


def _pad(a, shape, dtype):
    out = jnp.zeros(shape, dtype)
    return out.at[tuple(slice(0, s) for s in a.shape)].set(a.astype(dtype))


# ----------------------------- in-kernel helpers -----------------------------

def _ln(x, g, b, n_real):
    # LayerNorm over a zero-padded lane axis whose real width is n_real.
    inv_n = 1.0 / float(n_real)
    mu = jnp.sum(x, axis=-1, keepdims=True) * inv_n
    ex2 = jnp.sum(x * x, axis=-1, keepdims=True) * inv_n
    var = jnp.maximum(ex2 - mu * mu, 0.0)
    return (x - mu) * jax.lax.rsqrt(var + _EPS) * g + b


def _gelu(x):
    return 0.5 * x * (1.0 + jax.lax.erf(x * _SQRT2_INV))


def _silu(x):
    return x * jax.nn.sigmoid(x)


def _softmax_last(x):
    m = jnp.max(x, axis=-1, keepdims=True)
    e = jnp.exp(x - m)
    return e * pl.reciprocal(jnp.sum(e, axis=-1, keepdims=True), approx=True)


def _mm(a, w, b):
    # bf16 MXU matmul with f32 accumulation, f32 bias.
    return jnp.dot(a.astype(BF16), w, preferred_element_type=F32) + b


# --------------------------------- kernel ------------------------------------

def _srm_kernel(
        # data
        x_in, tx_in, pe_frames, pe_fti, pe_tbar, fmask, attn_bias, head_mask,
        # embedding weights
        skel_w, skel_b,
        txe_w1, txe_b1, txe_w2, txe_b2, txe_g, txe_be,
        fte_w1, fte_b1, fte_w2, fte_b2,
        te_w1, te_b1, te_w2, te_b2,
        # stacked encoder-layer weights (blocked leading dim of 1)
        ln1_g, ln1_b, wq, bq, wk, bk, wv, bv, wo, bo,
        ln2_g, ln2_b, wf1, bf1, wf2, bf2,
        # output head (to_skel) weights
        ts_w1, ts_b1, ts_g1, ts_be1, ts_w2, ts_b2, ts_g2, ts_be2, ts_w3, ts_b3,
        # output
        out_ref,
        # scratch: residual stream, VMEM-resident across all layers
        h_ref,
        *, bs, s_pad, n_text, nframes, num_heads, d_real, d2_real):

    layer = pl.program_id(0)
    n_layers = pl.num_programs(0)
    n_tok = bs * s_pad

    # -------------------- prologue: build the token stream -------------------
    @pl.when(layer == 0)
    def _prologue():
        h_ref[...] = jnp.zeros_like(h_ref)

        # text embedding: Linear -> GELU -> Linear -> LayerNorm
        t = _mm(tx_in[...], txe_w1[...], txe_b1[...])
        t = _mm(_gelu(t), txe_w2[...], txe_b2[...])
        t = _ln(t, txe_g[...], txe_be[...], d_real)                 # [bs*T, D]

        # frame-level timestep embedding: Linear -> SiLU -> Linear, then mask
        ft = _mm(pe_fti[...], fte_w1[...], fte_b1[...])
        ft = _mm(_silu(ft), fte_w2[...], fte_b2[...]) * fmask[...]  # [bs*F, D]

        # sequence-level (t_bar) timestep embedding
        tb = _mm(pe_tbar[...], te_w1[...], te_b1[...])
        tb = _mm(_silu(tb), te_w2[...], te_b2[...])                 # [bs, D]

        # skel embedding + positional encoding + masked frame-time embedding
        xe = _mm(x_in[...], skel_w[...], skel_b[...])
        pe_rep = jnp.concatenate([pe_frames[...]] * bs, axis=0)
        xe = xe + pe_rep + ft                                       # [bs*F, D]

        # token order per batch element: [motion | text | time | pad]
        for b in range(bs):
            base = b * s_pad
            h_ref[base:base + nframes, :] = xe[b * nframes:(b + 1) * nframes, :]
            h_ref[base + nframes:base + nframes + n_text, :] = \
                t[b * n_text:(b + 1) * n_text, :]
            h_ref[base + nframes + n_text:base + nframes + n_text + 1, :] = \
                tb[b:b + 1, :]

    # --------------- one pre-LN transformer encoder layer (every step) -------
    x = h_ref[...]                                                  # [N, D] f32

    # multi-head self-attention: whole batch + all heads per matmul
    xn = _ln(x, ln1_g[0], ln1_b[0], d_real)
    q = _mm(xn, wq[0], bq[0])          # 1/sqrt(head_dim) folded into wq/bq
    k = _mm(xn, wk[0], bk[0])
    v = _mm(xn, wv[0], bv[0])

    hm = head_mask[...][:, None, :]                                 # [H, 1, D]
    q_h = (q[None, :, :] * hm).reshape(num_heads * n_tok, q.shape[-1])
    s = jax.lax.dot_general(q_h.astype(BF16), k.astype(BF16),
                            (((1,), (1,)), ((), ())),
                            preferred_element_type=F32)             # [H*N, N]
    p = _softmax_last(s + attn_bias[...])
    o = jnp.dot(p.astype(BF16), v.astype(BF16),
                preferred_element_type=F32)                         # [H*N, D]
    o = jnp.sum(o.reshape(num_heads, n_tok, o.shape[-1]) * hm, axis=0)
    x = x + _mm(o, wo[0], bo[0])

    # feed-forward
    xn2 = _ln(x, ln2_g[0], ln2_b[0], d_real)
    hid = _gelu(_mm(xn2, wf1[0], bf1[0]))
    h_ref[...] = x + _mm(hid, wf2[0], bf2[0])

    # --------------------------- epilogue: to_skel ----------------------------
    @pl.when(layer == n_layers - 1)
    def _epilogue():
        rows = [h_ref[b * s_pad:b * s_pad + nframes, :] for b in range(bs)]
        m = rows[0] if bs == 1 else jnp.concatenate(rows, axis=0)   # [bs*F, D]
        hh = _mm(m, ts_w1[...], ts_b1[...])
        hh = _gelu(_ln(hh, ts_g1[...], ts_be1[...], d2_real))
        hh = _mm(hh, ts_w2[...], ts_b2[...])
        hh = _gelu(_ln(hh, ts_g2[...], ts_be2[...], d_real))
        out_ref[...] = _mm(hh, ts_w3[...], ts_b3[...])


# ------------------------------ pallas wrapper --------------------------------

def _const_spec(shape):
    nd = len(shape)
    return pl.BlockSpec(tuple(int(s) for s in shape), lambda l: (0,) * nd)


def _layer_spec(shape):
    nd = len(shape)
    blk = (1,) + tuple(int(s) for s in shape[1:])
    return pl.BlockSpec(blk, lambda l: (l,) + (0,) * (nd - 1))


def srm_forward(prep, x, x_mask, frame_times, tx_x, tx_mask, t_bar,
                *, dims, num_heads, max_timesteps):
    d, d_pad = dims['d'], dims['d_pad']
    nfeats, nf_pad = dims['nfeats'], dims['nf_pad']
    tx_pad = dims['tx_pad']
    bs, nframes, _ = x.shape
    n_text = tx_x.shape[1]
    s_pad = _rup(nframes + n_text + 1, _SUB)
    num_layers = prep['wq'].shape[0]
    hd = d // num_heads
    pe = prep['pe']                                                 # [T, D_pad]

    # ---------------- cheap XLA glue: gathers, masks, padding ----------------
    fti = jnp.clip((frame_times * (max_timesteps - 1)).astype(jnp.int32),
                   0, max_timesteps - 1)
    tbi = jnp.clip((t_bar * (max_timesteps - 1)).astype(jnp.int32),
                   0, max_timesteps - 1)
    pe_fti = pe[fti.reshape(-1)].astype(BF16)                       # [bs*F, D]
    pe_tbar = pe[tbi].astype(BF16)                                  # [bs, D]
    pe_frames = pe[:nframes]                                        # [F, D] f32

    x_in = _pad(x.astype(F32).reshape(bs * nframes, nfeats),
                (bs * nframes, nf_pad), BF16)
    tx_in = _pad(tx_x.astype(F32).reshape(bs * n_text, tx_x.shape[2]),
                 (bs * n_text, tx_pad), BF16)
    fmask = x_mask.astype(F32).reshape(bs * nframes, 1)

    # key-padding mask -> additive bias; token order: [motion | text | time]
    valid = jnp.concatenate([x_mask.astype(F32), tx_mask.astype(F32),
                             jnp.ones((bs, 1), F32)], axis=1)
    valid = _pad(valid, (bs, s_pad), F32)                           # [bs, S]
    row_b = jnp.arange(bs)[:, None]
    col_b = jnp.repeat(jnp.arange(bs), s_pad)[None, :]
    ok = (row_b == col_b) & (valid.reshape(1, bs * s_pad) > 0.5)
    bias_bk = jnp.where(ok, 0.0, _NEG).astype(F32)                  # [bs, bs*S]
    attn_bias = jnp.broadcast_to(
        bias_bk[None, :, None, :], (num_heads, bs, s_pad, bs * s_pad)
    ).reshape(num_heads * bs * s_pad, bs * s_pad)

    lane = jnp.arange(d_pad)[None, :]
    hidx = jnp.arange(num_heads)[:, None]
    head_mask = ((lane >= hidx * hd) & (lane < (hidx + 1) * hd)).astype(F32)

    # ------------------------------ kernel call -------------------------------
    data_inputs = [x_in, tx_in, pe_frames, pe_fti, pe_tbar, fmask,
                   attn_bias, head_mask]
    emb_inputs = [prep[k] for k in (
        'skel_w', 'skel_b',
        'txe_w1', 'txe_b1', 'txe_w2', 'txe_b2', 'txe_g', 'txe_be',
        'fte_w1', 'fte_b1', 'fte_w2', 'fte_b2',
        'te_w1', 'te_b1', 'te_w2', 'te_b2')]
    layer_inputs = [prep[k] for k in (
        'ln1_g', 'ln1_b', 'wq', 'bq', 'wk', 'bk', 'wv', 'bv', 'wo', 'bo',
        'ln2_g', 'ln2_b', 'wf1', 'bf1', 'wf2', 'bf2')]
    tail_inputs = [prep[k] for k in (
        'ts_w1', 'ts_b1', 'ts_g1', 'ts_be1', 'ts_w2', 'ts_b2',
        'ts_g2', 'ts_be2', 'ts_w3', 'ts_b3')]

    in_specs = ([_const_spec(a.shape) for a in data_inputs + emb_inputs]
                + [_layer_spec(a.shape) for a in layer_inputs]
                + [_const_spec(a.shape) for a in tail_inputs])

    kernel = functools.partial(
        _srm_kernel, bs=bs, s_pad=s_pad, n_text=n_text, nframes=nframes,
        num_heads=num_heads, d_real=d, d2_real=2 * d)

    # NOTE: for production sizes (d~512, ff~2048, long S) raise
    # vmem_limit_bytes via pltpu.CompilerParams; defaults suffice here.
    out = pl.pallas_call(
        kernel,
        out_shape=jax.ShapeDtypeStruct((bs * nframes, nf_pad), F32),
        grid=(num_layers,),
        in_specs=in_specs,
        out_specs=_const_spec((bs * nframes, nf_pad)),
        scratch_shapes=[pltpu.VMEM((bs * s_pad, d_pad), F32)],
        compiler_params=pltpu.CompilerParams(
            dimension_semantics=("arbitrary",)),
    )(*data_inputs, *emb_inputs, *layer_inputs, *tail_inputs)

    noise_prediction = out[:, :nfeats].reshape(bs, nframes, nfeats)
    return {'noise_prediction': noise_prediction}


# --------------------------- parameters / preparation -------------------------

def sinusoidal_pe(max_len, d):
    pos = jnp.arange(max_len, dtype=F32)[:, None]
    div = jnp.exp(jnp.arange(0, d, 2, dtype=F32) * (-math.log(10000.0) / d))
    pe = jnp.zeros((max_len, d), F32)
    pe = pe.at[:, 0::2].set(jnp.sin(pos * div))
    pe = pe.at[:, 1::2].set(jnp.cos(pos * div))
    return pe


def init_params(key, nfeats, tx_dim, latent_dim, ff_size, num_layers, max_timesteps):
    d = latent_dim

    def dense(k, n_in, n_out):
        w = jax.random.normal(k, (n_in, n_out), F32) * 0.02
        b = jnp.zeros((1, n_out), F32)
        return w, b

    keys = iter(jax.random.split(key, 32 + 8 * num_layers))
    params = {}

    w1, b1 = dense(next(keys), tx_dim, 2 * d)
    w2, b2 = dense(next(keys), 2 * d, d)
    params['tx_embedding'] = dict(w1=w1, b1=b1, w2=w2, b2=b2,
                                  g=jnp.ones((1, d), F32),
                                  beta=jnp.zeros((1, d), F32))

    ws, bsk = dense(next(keys), nfeats, d)
    params['skel'] = dict(w=ws, b=bsk)

    for name in ('time_embed', 'frame_time_embed'):
        w1, b1 = dense(next(keys), d, d)
        w2, b2 = dense(next(keys), d, d)
        params[name] = dict(w1=w1, b1=b1, w2=w2, b2=b2)

    layers = []
    for _ in range(num_layers):
        wq, bq = dense(next(keys), d, d)
        wk, bk = dense(next(keys), d, d)
        wv, bv = dense(next(keys), d, d)
        wo, bo = dense(next(keys), d, d)
        wf1, bf1 = dense(next(keys), d, ff_size)
        wf2, bf2 = dense(next(keys), ff_size, d)
        layers.append(dict(
            ln1_g=jnp.ones((1, d), F32), ln1_b=jnp.zeros((1, d), F32),
            wq=wq, bq=bq, wk=wk, bk=bk, wv=wv, bv=bv, wo=wo, bo=bo,
            ln2_g=jnp.ones((1, d), F32), ln2_b=jnp.zeros((1, d), F32),
            wf1=wf1, bf1=bf1, wf2=wf2, bf2=bf2))
    params['layers'] = layers

    w1, b1 = dense(next(keys), d, 2 * d)
    w2, b2 = dense(next(keys), 2 * d, d)
    w3, b3 = dense(next(keys), d, nfeats)
    params['to_skel'] = dict(
        w1=w1, b1=b1, g1=jnp.ones((1, 2 * d), F32), be1=jnp.zeros((1, 2 * d), F32),
        w2=w2, b2=b2, g2=jnp.ones((1, d), F32), be2=jnp.zeros((1, d), F32),
        w3=w3, b3=b3)

    params['pe'] = sinusoidal_pe(max_timesteps, d)
    return params


def prepare_params(p, *, num_heads):
    """Pad to TPU-friendly shapes (128-lane multiples), cast matmul weights to
    bf16, fold 1/sqrt(head_dim) into wq/bq, stack encoder layers along [L]."""
    d = p['skel']['w'].shape[1]
    nfeats = p['skel']['w'].shape[0]
    tx_dim = p['tx_embedding']['w1'].shape[0]
    ff = p['layers'][0]['wf1'].shape[1]
    d_pad, d2_pad = _rup(d, _LANE), _rup(2 * d, _LANE)
    nf_pad, tx_pad, ff_pad = _rup(nfeats, _LANE), _rup(tx_dim, _LANE), _rup(ff, _LANE)

    W = lambda a, s: _pad(a, s, BF16)   # matmul weights -> bf16
    V = lambda a, s: _pad(a, s, F32)    # biases / LN params -> f32

    prep = {}
    prep['skel_w'] = W(p['skel']['w'], (nf_pad, d_pad))
    prep['skel_b'] = V(p['skel']['b'], (1, d_pad))

    txe = p['tx_embedding']
    prep['txe_w1'] = W(txe['w1'], (tx_pad, d2_pad))
    prep['txe_b1'] = V(txe['b1'], (1, d2_pad))
    prep['txe_w2'] = W(txe['w2'], (d2_pad, d_pad))
    prep['txe_b2'] = V(txe['b2'], (1, d_pad))
    prep['txe_g'] = V(txe['g'], (1, d_pad))
    prep['txe_be'] = V(txe['beta'], (1, d_pad))

    for name, tag in (('frame_time_embed', 'fte'), ('time_embed', 'te')):
        q = p[name]
        prep[tag + '_w1'] = W(q['w1'], (d_pad, d_pad))
        prep[tag + '_b1'] = V(q['b1'], (1, d_pad))
        prep[tag + '_w2'] = W(q['w2'], (d_pad, d_pad))
        prep[tag + '_b2'] = V(q['b2'], (1, d_pad))

    scale = 1.0 / math.sqrt(d // num_heads)

    def stack(name, shape, dtype, mul=1.0):
        return jnp.stack([_pad(lp[name] * mul, shape, dtype)
                          for lp in p['layers']])

    prep['ln1_g'] = stack('ln1_g', (1, d_pad), F32)
    prep['ln1_b'] = stack('ln1_b', (1, d_pad), F32)
    prep['wq'] = stack('wq', (d_pad, d_pad), BF16, scale)
    prep['bq'] = stack('bq', (1, d_pad), F32, scale)
    prep['wk'] = stack('wk', (d_pad, d_pad), BF16)
    prep['bk'] = stack('bk', (1, d_pad), F32)
    prep['wv'] = stack('wv', (d_pad, d_pad), BF16)
    prep['bv'] = stack('bv', (1, d_pad), F32)
    prep['wo'] = stack('wo', (d_pad, d_pad), BF16)
    prep['bo'] = stack('bo', (1, d_pad), F32)
    prep['ln2_g'] = stack('ln2_g', (1, d_pad), F32)
    prep['ln2_b'] = stack('ln2_b', (1, d_pad), F32)
    prep['wf1'] = stack('wf1', (d_pad, ff_pad), BF16)
    prep['bf1'] = stack('bf1', (1, ff_pad), F32)
    prep['wf2'] = stack('wf2', (ff_pad, d_pad), BF16)
    prep['bf2'] = stack('bf2', (1, d_pad), F32)

    ts = p['to_skel']
    prep['ts_w1'] = W(ts['w1'], (d_pad, d2_pad))
    prep['ts_b1'] = V(ts['b1'], (1, d2_pad))
    prep['ts_g1'] = V(ts['g1'], (1, d2_pad))
    prep['ts_be1'] = V(ts['be1'], (1, d2_pad))
    prep['ts_w2'] = W(ts['w2'], (d2_pad, d_pad))
    prep['ts_b2'] = V(ts['b2'], (1, d_pad))
    prep['ts_g2'] = V(ts['g2'], (1, d_pad))
    prep['ts_be2'] = V(ts['be2'], (1, d_pad))
    prep['ts_w3'] = W(ts['w3'], (d_pad, nf_pad))
    prep['ts_b3'] = V(ts['b3'], (1, nf_pad))

    prep['pe'] = V(p['pe'], (p['pe'].shape[0], d_pad))

    dims = dict(d=d, nfeats=nfeats, tx_dim=tx_dim, ff=ff,
                d_pad=d_pad, d2_pad=d2_pad, nf_pad=nf_pad,
                tx_pad=tx_pad, ff_pad=ff_pad)
    return prep, dims


# ----------------------------------- main --------------------------------------

if __name__ == "__main__":
    bs, nframes, nfeats = 2, 8, 6
    tx_dim, n_text = 16, 4
    latent_dim, ff_size, num_layers, num_heads = 32, 64, 2, 4
    max_timesteps = 1000

    key = jax.random.PRNGKey(0)
    kp, kx, kft, ktb, ktx = jax.random.split(key, 5)
    raw = init_params(kp, nfeats, tx_dim, latent_dim, ff_size, num_layers,
                      max_timesteps)
    params, dims = prepare_params(raw, num_heads=num_heads)

    x = jax.random.normal(kx, (bs, nframes, nfeats), F32)
    x_mask = jnp.array([[True] * 8, [True] * 6 + [False] * 2])
    frame_times = jax.random.uniform(kft, (bs, nframes), F32)
    t_bar = jax.random.uniform(ktb, (bs,), F32)
    tx_x = jax.random.normal(ktx, (bs, n_text, tx_dim), F32)
    tx_mask = jnp.array([[True, True, True, True], [True, True, True, False]])

    fwd = jax.jit(functools.partial(srm_forward, dims=dims,
                                    num_heads=num_heads,
                                    max_timesteps=max_timesteps))
    out = fwd(params, x, x_mask, frame_times, tx_x, tx_mask, t_bar)
    pred = jax.block_until_ready(out['noise_prediction'])
    assert pred.shape == (bs, nframes, nfeats)
    assert bool(jnp.all(jnp.isfinite(pred)))
    print("KERNEL_OK")
</pallas_src>

<mosaic_0001>
module attributes {stable_mosaic.version = 11 : i64} {
  func.func @_srm_kernel(%arg0: i32, %arg1: memref<16x128xbf16, #tpu.memory_space<vmem>>, %arg2: memref<8x128xbf16, #tpu.memory_space<vmem>>, %arg3: memref<8x128xf32, #tpu.memory_space<vmem>>, %arg4: memref<16x128xbf16, #tpu.memory_space<vmem>>, %arg5: memref<2x128xbf16, #tpu.memory_space<vmem>>, %arg6: memref<16x1xf32, #tpu.memory_space<vmem>>, %arg7: memref<128x32xf32, #tpu.memory_space<vmem>>, %arg8: memref<4x128xf32, #tpu.memory_space<vmem>>, %arg9: memref<128x128xbf16, #tpu.memory_space<vmem>>, %arg10: memref<1x128xf32, #tpu.memory_space<vmem>>, %arg11: memref<128x128xbf16, #tpu.memory_space<vmem>>, %arg12: memref<1x128xf32, #tpu.memory_space<vmem>>, %arg13: memref<128x128xbf16, #tpu.memory_space<vmem>>, %arg14: memref<1x128xf32, #tpu.memory_space<vmem>>, %arg15: memref<1x128xf32, #tpu.memory_space<vmem>>, %arg16: memref<1x128xf32, #tpu.memory_space<vmem>>, %arg17: memref<128x128xbf16, #tpu.memory_space<vmem>>, %arg18: memref<1x128xf32, #tpu.memory_space<vmem>>, %arg19: memref<128x128xbf16, #tpu.memory_space<vmem>>, %arg20: memref<1x128xf32, #tpu.memory_space<vmem>>, %arg21: memref<128x128xbf16, #tpu.memory_space<vmem>>, %arg22: memref<1x128xf32, #tpu.memory_space<vmem>>, %arg23: memref<128x128xbf16, #tpu.memory_space<vmem>>, %arg24: memref<1x128xf32, #tpu.memory_space<vmem>>, %arg25: memref<1x1x128xf32, #tpu.memory_space<vmem>>, %arg26: memref<1x1x128xf32, #tpu.memory_space<vmem>>, %arg27: memref<1x128x128xbf16, #tpu.memory_space<vmem>>, %arg28: memref<1x1x128xf32, #tpu.memory_space<vmem>>, %arg29: memref<1x128x128xbf16, #tpu.memory_space<vmem>>, %arg30: memref<1x1x128xf32, #tpu.memory_space<vmem>>, %arg31: memref<1x128x128xbf16, #tpu.memory_space<vmem>>, %arg32: memref<1x1x128xf32, #tpu.memory_space<vmem>>, %arg33: memref<1x128x128xbf16, #tpu.memory_space<vmem>>, %arg34: memref<1x1x128xf32, #tpu.memory_space<vmem>>, %arg35: memref<1x1x128xf32, #tpu.memory_space<vmem>>, %arg36: memref<1x1x128xf32, #tpu.memory_space<vmem>>, %arg37: memref<1x128x128xbf16, #tpu.memory_space<vmem>>, %arg38: memref<1x1x128xf32, #tpu.memory_space<vmem>>, %arg39: memref<1x128x128xbf16, #tpu.memory_space<vmem>>, %arg40: memref<1x1x128xf32, #tpu.memory_space<vmem>>, %arg41: memref<128x128xbf16, #tpu.memory_space<vmem>>, %arg42: memref<1x128xf32, #tpu.memory_space<vmem>>, %arg43: memref<1x128xf32, #tpu.memory_space<vmem>>, %arg44: memref<1x128xf32, #tpu.memory_space<vmem>>, %arg45: memref<128x128xbf16, #tpu.memory_space<vmem>>, %arg46: memref<1x128xf32, #tpu.memory_space<vmem>>, %arg47: memref<1x128xf32, #tpu.memory_space<vmem>>, %arg48: memref<1x128xf32, #tpu.memory_space<vmem>>, %arg49: memref<128x128xbf16, #tpu.memory_space<vmem>>, %arg50: memref<1x128xf32, #tpu.memory_space<vmem>>, %arg51: memref<16x128xf32, #tpu.memory_space<vmem>>, %arg52: memref<32x128xf32, #tpu.memory_space<vmem>>) attributes {dimension_semantics = [#tpu.dimension_semantics<arbitrary>], iteration_bounds = array<i64: 2>, scalar_prefetch = 0 : i64, scratch_operands = 1 : i64, tpu.core_type = #tpu.core_type<tc>, window_params = [{pipeline_mode = #tpu.pipeline_mode<synchronous>, transform_indices = @transform_0, window_bounds = array<i64: 16, 128>}, {pipeline_mode = #tpu.pipeline_mode<synchronous>, transform_indices = @transform_1, window_bounds = array<i64: 8, 128>}, {pipeline_mode = #tpu.pipeline_mode<synchronous>, transform_indices = @transform_2, window_bounds = array<i64: 8, 128>}, {pipeline_mode = #tpu.pipeline_mode<synchronous>, transform_indices = @transform_3, window_bounds = array<i64: 16, 128>}, {pipeline_mode = #tpu.pipeline_mode<synchronous>, transform_indices = @transform_4, window_bounds = array<i64: 2, 128>}, {pipeline_mode = #tpu.pipeline_mode<synchronous>, transform_indices = @transform_5, window_bounds = array<i64: 16, 1>}, {pipeline_mode = #tpu.pipeline_mode<synchronous>, transform_indices = @transform_6, window_bounds = array<i64: 128, 32>}, {pipeline_mode = #tpu.pipeline_mode<synchronous>, transform_indices = @transform_7, window_bounds = array<i64: 4, 128>}, {pipeline_mode = #tpu.pipeline_mode<synchronous>, transform_indices = @transform_8, window_bounds = array<i64: 128, 128>}, {pipeline_mode = #tpu.pipeline_mode<synchronous>, transform_indices = @transform_9, window_bounds = array<i64: 1, 128>}, {pipeline_mode = #tpu.pipeline_mode<synchronous>, transform_indices = @transform_10, window_bounds = array<i64: 128, 128>}, {pipeline_mode = #tpu.pipeline_mode<synchronous>, transform_indices = @transform_11, window_bounds = array<i64: 1, 128>}, {pipeline_mode = #tpu.pipeline_mode<synchronous>, transform_indices = @transform_12, window_bounds = array<i64: 128, 128>}, {pipeline_mode = #tpu.pipeline_mode<synchronous>, transform_indices = @transform_13, window_bounds = array<i64: 1, 128>}, {pipeline_mode = #tpu.pipeline_mode<synchronous>, transform_indices = @transform_14, window_bounds = array<i64: 1, 128>}, {pipeline_mode = #tpu.pipeline_mode<synchronous>, transform_indices = @transform_15, window_bounds = array<i64: 1, 128>}, {pipeline_mode = #tpu.pipeline_mode<synchronous>, transform_indices = @transform_16, window_bounds = array<i64: 128, 128>}, {pipeline_mode = #tpu.pipeline_mode<synchronous>, transform_indices = @transform_17, window_bounds = array<i64: 1, 128>}, {pipeline_mode = #tpu.pipeline_mode<synchronous>, transform_indices = @transform_18, window_bounds = array<i64: 128, 128>}, {pipeline_mode = #tpu.pipeline_mode<synchronous>, transform_indices = @transform_19, window_bounds = array<i64: 1, 128>}, {pipeline_mode = #tpu.pipeline_mode<synchronous>, transform_indices = @transform_20, window_bounds = array<i64: 128, 128>}, {pipeline_mode = #tpu.pipeline_mode<synchronous>, transform_indices = @transform_21, window_bounds = array<i64: 1, 128>}, {pipeline_mode = #tpu.pipeline_mode<synchronous>, transform_indices = @transform_22, window_bounds = array<i64: 128, 128>}, {pipeline_mode = #tpu.pipeline_mode<synchronous>, transform_indices = @transform_23, window_bounds = array<i64: 1, 128>}, {transform_indices = @transform_24, window_bounds = array<i64: 1, 1, 128>}, {transform_indices = @transform_25, window_bounds = array<i64: 1, 1, 128>}, {transform_indices = @transform_26, window_bounds = array<i64: 1, 128, 128>}, {transform_indices = @transform_27, window_bounds = array<i64: 1, 1, 128>}, {transform_indices = @transform_28, window_bounds = array<i64: 1, 128, 128>}, {transform_indices = @transform_29, window_bounds = array<i64: 1, 1, 128>}, {transform_indices = @transform_30, window_bounds = array<i64: 1, 128, 128>}, {transform_indices = @transform_31, window_bounds = array<i64: 1, 1, 128>}, {transform_indices = @transform_32, window_bounds = array<i64: 1, 128, 128>}, {transform_indices = @transform_33, window_bounds = array<i64: 1, 1, 128>}, {transform_indices = @transform_34, window_bounds = array<i64: 1, 1, 128>}, {transform_indices = @transform_35, window_bounds = array<i64: 1, 1, 128>}, {transform_indices = @transform_36, window_bounds = array<i64: 1, 128, 128>}, {transform_indices = @transform_37, window_bounds = array<i64: 1, 1, 128>}, {transform_indices = @transform_38, window_bounds = array<i64: 1, 128, 128>}, {transform_indices = @transform_39, window_bounds = array<i64: 1, 1, 128>}, {pipeline_mode = #tpu.pipeline_mode<synchronous>, transform_indices = @transform_40, window_bounds = array<i64: 128, 128>}, {pipeline_mode = #tpu.pipeline_mode<synchronous>, transform_indices = @transform_41, window_bounds = array<i64: 1, 128>}, {pipeline_mode = #tpu.pipeline_mode<synchronous>, transform_indices = @transform_42, window_bounds = array<i64: 1, 128>}, {pipeline_mode = #tpu.pipeline_mode<synchronous>, transform_indices = @transform_43, window_bounds = array<i64: 1, 128>}, {pipeline_mode = #tpu.pipeline_mode<synchronous>, transform_indices = @transform_44, window_bounds = array<i64: 128, 128>}, {pipeline_mode = #tpu.pipeline_mode<synchronous>, transform_indices = @transform_45, window_bounds = array<i64: 1, 128>}, {pipeline_mode = #tpu.pipeline_mode<synchronous>, transform_indices = @transform_46, window_bounds = array<i64: 1, 128>}, {pipeline_mode = #tpu.pipeline_mode<synchronous>, transform_indices = @transform_47, window_bounds = array<i64: 1, 128>}, {pipeline_mode = #tpu.pipeline_mode<synchronous>, transform_indices = @transform_48, window_bounds = array<i64: 128, 128>}, {pipeline_mode = #tpu.pipeline_mode<synchronous>, transform_indices = @transform_49, window_bounds = array<i64: 1, 128>}, {pipeline_mode = #tpu.pipeline_mode<synchronous>, transform_indices = @transform_50, window_bounds = array<i64: 16, 128>}]} {
    %c0_i32 = arith.constant 0 : i32
    %0 = arith.cmpi eq, %arg0, %c0_i32 : i32
    %1 = arith.extui %0 : i1 to i32
    %c0_i32_0 = arith.constant 0 : i32
    %2 = arith.cmpi ne, %1, %c0_i32_0 : i32
    scf.if %2 {
      %cst_82 = arith.constant 0.000000e+00 : f32
      %151 = vector.broadcast %cst_82 : f32 to vector<32x128xf32>
      %c0_83 = arith.constant 0 : index
      %c0_84 = arith.constant 0 : index
      %152 = vector.load %arg52[%c0_83, %c0_84] : memref<32x128xf32, #tpu.memory_space<vmem>>, vector<32x128xf32>
      tpu.vector_store %arg52[%c0_83, %c0_84], %151 {strides = array<i32>} : memref<32x128xf32, #tpu.memory_space<vmem>>, vector<32x128xf32>,
      %c0_85 = arith.constant 0 : index
      %c0_86 = arith.constant 0 : index
      %153 = vector.load %arg2[%c0_85, %c0_86] : memref<8x128xbf16, #tpu.memory_space<vmem>>, vector<8x128xbf16>
      %c0_87 = arith.constant 0 : index
      %c0_88 = arith.constant 0 : index
      %154 = vector.load %arg11[%c0_87, %c0_88] : memref<128x128xbf16, #tpu.memory_space<vmem>>, vector<128x128xbf16>
      %c0_89 = arith.constant 0 : index
      %c0_90 = arith.constant 0 : index
      %155 = vector.load %arg12[%c0_89, %c0_90] : memref<1x128xf32, #tpu.memory_space<vmem>>, vector<1x128xf32>
      %cst_91 = arith.constant dense<0.000000e+00> : vector<8x128xf32>
      %156 = tpu.matmul %153, %154, %cst_91 {dimension_numbers = #tpu.dot_dimension_numbers<[1], [0], [0], [1], [0, 0, 1, 1], [], []>} : vector<8x128xbf16>, vector<128x128xbf16>, vector<8x128xf32> -> vector<8x128xf32>
      %157 = vector.broadcast %155 : vector<1x128xf32> to vector<8x128xf32>
      %158 = arith.addf %156, %157 : vector<8x128xf32>
      %cst_92 = arith.constant 5.000000e-01 : f32
      %159 = vector.broadcast %cst_92 : f32 to vector<8x128xf32>
      %160 = arith.mulf %159, %158 : vector<8x128xf32>
      %cst_93 = arith.constant 0.707106769 : f32
      %161 = vector.broadcast %cst_93 : f32 to vector<8x128xf32>
      %162 = arith.mulf %158, %161 : vector<8x128xf32>
      %163 = math.erf %162 : vector<8x128xf32>
      %cst_94 = arith.constant 1.000000e+00 : f32
      %164 = vector.broadcast %cst_94 : f32 to vector<8x128xf32>
      %165 = arith.addf %164, %163 : vector<8x128xf32>
      %166 = arith.mulf %160, %165 : vector<8x128xf32>
      %c0_95 = arith.constant 0 : index
      %c0_96 = arith.constant 0 : index
      %167 = vector.load %arg13[%c0_95, %c0_96] : memref<128x128xbf16, #tpu.memory_space<vmem>>, vector<128x128xbf16>
      %c0_97 = arith.constant 0 : index
      %c0_98 = arith.constant 0 : index
      %168 = vector.load %arg14[%c0_97, %c0_98] : memref<1x128xf32, #tpu.memory_space<vmem>>, vector<1x128xf32>
      %169 = arith.truncf %166 : vector<8x128xf32> to vector<8x128xbf16>
      %cst_99 = arith.constant dense<0.000000e+00> : vector<8x128xf32>
      %170 = tpu.matmul %169, %167, %cst_99 {dimension_numbers = #tpu.dot_dimension_numbers<[1], [0], [0], [1], [0, 0, 1, 1], [], []>} : vector<8x128xbf16>, vector<128x128xbf16>, vector<8x128xf32> -> vector<8x128xf32>
      %171 = vector.broadcast %168 : vector<1x128xf32> to vector<8x128xf32>
      %172 = arith.addf %170, %171 : vector<8x128xf32>
      %c0_100 = arith.constant 0 : index
      %c0_101 = arith.constant 0 : index
      %173 = vector.load %arg15[%c0_100, %c0_101] : memref<1x128xf32, #tpu.memory_space<vmem>>, vector<1x128xf32>
      %c0_102 = arith.constant 0 : index
      %c0_103 = arith.constant 0 : index
      %174 = vector.load %arg16[%c0_102, %c0_103] : memref<1x128xf32, #tpu.memory_space<vmem>>, vector<1x128xf32>
      %cst_104 = arith.constant dense<0.000000e+00> : vector<8xf32>
      %175 = vector.multi_reduction <add>, %172, %cst_104 [1] : vector<8x128xf32> to vector<8xf32>
      %176 = vector.shape_cast %175 : vector<8xf32> to vector<8x1xf32>
      %cst_105 = arith.constant 3.125000e-02 : f32
      %177 = vector.broadcast %cst_105 : f32 to vector<8x1xf32>
      %178 = arith.mulf %176, %177 : vector<8x1xf32>
      %179 = arith.mulf %172, %172 : vector<8x128xf32>
      %cst_106 = arith.constant dense<0.000000e+00> : vector<8xf32>
      %180 = vector.multi_reduction <add>, %179, %cst_106 [1] : vector<8x128xf32> to vector<8xf32>
      %181 = vector.shape_cast %180 : vector<8xf32> to vector<8x1xf32>
      %cst_107 = arith.constant 3.125000e-02 : f32
      %182 = vector.broadcast %cst_107 : f32 to vector<8x1xf32>
      %183 = arith.mulf %181, %182 : vector<8x1xf32>
      %184 = arith.mulf %178, %178 : vector<8x1xf32>
      %185 = arith.subf %183, %184 : vector<8x1xf32>
      %cst_108 = arith.constant 0.000000e+00 : f32
      %186 = vector.broadcast %cst_108 : f32 to vector<8x1xf32>
      %187 = arith.maximumf %185, %186 : vector<8x1xf32>
      %188 = vector.broadcast %178 : vector<8x1xf32> to vector<8x128xf32>
      %189 = arith.subf %172, %188 : vector<8x128xf32>
      %cst_109 = arith.constant 9.99999974E-6 : f32
      %190 = vector.broadcast %cst_109 : f32 to vector<8x1xf32>
      %191 = arith.addf %187, %190 : vector<8x1xf32>
      %192 = math.rsqrt %191 : vector<8x1xf32>
      %193 = vector.broadcast %192 : vector<8x1xf32> to vector<8x128xf32>
      %194 = arith.mulf %189, %193 : vector<8x128xf32>
      %195 = vector.broadcast %173 : vector<1x128xf32> to vector<8x128xf32>
      %196 = arith.mulf %194, %195 : vector<8x128xf32>
      %197 = vector.broadcast %174 : vector<1x128xf32> to vector<8x128xf32>
      %198 = arith.addf %196, %197 : vector<8x128xf32>
      %c0_110 = arith.constant 0 : index
      %c0_111 = arith.constant 0 : index
      %199 = vector.load %arg4[%c0_110, %c0_111] : memref<16x128xbf16, #tpu.memory_space<vmem>>, vector<16x128xbf16>
      %c0_112 = arith.constant 0 : index
      %c0_113 = arith.constant 0 : index
      %200 = vector.load %arg17[%c0_112, %c0_113] : memref<128x128xbf16, #tpu.memory_space<vmem>>, vector<128x128xbf16>
      %c0_114 = arith.constant 0 : index
      %c0_115 = arith.constant 0 : index
      %201 = vector.load %arg18[%c0_114, %c0_115] : memref<1x128xf32, #tpu.memory_space<vmem>>, vector<1x128xf32>
      %cst_116 = arith.constant dense<0.000000e+00> : vector<16x128xf32>
      %202 = tpu.matmul %199, %200, %cst_116 {dimension_numbers = #tpu.dot_dimension_numbers<[1], [0], [0], [1], [0, 0, 1, 1], [], []>} : vector<16x128xbf16>, vector<128x128xbf16>, vector<16x128xf32> -> vector<16x128xf32>
      %203 = vector.broadcast %201 : vector<1x128xf32> to vector<16x128xf32>
      %204 = arith.addf %202, %203 : vector<16x128xf32>
      %205 = arith.negf %204 : vector<16x128xf32>
      %206 = math.exp %205 : vector<16x128xf32>
      %cst_117 = arith.constant 1.000000e+00 : f32
      %207 = vector.broadcast %cst_117 : f32 to vector<16x128xf32>
      %208 = arith.addf %207, %206 : vector<16x128xf32>
      %209 = arith.divf %207, %208 : vector<16x128xf32>
      %210 = arith.mulf %204, %209 : vector<16x128xf32>
      %c0_118 = arith.constant 0 : index
      %c0_119 = arith.constant 0 : index
      %211 = vector.load %arg19[%c0_118, %c0_119] : memref<128x128xbf16, #tpu.memory_space<vmem>>, vector<128x128xbf16>
      %c0_120 = arith.constant 0 : index
      %c0_121 = arith.constant 0 : index
      %212 = vector.load %arg20[%c0_120, %c0_121] : memref<1x128xf32, #tpu.memory_space<vmem>>, vector<1x128xf32>
      %213 = arith.truncf %210 : vector<16x128xf32> to vector<16x128xbf16>
      %cst_122 = arith.constant dense<0.000000e+00> : vector<16x128xf32>
      %214 = tpu.matmul %213, %211, %cst_122 {dimension_numbers = #tpu.dot_dimension_numbers<[1], [0], [0], [1], [0, 0, 1, 1], [], []>} : vector<16x128xbf16>, vector<128x128xbf16>, vector<16x128xf32> -> vector<16x128xf32>
      %215 = vector.broadcast %212 : vector<1x128xf32> to vector<16x128xf32>
      %216 = arith.addf %214, %215 : vector<16x128xf32>
      %c0_123 = arith.constant 0 : index
      %c0_124 = arith.constant 0 : index
      %217 = vector.load %arg6[%c0_123, %c0_124] : memref<16x1xf32, #tpu.memory_space<vmem>>, vector<16x1xf32>
      %218 = vector.broadcast %217 : vector<16x1xf32> to vector<16x128xf32>
      %219 = arith.mulf %216, %218 : vector<16x128xf32>
      %c0_125 = arith.constant 0 : index
      %c0_126 = arith.constant 0 : index
      %220 = vector.load %arg5[%c0_125, %c0_126] : memref<2x128xbf16, #tpu.memory_space<vmem>>, vector<2x128xbf16>
      %c0_127 = arith.constant 0 : index
      %c0_128 = arith.constant 0 : index
      %221 = vector.load %arg21[%c0_127, %c0_128] : memref<128x128xbf16, #tpu.memory_space<vmem>>, vector<128x128xbf16>
      %c0_129 = arith.constant 0 : index
      %c0_130 = arith.constant 0 : index
      %222 = vector.load %arg22[%c0_129, %c0_130] : memref<1x128xf32, #tpu.memory_space<vmem>>, vector<1x128xf32>
      %cst_131 = arith.constant dense<0.000000e+00> : vector<2x128xf32>
      %223 = tpu.matmul %220, %221, %cst_131 {dimension_numbers = #tpu.dot_dimension_numbers<[1], [0], [0], [1], [0, 0, 1, 1], [], []>} : vector<2x128xbf16>, vector<128x128xbf16>, vector<2x128xf32> -> vector<2x128xf32>
      %224 = vector.broadcast %222 : vector<1x128xf32> to vector<2x128xf32>
      %225 = arith.addf %223, %224 : vector<2x128xf32>
      %226 = arith.negf %225 : vector<2x128xf32>
      %227 = math.exp %226 : vector<2x128xf32>
      %cst_132 = arith.constant 1.000000e+00 : f32
      %228 = vector.broadcast %cst_132 : f32 to vector<2x128xf32>
      %229 = arith.addf %228, %227 : vector<2x128xf32>
      %230 = arith.divf %228, %229 : vector<2x128xf32>
      %231 = arith.mulf %225, %230 : vector<2x128xf32>
      %c0_133 = arith.constant 0 : index
      %c0_134 = arith.constant 0 : index
      %232 = vector.load %arg23[%c0_133, %c0_134] : memref<128x128xbf16, #tpu.memory_space<vmem>>, vector<128x128xbf16>
      %c0_135 = arith.constant 0 : index
      %c0_136 = arith.constant 0 : index
      %233 = vector.load %arg24[%c0_135, %c0_136] : memref<1x128xf32, #tpu.memory_space<vmem>>, vector<1x128xf32>
      %234 = arith.truncf %231 : vector<2x128xf32> to vector<2x128xbf16>
      %cst_137 = arith.constant dense<0.000000e+00> : vector<2x128xf32>
      %235 = tpu.matmul %234, %232, %cst_137 {dimension_numbers = #tpu.dot_dimension_numbers<[1], [0], [0], [1], [0, 0, 1, 1], [], []>} : vector<2x128xbf16>, vector<128x128xbf16>, vector<2x128xf32> -> vector<2x128xf32>
      %236 = vector.broadcast %233 : vector<1x128xf32> to vector<2x128xf32>
      %237 = arith.addf %235, %236 : vector<2x128xf32>
      %c0_138 = arith.constant 0 : index
      %c0_139 = arith.constant 0 : index
      %238 = vector.load %arg1[%c0_138, %c0_139] : memref<16x128xbf16, #tpu.memory_space<vmem>>, vector<16x128xbf16>
      %c0_140 = arith.constant 0 : index
      %c0_141 = arith.constant 0 : index
      %239 = vector.load %arg9[%c0_140, %c0_141] : memref<128x128xbf16, #tpu.memory_space<vmem>>, vector<128x128xbf16>
      %c0_142 = arith.constant 0 : index
      %c0_143 = arith.constant 0 : index
      %240 = vector.load %arg10[%c0_142, %c0_143] : memref<1x128xf32, #tpu.memory_space<vmem>>, vector<1x128xf32>
      %cst_144 = arith.constant dense<0.000000e+00> : vector<16x128xf32>
      %241 = tpu.matmul %238, %239, %cst_144 {dimension_numbers = #tpu.dot_dimension_numbers<[1], [0], [0], [1], [0, 0, 1, 1], [], []>} : vector<16x128xbf16>, vector<128x128xbf16>, vector<16x128xf32> -> vector<16x128xf32>
      %242 = vector.broadcast %240 : vector<1x128xf32> to vector<16x128xf32>
      %243 = arith.addf %241, %242 : vector<16x128xf32>
      %c0_145 = arith.constant 0 : index
      %c0_146 = arith.constant 0 : index
      %244 = vector.load %arg3[%c0_145, %c0_146] : memref<8x128xf32, #tpu.memory_space<vmem>>, vector<8x128xf32>
      %245 = tpu.concatenate %244, %244 in 0 : vector<8x128xf32>, vector<8x128xf32> -> vector<16x128xf32>
      %246 = arith.addf %243, %245 : vector<16x128xf32>
      %247 = arith.addf %246, %219 : vector<16x128xf32>
      %248 = vector.extract_strided_slice %247 {offsets = [0, 0], sizes = [8, 128], strides = [1, 1]} : vector<16x128xf32> to vector<8x128xf32>
      %c0_147 = arith.constant 0 : index
      %c0_148 = arith.constant 0 : index
      %249 = vector.load %arg52[%c0_147, %c0_148] : memref<32x128xf32, #tpu.memory_space<vmem>>, vector<8x128xf32>
      tpu.vector_store %arg52[%c0_147, %c0_148], %248 {strides = array<i32>} : memref<32x128xf32, #tpu.memory_space<vmem>>, vector<8x128xf32>,
      %250 = vector.extract_strided_slice %198 {offsets = [0, 0], sizes = [4, 128], strides = [1, 1]} : vector<8x128xf32> to vector<4x128xf32>
      %c8 = arith.constant 8 : index
      %c0_149 = arith.constant 0 : index
      %251 = vector.load %arg52[%c8, %c0_149] : memref<32x128xf32, #tpu.memory_space<vmem>>, vector<4x128xf32>
      tpu.vector_store %arg52[%c8, %c0_149], %250 {strides = array<i32>} : memref<32x128xf32, #tpu.memory_space<vmem>>, vector<4x128xf32>,
      %252 = vector.extract_strided_slice %237 {offsets = [0, 0], sizes = [1, 128], strides = [1, 1]} : vector<2x128xf32> to vector<1x128xf32>
      %c12 = arith.constant 12 : index
      %c0_150 = arith.constant 0 : index
      %253 = vector.load %arg52[%c12, %c0_150] : memref<32x128xf32, #tpu.memory_space<vmem>>, vector<1x128xf32>
      tpu.vector_store %arg52[%c12, %c0_150], %252 {strides = array<i32>} : memref<32x128xf32, #tpu.memory_space<vmem>>, vector<1x128xf32>,
      %254 = vector.extract_strided_slice %247 {offsets = [8, 0], sizes = [8, 128], strides = [1, 1]} : vector<16x128xf32> to vector<8x128xf32>
      %c16 = arith.constant 16 : index
      %c0_151 = arith.constant 0 : index
      %255 = vector.load %arg52[%c16, %c0_151] : memref<32x128xf32, #tpu.memory_space<vmem>>, vector<8x128xf32>
      tpu.vector_store %arg52[%c16, %c0_151], %254 {strides = array<i32>} : memref<32x128xf32, #tpu.memory_space<vmem>>, vector<8x128xf32>,
      %256 = vector.extract_strided_slice %198 {offsets = [4, 0], sizes = [4, 128], strides = [1, 1]} : vector<8x128xf32> to vector<4x128xf32>
      %c24 = arith.constant 24 : index
      %c0_152 = arith.constant 0 : index
      %257 = vector.load %arg52[%c24, %c0_152] : memref<32x128xf32, #tpu.memory_space<vmem>>, vector<4x128xf32>
      tpu.vector_store %arg52[%c24, %c0_152], %256 {strides = array<i32>} : memref<32x128xf32, #tpu.memory_space<vmem>>, vector<4x128xf32>,
      %258 = vector.extract_strided_slice %237 {offsets = [1, 0], sizes = [1, 128], strides = [1, 1]} : vector<2x128xf32> to vector<1x128xf32>
      %c28 = arith.constant 28 : index
      %c0_153 = arith.constant 0 : index
      %259 = vector.load %arg52[%c28, %c0_153] : memref<32x128xf32, #tpu.memory_space<vmem>>, vector<1x128xf32>
      tpu.vector_store %arg52[%c28, %c0_153], %258 {strides = array<i32>} : memref<32x128xf32, #tpu.memory_space<vmem>>, vector<1x128xf32>,
    } else {
    }
    %c0 = arith.constant 0 : index
    %c0_1 = arith.constant 0 : index
    %3 = vector.load %arg52[%c0, %c0_1] : memref<32x128xf32, #tpu.memory_space<vmem>>, vector<32x128xf32>
    %c0_2 = arith.constant 0 : index
    %c0_3 = arith.constant 0 : index
    %c0_4 = arith.constant 0 : index
    %4 = vector.load %arg25[%c0_2, %c0_3, %c0_4] : memref<1x1x128xf32, #tpu.memory_space<vmem>>, vector<1x1x128xf32>
    %5 = vector.shape_cast %4 : vector<1x1x128xf32> to vector<1x128xf32>
    %c0_5 = arith.constant 0 : index
    %c0_6 = arith.constant 0 : index
    %c0_7 = arith.constant 0 : index
    %6 = vector.load %arg26[%c0_5, %c0_6, %c0_7] : memref<1x1x128xf32, #tpu.memory_space<vmem>>, vector<1x1x128xf32>
    %7 = vector.shape_cast %6 : vector<1x1x128xf32> to vector<1x128xf32>
    %cst = arith.constant dense<0.000000e+00> : vector<32xf32>
    %8 = vector.multi_reduction <add>, %3, %cst [1] : vector<32x128xf32> to vector<32xf32>
    %9 = vector.shape_cast %8 : vector<32xf32> to vector<32x1xf32>
    %cst_8 = arith.constant 3.125000e-02 : f32
    %10 = vector.broadcast %cst_8 : f32 to vector<32x1xf32>
    %11 = arith.mulf %9, %10 : vector<32x1xf32>
    %12 = arith.mulf %3, %3 : vector<32x128xf32>
    %cst_9 = arith.constant dense<0.000000e+00> : vector<32xf32>
    %13 = vector.multi_reduction <add>, %12, %cst_9 [1] : vector<32x128xf32> to vector<32xf32>
    %14 = vector.shape_cast %13 : vector<32xf32> to vector<32x1xf32>
    %cst_10 = arith.constant 3.125000e-02 : f32
    %15 = vector.broadcast %cst_10 : f32 to vector<32x1xf32>
    %16 = arith.mulf %14, %15 : vector<32x1xf32>
    %17 = arith.mulf %11, %11 : vector<32x1xf32>
    %18 = arith.subf %16, %17 : vector<32x1xf32>
    %cst_11 = arith.constant 0.000000e+00 : f32
    %19 = vector.broadcast %cst_11 : f32 to vector<32x1xf32>
    %20 = arith.maximumf %18, %19 : vector<32x1xf32>
    %21 = vector.broadcast %11 : vector<32x1xf32> to vector<32x128xf32>
    %22 = arith.subf %3, %21 : vector<32x128xf32>
    %cst_12 = arith.constant 9.99999974E-6 : f32
    %23 = vector.broadcast %cst_12 : f32 to vector<32x1xf32>
    %24 = arith.addf %20, %23 : vector<32x1xf32>
    %25 = math.rsqrt %24 : vector<32x1xf32>
    %26 = vector.broadcast %25 : vector<32x1xf32> to vector<32x128xf32>
    %27 = arith.mulf %22, %26 : vector<32x128xf32>
    %28 = vector.broadcast %5 : vector<1x128xf32> to vector<32x128xf32>
    %29 = arith.mulf %27, %28 : vector<32x128xf32>
    %30 = vector.broadcast %7 : vector<1x128xf32> to vector<32x128xf32>
    %31 = arith.addf %29, %30 : vector<32x128xf32>
    %c0_13 = arith.constant 0 : index
    %c0_14 = arith.constant 0 : index
    %c0_15 = arith.constant 0 : index
    %32 = vector.load %arg27[%c0_13, %c0_14, %c0_15] : memref<1x128x128xbf16, #tpu.memory_space<vmem>>, vector<1x128x128xbf16>
    %33 = vector.shape_cast %32 : vector<1x128x128xbf16> to vector<128x128xbf16>
    %c0_16 = arith.constant 0 : index
    %c0_17 = arith.constant 0 : index
    %c0_18 = arith.constant 0 : index
    %34 = vector.load %arg28[%c0_16, %c0_17, %c0_18] : memref<1x1x128xf32, #tpu.memory_space<vmem>>, vector<1x1x128xf32>
    %35 = vector.shape_cast %34 : vector<1x1x128xf32> to vector<1x128xf32>
    %36 = arith.truncf %31 : vector<32x128xf32> to vector<32x128xbf16>
    %cst_19 = arith.constant dense<0.000000e+00> : vector<32x128xf32>
    %37 = tpu.matmul %36, %33, %cst_19 {dimension_numbers = #tpu.dot_dimension_numbers<[1], [0], [0], [1], [0, 0, 1, 1], [], []>} : vector<32x128xbf16>, vector<128x128xbf16>, vector<32x128xf32> -> vector<32x128xf32>
    %38 = vector.broadcast %35 : vector<1x128xf32> to vector<32x128xf32>
    %39 = arith.addf %37, %38 : vector<32x128xf32>
    %c0_20 = arith.constant 0 : index
    %c0_21 = arith.constant 0 : index
    %c0_22 = arith.constant 0 : index
    %40 = vector.load %arg29[%c0_20, %c0_21, %c0_22] : memref<1x128x128xbf16, #tpu.memory_space<vmem>>, vector<1x128x128xbf16>
    %41 = vector.shape_cast %40 : vector<1x128x128xbf16> to vector<128x128xbf16>
    %c0_23 = arith.constant 0 : index
    %c0_24 = arith.constant 0 : index
    %c0_25 = arith.constant 0 : index
    %42 = vector.load %arg30[%c0_23, %c0_24, %c0_25] : memref<1x1x128xf32, #tpu.memory_space<vmem>>, vector<1x1x128xf32>
    %43 = vector.shape_cast %42 : vector<1x1x128xf32> to vector<1x128xf32>
    %44 = arith.truncf %31 : vector<32x128xf32> to vector<32x128xbf16>
    %cst_26 = arith.constant dense<0.000000e+00> : vector<32x128xf32>
    %45 = tpu.matmul %44, %41, %cst_26 {dimension_numbers = #tpu.dot_dimension_numbers<[1], [0], [0], [1], [0, 0, 1, 1], [], []>} : vector<32x128xbf16>, vector<128x128xbf16>, vector<32x128xf32> -> vector<32x128xf32>
    %46 = vector.broadcast %43 : vector<1x128xf32> to vector<32x128xf32>
    %47 = arith.addf %45, %46 : vector<32x128xf32>
    %c0_27 = arith.constant 0 : index
    %c0_28 = arith.constant 0 : index
    %c0_29 = arith.constant 0 : index
    %48 = vector.load %arg31[%c0_27, %c0_28, %c0_29] : memref<1x128x128xbf16, #tpu.memory_space<vmem>>, vector<1x128x128xbf16>
    %49 = vector.shape_cast %48 : vector<1x128x128xbf16> to vector<128x128xbf16>
    %c0_30 = arith.constant 0 : index
    %c0_31 = arith.constant 0 : index
    %c0_32 = arith.constant 0 : index
    %50 = vector.load %arg32[%c0_30, %c0_31, %c0_32] : memref<1x1x128xf32, #tpu.memory_space<vmem>>, vector<1x1x128xf32>
    %51 = vector.shape_cast %50 : vector<1x1x128xf32> to vector<1x128xf32>
    %52 = arith.truncf %31 : vector<32x128xf32> to vector<32x128xbf16>
    %cst_33 = arith.constant dense<0.000000e+00> : vector<32x128xf32>
    %53 = tpu.matmul %52, %49, %cst_33 {dimension_numbers = #tpu.dot_dimension_numbers<[1], [0], [0], [1], [0, 0, 1, 1], [], []>} : vector<32x128xbf16>, vector<128x128xbf16>, vector<32x128xf32> -> vector<32x128xf32>
    %54 = vector.broadcast %51 : vector<1x128xf32> to vector<32x128xf32>
    %55 = arith.addf %53, %54 : vector<32x128xf32>
    %c0_34 = arith.constant 0 : index
    %c0_35 = arith.constant 0 : index
    %56 = vector.load %arg8[%c0_34, %c0_35] : memref<4x128xf32, #tpu.memory_space<vmem>>, vector<4x128xf32>
    %57 = vector.shape_cast %56 : vector<4x128xf32> to vector<4x1x128xf32>
    %58 = vector.shape_cast %39 : vector<32x128xf32> to vector<1x32x128xf32>
    %59 = vector.broadcast %58 : vector<1x32x128xf32> to vector<4x32x128xf32>
    %60 = vector.broadcast %57 : vector<4x1x128xf32> to vector<4x32x128xf32>
    %61 = arith.mulf %59, %60 : vector<4x32x128xf32>
    %62 = vector.shape_cast %61 : vector<4x32x128xf32> to vector<128x128xf32>
    %63 = arith.truncf %62 : vector<128x128xf32> to vector<128x128xbf16>
    %64 = arith.truncf %47 : vector<32x128xf32> to vector<32x128xbf16>
    %cst_36 = arith.constant dense<0.000000e+00> : vector<128x32xf32>
    %65 = tpu.matmul %63, %64, %cst_36 {dimension_numbers = #tpu.dot_dimension_numbers<[1], [1], [0], [0], [0, 0, 1, 0], [], []>} : vector<128x128xbf16>, vector<32x128xbf16>, vector<128x32xf32> -> vector<128x32xf32>
    %c0_37 = arith.constant 0 : index
    %c0_38 = arith.constant 0 : index
    %66 = vector.load %arg7[%c0_37, %c0_38] : memref<128x32xf32, #tpu.memory_space<vmem>>, vector<128x32xf32>
    %67 = arith.addf %65, %66 : vector<128x32xf32>
    %cst_39 = arith.constant dense<0xFF800000> : vector<128xf32>
    %68 = vector.multi_reduction <maximumf>, %67, %cst_39 [1] : vector<128x32xf32> to vector<128xf32>
    %69 = vector.shape_cast %68 : vector<128xf32> to vector<128x1xf32>
    %70 = vector.broadcast %69 : vector<128x1xf32> to vector<128x32xf32>
    %71 = arith.subf %67, %70 : vector<128x32xf32>
    %72 = math.exp %71 : vector<128x32xf32>
    %cst_40 = arith.constant dense<0.000000e+00> : vector<128xf32>
    %73 = vector.multi_reduction <add>, %72, %cst_40 [1] : vector<128x32xf32> to vector<128xf32>
    %74 = vector.shape_cast %73 : vector<128xf32> to vector<128x1xf32>
    %75 = tpu.reciprocal %74 {approx = true} : vector<128x1xf32> -> vector<128x1xf32>
    %76 = vector.broadcast %75 : vector<128x1xf32> to vector<128x32xf32>
    %77 = arith.mulf %72, %76 : vector<128x32xf32>
    %78 = arith.truncf %77 : vector<128x32xf32> to vector<128x32xbf16>
    %79 = arith.truncf %55 : vector<32x128xf32> to vector<32x128xbf16>
    %cst_41 = arith.constant dense<0.000000e+00> : vector<128x128xf32>
    %80 = tpu.matmul %78, %79, %cst_41 {dimension_numbers = #tpu.dot_dimension_numbers<[1], [0], [0], [1], [0, 0, 1, 1], [], []>} : vector<128x32xbf16>, vector<32x128xbf16>, vector<128x128xf32> -> vector<128x128xf32>
    %81 = vector.shape_cast %80 : vector<128x128xf32> to vector<4x32x128xf32>
    %82 = vector.broadcast %57 : vector<4x1x128xf32> to vector<4x32x128xf32>
    %83 = arith.mulf %81, %82 : vector<4x32x128xf32>
    %cst_42 = arith.constant dense<0.000000e+00> : vector<32x128xf32>
    %84 = vector.multi_reduction <add>, %83, %cst_42 [0] : vector<4x32x128xf32> to vector<32x128xf32>
    %c0_43 = arith.constant 0 : index
    %c0_44 = arith.constant 0 : index
    %c0_45 = arith.constant 0 : index
    %85 = vector.load %arg33[%c0_43, %c0_44, %c0_45] : memref<1x128x128xbf16, #tpu.memory_space<vmem>>, vector<1x128x128xbf16>
    %86 = vector.shape_cast %85 : vector<1x128x128xbf16> to vector<128x128xbf16>
    %c0_46 = arith.constant 0 : index
    %c0_47 = arith.constant 0 : index
    %c0_48 = arith.constant 0 : index
    %87 = vector.load %arg34[%c0_46, %c0_47, %c0_48] : memref<1x1x128xf32, #tpu.memory_space<vmem>>, vector<1x1x128xf32>
    %88 = vector.shape_cast %87 : vector<1x1x128xf32> to vector<1x128xf32>
    %89 = arith.truncf %84 : vector<32x128xf32> to vector<32x128xbf16>
    %cst_49 = arith.constant dense<0.000000e+00> : vector<32x128xf32>
    %90 = tpu.matmul %89, %86, %cst_49 {dimension_numbers = #tpu.dot_dimension_numbers<[1], [0], [0], [1], [0, 0, 1, 1], [], []>} : vector<32x128xbf16>, vector<128x128xbf16>, vector<32x128xf32> -> vector<32x128xf32>
    %91 = vector.broadcast %88 : vector<1x128xf32> to vector<32x128xf32>
    %92 = arith.addf %90, %91 : vector<32x128xf32>
    %93 = arith.addf %3, %92 : vector<32x128xf32>
    %c0_50 = arith.constant 0 : index
    %c0_51 = arith.constant 0 : index
    %c0_52 = arith.constant 0 : index
    %94 = vector.load %arg35[%c0_50, %c0_51, %c0_52] : memref<1x1x128xf32, #tpu.memory_space<vmem>>, vector<1x1x128xf32>
    %95 = vector.shape_cast %94 : vector<1x1x128xf32> to vector<1x128xf32>
    %c0_53 = arith.constant 0 : index
    %c0_54 = arith.constant 0 : index
    %c0_55 = arith.constant 0 : index
    %96 = vector.load %arg36[%c0_53, %c0_54, %c0_55] : memref<1x1x128xf32, #tpu.memory_space<vmem>>, vector<1x1x128xf32>
    %97 = vector.shape_cast %96 : vector<1x1x128xf32> to vector<1x128xf32>
    %cst_56 = arith.constant dense<0.000000e+00> : vector<32xf32>
    %98 = vector.multi_reduction <add>, %93, %cst_56 [1] : vector<32x128xf32> to vector<32xf32>
    %99 = vector.shape_cast %98 : vector<32xf32> to vector<32x1xf32>
    %cst_57 = arith.constant 3.125000e-02 : f32
    %100 = vector.broadcast %cst_57 : f32 to vector<32x1xf32>
    %101 = arith.mulf %99, %100 : vector<32x1xf32>
    %102 = arith.mulf %93, %93 : vector<32x128xf32>
    %cst_58 = arith.constant dense<0.000000e+00> : vector<32xf32>
    %103 = vector.multi_reduction <add>, %102, %cst_58 [1] : vector<32x128xf32> to vector<32xf32>
    %104 = vector.shape_cast %103 : vector<32xf32> to vector<32x1xf32>
    %cst_59 = arith.constant 3.125000e-02 : f32
    %105 = vector.broadcast %cst_59 : f32 to vector<32x1xf32>
    %106 = arith.mulf %104, %105 : vector<32x1xf32>
    %107 = arith.mulf %101, %101 : vector<32x1xf32>
    %108 = arith.subf %106, %107 : vector<32x1xf32>
    %cst_60 = arith.constant 0.000000e+00 : f32
    %109 = vector.broadcast %cst_60 : f32 to vector<32x1xf32>
    %110 = arith.maximumf %108, %109 : vector<32x1xf32>
    %111 = vector.broadcast %101 : vector<32x1xf32> to vector<32x128xf32>
    %112 = arith.subf %93, %111 : vector<32x128xf32>
    %cst_61 = arith.constant 9.99999974E-6 : f32
    %113 = vector.broadcast %cst_61 : f32 to vector<32x1xf32>
    %114 = arith.addf %110, %113 : vector<32x1xf32>
    %115 = math.rsqrt %114 : vector<32x1xf32>
    %116 = vector.broadcast %115 : vector<32x1xf32> to vector<32x128xf32>
    %117 = arith.mulf %112, %116 : vector<32x128xf32>
    %118 = vector.broadcast %95 : vector<1x128xf32> to vector<32x128xf32>
    %119 = arith.mulf %117, %118 : vector<32x128xf32>
    %120 = vector.broadcast %97 : vector<1x128xf32> to vector<32x128xf32>
    %121 = arith.addf %119, %120 : vector<32x128xf32>
    %c0_62 = arith.constant 0 : index
    %c0_63 = arith.constant 0 : index
    %c0_64 = arith.constant 0 : index
    %122 = vector.load %arg37[%c0_62, %c0_63, %c0_64] : memref<1x128x128xbf16, #tpu.memory_space<vmem>>, vector<1x128x128xbf16>
    %123 = vector.shape_cast %122 : vector<1x128x128xbf16> to vector<128x128xbf16>
    %c0_65 = arith.constant 0 : index
    %c0_66 = arith.constant 0 : index
    %c0_67 = arith.constant 0 : index
    %124 = vector.load %arg38[%c0_65, %c0_66, %c0_67] : memref<1x1x128xf32, #tpu.memory_space<vmem>>, vector<1x1x128xf32>
    %125 = vector.shape_cast %124 : vector<1x1x128xf32> to vector<1x128xf32>
    %126 = arith.truncf %121 : vector<32x128xf32> to vector<32x128xbf16>
    %cst_68 = arith.constant dense<0.000000e+00> : vector<32x128xf32>
    %127 = tpu.matmul %126, %123, %cst_68 {dimension_numbers = #tpu.dot_dimension_numbers<[1], [0], [0], [1], [0, 0, 1, 1], [], []>} : vector<32x128xbf16>, vector<128x128xbf16>, vector<32x128xf32> -> vector<32x128xf32>
    %128 = vector.broadcast %125 : vector<1x128xf32> to vector<32x128xf32>
    %129 = arith.addf %127, %128 : vector<32x128xf32>
    %cst_69 = arith.constant 5.000000e-01 : f32
    %130 = vector.broadcast %cst_69 : f32 to vector<32x128xf32>
    %131 = arith.mulf %130, %129 : vector<32x128xf32>
    %cst_70 = arith.constant 0.707106769 : f32
    %132 = vector.broadcast %cst_70 : f32 to vector<32x128xf32>
    %133 = arith.mulf %129, %132 : vector<32x128xf32>
    %134 = math.erf %133 : vector<32x128xf32>
    %cst_71 = arith.constant 1.000000e+00 : f32
    %135 = vector.broadcast %cst_71 : f32 to vector<32x128xf32>
    %136 = arith.addf %135, %134 : vector<32x128xf32>
    %137 = arith.mulf %131, %136 : vector<32x128xf32>
    %c0_72 = arith.constant 0 : index
    %c0_73 = arith.constant 0 : index
    %c0_74 = arith.constant 0 : index
    %138 = vector.load %arg39[%c0_72, %c0_73, %c0_74] : memref<1x128x128xbf16, #tpu.memory_space<vmem>>, vector<1x128x128xbf16>
    %139 = vector.shape_cast %138 : vector<1x128x128xbf16> to vector<128x128xbf16>
    %c0_75 = arith.constant 0 : index
    %c0_76 = arith.constant 0 : index
    %c0_77 = arith.constant 0 : index
    %140 = vector.load %arg40[%c0_75, %c0_76, %c0_77] : memref<1x1x128xf32, #tpu.memory_space<vmem>>, vector<1x1x128xf32>
    %141 = vector.shape_cast %140 : vector<1x1x128xf32> to vector<1x128xf32>
    %142 = arith.truncf %137 : vector<32x128xf32> to vector<32x128xbf16>
    %cst_78 = arith.constant dense<0.000000e+00> : vector<32x128xf32>
    %143 = tpu.matmul %142, %139, %cst_78 {dimension_numbers = #tpu.dot_dimension_numbers<[1], [0], [0], [1], [0, 0, 1, 1], [], []>} : vector<32x128xbf16>, vector<128x128xbf16>, vector<32x128xf32> -> vector<32x128xf32>
    %144 = vector.broadcast %141 : vector<1x128xf32> to vector<32x128xf32>
    %145 = arith.addf %143, %144 : vector<32x128xf32>
    %146 = arith.addf %93, %145 : vector<32x128xf32>
    %c0_79 = arith.constant 0 : index
    %c0_80 = arith.constant 0 : index
    %147 = vector.load %arg52[%c0_79, %c0_80] : memref<32x128xf32, #tpu.memory_space<vmem>>, vector<32x128xf32>
    tpu.vector_store %arg52[%c0_79, %c0_80], %146 {strides = array<i32>} : memref<32x128xf32, #tpu.memory_space<vmem>>, vector<32x128xf32>,
    %c1_i32 = arith.constant 1 : i32
    %148 = arith.cmpi eq, %arg0, %c1_i32 : i32
    %149 = arith.extui %148 : i1 to i32
    %c0_i32_81 = arith.constant 0 : i32
    %150 = arith.cmpi ne, %149, %c0_i32_81 : i32
    scf.if %150 {
      %c0_82 = arith.constant 0 : index
      %c0_83 = arith.constant 0 : index
      %151 = vector.load %arg52[%c0_82, %c0_83] : memref<32x128xf32, #tpu.memory_space<vmem>>, vector<8x128xf32>
      %c16 = arith.constant 16 : index
      %c0_84 = arith.constant 0 : index
      %152 = vector.load %arg52[%c16, %c0_84] : memref<32x128xf32, #tpu.memory_space<vmem>>, vector<8x128xf32>
      %153 = tpu.concatenate %151, %152 in 0 : vector<8x128xf32>, vector<8x128xf32> -> vector<16x128xf32>
      %c0_85 = arith.constant 0 : index
      %c0_86 = arith.constant 0 : index
      %154 = vector.load %arg41[%c0_85, %c0_86] : memref<128x128xbf16, #tpu.memory_space<vmem>>, vector<128x128xbf16>
      %c0_87 = arith.constant 0 : index
      %c0_88 = arith.constant 0 : index
      %155 = vector.load %arg42[%c0_87, %c0_88] : memref<1x128xf32, #tpu.memory_space<vmem>>, vector<1x128xf32>
      %156 = arith.truncf %153 : vector<16x128xf32> to vector<16x128xbf16>
      %cst_89 = arith.constant dense<0.000000e+00> : vector<16x128xf32>
      %157 = tpu.matmul %156, %154, %cst_89 {dimension_numbers = #tpu.dot_dimension_numbers<[1], [0], [0], [1], [0, 0, 1, 1], [], []>} : vector<16x128xbf16>, vector<128x128xbf16>, vector<16x128xf32> -> vector<16x128xf32>
      %158 = vector.broadcast %155 : vector<1x128xf32> to vector<16x128xf32>
      %159 = arith.addf %157, %158 : vector<16x128xf32>
      %c0_90 = arith.constant 0 : index
      %c0_91 = arith.constant 0 : index
      %160 = vector.load %arg43[%c0_90, %c0_91] : memref<1x128xf32, #tpu.memory_space<vmem>>, vector<1x128xf32>
      %c0_92 = arith.constant 0 : index
      %c0_93 = arith.constant 0 : index
      %161 = vector.load %arg44[%c0_92, %c0_93] : memref<1x128xf32, #tpu.memory_space<vmem>>, vector<1x128xf32>
      %cst_94 = arith.constant dense<0.000000e+00> : vector<16xf32>
      %162 = vector.multi_reduction <add>, %159, %cst_94 [1] : vector<16x128xf32> to vector<16xf32>
      %163 = vector.shape_cast %162 : vector<16xf32> to vector<16x1xf32>
      %cst_95 = arith.constant 1.562500e-02 : f32
      %164 = vector.broadcast %cst_95 : f32 to vector<16x1xf32>
      %165 = arith.mulf %163, %164 : vector<16x1xf32>
      %166 = arith.mulf %159, %159 : vector<16x128xf32>
      %cst_96 = arith.constant dense<0.000000e+00> : vector<16xf32>
      %167 = vector.multi_reduction <add>, %166, %cst_96 [1] : vector<16x128xf32> to vector<16xf32>
      %168 = vector.shape_cast %167 : vector<16xf32> to vector<16x1xf32>
      %cst_97 = arith.constant 1.562500e-02 : f32
      %169 = vector.broadcast %cst_97 : f32 to vector<16x1xf32>
      %170 = arith.mulf %168, %169 : vector<16x1xf32>
      %171 = arith.mulf %165, %165 : vector<16x1xf32>
      %172 = arith.subf %170, %171 : vector<16x1xf32>
      %cst_98 = arith.constant 0.000000e+00 : f32
      %173 = vector.broadcast %cst_98 : f32 to vector<16x1xf32>
      %174 = arith.maximumf %172, %173 : vector<16x1xf32>
      %175 = vector.broadcast %165 : vector<16x1xf32> to vector<16x128xf32>
      %176 = arith.subf %159, %175 : vector<16x128xf32>
      %cst_99 = arith.constant 9.99999974E-6 : f32
      %177 = vector.broadcast %cst_99 : f32 to vector<16x1xf32>
      %178 = arith.addf %174, %177 : vector<16x1xf32>
      %179 = math.rsqrt %178 : vector<16x1xf32>
      %180 = vector.broadcast %179 : vector<16x1xf32> to vector<16x128xf32>
      %181 = arith.mulf %176, %180 : vector<16x128xf32>
      %182 = vector.broadcast %160 : vector<1x128xf32> to vector<16x128xf32>
      %183 = arith.mulf %181, %182 : vector<16x128xf32>
      %184 = vector.broadcast %161 : vector<1x128xf32> to vector<16x128xf32>
      %185 = arith.addf %183, %184 : vector<16x128xf32>
      %cst_100 = arith.constant 5.000000e-01 : f32
      %186 = vector.broadcast %cst_100 : f32 to vector<16x128xf32>
      %187 = arith.mulf %186, %185 : vector<16x128xf32>
      %cst_101 = arith.constant 0.707106769 : f32
      %188 = vector.broadcast %cst_101 : f32 to vector<16x128xf32>
      %189 = arith.mulf %185, %188 : vector<16x128xf32>
      %190 = math.erf %189 : vector<16x128xf32>
      %cst_102 = arith.constant 1.000000e+00 : f32
      %191 = vector.broadcast %cst_102 : f32 to vector<16x128xf32>
      %192 = arith.addf %191, %190 : vector<16x128xf32>
      %193 = arith.mulf %187, %192 : vector<16x128xf32>
      %c0_103 = arith.constant 0 : index
      %c0_104 = arith.constant 0 : index
      %194 = vector.load %arg45[%c0_103, %c0_104] : memref<128x128xbf16, #tpu.memory_space<vmem>>, vector<128x128xbf16>
      %c0_105 = arith.constant 0 : index
      %c0_106 = arith.constant 0 : index
      %195 = vector.load %arg46[%c0_105, %c0_106] : memref<1x128xf32, #tpu.memory_space<vmem>>, vector<1x128xf32>
      %196 = arith.truncf %193 : vector<16x128xf32> to vector<16x128xbf16>
      %cst_107 = arith.constant dense<0.000000e+00> : vector<16x128xf32>
      %197 = tpu.matmul %196, %194, %cst_107 {dimension_numbers = #tpu.dot_dimension_numbers<[1], [0], [0], [1], [0, 0, 1, 1], [], []>} : vector<16x128xbf16>, vector<128x128xbf16>, vector<16x128xf32> -> vector<16x128xf32>
      %198 = vector.broadcast %195 : vector<1x128xf32> to vector<16x128xf32>
      %199 = arith.addf %197, %198 : vector<16x128xf32>
      %c0_108 = arith.constant 0 : index
      %c0_109 = arith.constant 0 : index
      %200 = vector.load %arg47[%c0_108, %c0_109] : memref<1x128xf32, #tpu.memory_space<vmem>>, vector<1x128xf32>
      %c0_110 = arith.constant 0 : index
      %c0_111 = arith.constant 0 : index
      %201 = vector.load %arg48[%c0_110, %c0_111] : memref<1x128xf32, #tpu.memory_space<vmem>>, vector<1x128xf32>
      %cst_112 = arith.constant dense<0.000000e+00> : vector<16xf32>
      %202 = vector.multi_reduction <add>, %199, %cst_112 [1] : vector<16x128xf32> to vector<16xf32>
      %203 = vector.shape_cast %202 : vector<16xf32> to vector<16x1xf32>
      %cst_113 = arith.constant 3.125000e-02 : f32
      %204 = vector.broadcast %cst_113 : f32 to vector<16x1xf32>
      %205 = arith.mulf %203, %204 : vector<16x1xf32>
      %206 = arith.mulf %199, %199 : vector<16x128xf32>
      %cst_114 = arith.constant dense<0.000000e+00> : vector<16xf32>
      %207 = vector.multi_reduction <add>, %206, %cst_114 [1] : vector<16x128xf32> to vector<16xf32>
      %208 = vector.shape_cast %207 : vector<16xf32> to vector<16x1xf32>
      %cst_115 = arith.constant 3.125000e-02 : f32
      %209 = vector.broadcast %cst_115 : f32 to vector<16x1xf32>
      %210 = arith.mulf %208, %209 : vector<16x1xf32>
      %211 = arith.mulf %205, %205 : vector<16x1xf32>
      %212 = arith.subf %210, %211 : vector<16x1xf32>
      %cst_116 = arith.constant 0.000000e+00 : f32
      %213 = vector.broadcast %cst_116 : f32 to vector<16x1xf32>
      %214 = arith.maximumf %212, %213 : vector<16x1xf32>
      %215 = vector.broadcast %205 : vector<16x1xf32> to vector<16x128xf32>
      %216 = arith.subf %199, %215 : vector<16x128xf32>
      %cst_117 = arith.constant 9.99999974E-6 : f32
      %217 = vector.broadcast %cst_117 : f32 to vector<16x1xf32>
      %218 = arith.addf %214, %217 : vector<16x1xf32>
      %219 = math.rsqrt %218 : vector<16x1xf32>
      %220 = vector.broadcast %219 : vector<16x1xf32> to vector<16x128xf32>
      %221 = arith.mulf %216, %220 : vector<16x128xf32>
      %222 = vector.broadcast %200 : vector<1x128xf32> to vector<16x128xf32>
      %223 = arith.mulf %221, %222 : vector<16x128xf32>
      %224 = vector.broadcast %201 : vector<1x128xf32> to vector<16x128xf32>
      %225 = arith.addf %223, %224 : vector<16x128xf32>
      %cst_118 = arith.constant 5.000000e-01 : f32
      %226 = vector.broadcast %cst_118 : f32 to vector<16x128xf32>
      %227 = arith.mulf %226, %225 : vector<16x128xf32>
      %cst_119 = arith.constant 0.707106769 : f32
      %228 = vector.broadcast %cst_119 : f32 to vector<16x128xf32>
      %229 = arith.mulf %225, %228 : vector<16x128xf32>
      %230 = math.erf %229 : vector<16x128xf32>
      %cst_120 = arith.constant 1.000000e+00 : f32
      %231 = vector.broadcast %cst_120 : f32 to vector<16x128xf32>
      %232 = arith.addf %231, %230 : vector<16x128xf32>
      %233 = arith.mulf %227, %232 : vector<16x128xf32>
      %c0_121 = arith.constant 0 : index
      %c0_122 = arith.constant 0 : index
      %234 = vector.load %arg49[%c0_121, %c0_122] : memref<128x128xbf16, #tpu.memory_space<vmem>>, vector<128x128xbf16>
      %c0_123 = arith.constant 0 : index
      %c0_124 = arith.constant 0 : index
      %235 = vector.load %arg50[%c0_123, %c0_124] : memref<1x128xf32, #tpu.memory_space<vmem>>, vector<1x128xf32>
      %236 = arith.truncf %233 : vector<16x128xf32> to vector<16x128xbf16>
      %cst_125 = arith.constant dense<0.000000e+00> : vector<16x128xf32>
      %237 = tpu.matmul %236, %234, %cst_125 {dimension_numbers = #tpu.dot_dimension_numbers<[1], [0], [0], [1], [0, 0, 1, 1], [], []>} : vector<16x128xbf16>, vector<128x128xbf16>, vector<16x128xf32> -> vector<16x128xf32>
      %238 = vector.broadcast %235 : vector<1x128xf32> to vector<16x128xf32>
      %239 = arith.addf %237, %238 : vector<16x128xf32>
      %c0_126 = arith.constant 0 : index
      %c0_127 = arith.constant 0 : index
      %240 = vector.load %arg51[%c0_126, %c0_127] : memref<16x128xf32, #tpu.memory_space<vmem>>, vector<16x128xf32>
      tpu.vector_store %arg51[%c0_126, %c0_127], %239 {strides = array<i32>} : memref<16x128xf32, #tpu.memory_space<vmem>>, vector<16x128xf32>,
    } else {
    }
    return
  }
  func.func @transform_0(%arg0: i32) -> (i32, i32) {
    %c0_i32 = arith.constant 0 : i32
    %c0_i32_0 = arith.constant 0 : i32
    %c0_i32_1 = arith.constant 0 : i32
    return %c0_i32, %c0_i32_0 : i32, i32
  }
  func.func @transform_1(%arg0: i32) -> (i32, i32) {
    %c0_i32 = arith.constant 0 : i32
    %c0_i32_0 = arith.constant 0 : i32
    %c0_i32_1 = arith.constant 0 : i32
    return %c0_i32, %c0_i32_0 : i32, i32
  }
  func.func @transform_2(%arg0: i32) -> (i32, i32) {
    %c0_i32 = arith.constant 0 : i32
    %c0_i32_0 = arith.constant 0 : i32
    %c0_i32_1 = arith.constant 0 : i32
    return %c0_i32, %c0_i32_0 : i32, i32
  }
  func.func @transform_3(%arg0: i32) -> (i32, i32) {
    %c0_i32 = arith.constant 0 : i32
    %c0_i32_0 = arith.constant 0 : i32
    %c0_i32_1 = arith.constant 0 : i32
    return %c0_i32, %c0_i32_0 : i32, i32
  }
  func.func @transform_4(%arg0: i32) -> (i32, i32) {
    %c0_i32 = arith.constant 0 : i32
    %c0_i32_0 = arith.constant 0 : i32
    %c0_i32_1 = arith.constant 0 : i32
    return %c0_i32, %c0_i32_0 : i32, i32
  }
  func.func @transform_5(%arg0: i32) -> (i32, i32) {
    %c0_i32 = arith.constant 0 : i32
    %c0_i32_0 = arith.constant 0 : i32
    %c0_i32_1 = arith.constant 0 : i32
    return %c0_i32, %c0_i32_0 : i32, i32
  }
  func.func @transform_6(%arg0: i32) -> (i32, i32) {
    %c0_i32 = arith.constant 0 : i32
    %c0_i32_0 = arith.constant 0 : i32
    %c0_i32_1 = arith.constant 0 : i32
    return %c0_i32, %c0_i32_0 : i32, i32
  }
  func.func @transform_7(%arg0: i32) -> (i32, i32) {
    %c0_i32 = arith.constant 0 : i32
    %c0_i32_0 = arith.constant 0 : i32
    %c0_i32_1 = arith.constant 0 : i32
    return %c0_i32, %c0_i32_0 : i32, i32
  }
  func.func @transform_8(%arg0: i32) -> (i32, i32) {
    %c0_i32 = arith.constant 0 : i32
    %c0_i32_0 = arith.constant 0 : i32
    %c0_i32_1 = arith.constant 0 : i32
    return %c0_i32, %c0_i32_0 : i32, i32
  }
  func.func @transform_9(%arg0: i32) -> (i32, i32) {
    %c0_i32 = arith.constant 0 : i32
    %c0_i32_0 = arith.constant 0 : i32
    %c0_i32_1 = arith.constant 0 : i32
    return %c0_i32, %c0_i32_0 : i32, i32
  }
  func.func @transform_10(%arg0: i32) -> (i32, i32) {
    %c0_i32 = arith.constant 0 : i32
    %c0_i32_0 = arith.constant 0 : i32
    %c0_i32_1 = arith.constant 0 : i32
    return %c0_i32, %c0_i32_0 : i32, i32
  }
  func.func @transform_11(%arg0: i32) -> (i32, i32) {
    %c0_i32 = arith.constant 0 : i32
    %c0_i32_0 = arith.constant 0 : i32
    %c0_i32_1 = arith.constant 0 : i32
    return %c0_i32, %c0_i32_0 : i32, i32
  }
  func.func @transform_12(%arg0: i32) -> (i32, i32) {
    %c0_i32 = arith.constant 0 : i32
    %c0_i32_0 = arith.constant 0 : i32
    %c0_i32_1 = arith.constant 0 : i32
    return %c0_i32, %c0_i32_0 : i32, i32
  }
  func.func @transform_13(%arg0: i32) -> (i32, i32) {
    %c0_i32 = arith.constant 0 : i32
    %c0_i32_0 = arith.constant 0 : i32
    %c0_i32_1 = arith.constant 0 : i32
    return %c0_i32, %c0_i32_0 : i32, i32
  }
  func.func @transform_14(%arg0: i32) -> (i32, i32) {
    %c0_i32 = arith.constant 0 : i32
    %c0_i32_0 = arith.constant 0 : i32
    %c0_i32_1 = arith.constant 0 : i32
    return %c0_i32, %c0_i32_0 : i32, i32
  }
  func.func @transform_15(%arg0: i32) -> (i32, i32) {
    %c0_i32 = arith.constant 0 : i32
    %c0_i32_0 = arith.constant 0 : i32
    %c0_i32_1 = arith.constant 0 : i32
    return %c0_i32, %c0_i32_0 : i32, i32
  }
  func.func @transform_16(%arg0: i32) -> (i32, i32) {
    %c0_i32 = arith.constant 0 : i32
    %c0_i32_0 = arith.constant 0 : i32
    %c0_i32_1 = arith.constant 0 : i32
    return %c0_i32, %c0_i32_0 : i32, i32
  }
  func.func @transform_17(%arg0: i32) -> (i32, i32) {
    %c0_i32 = arith.constant 0 : i32
    %c0_i32_0 = arith.constant 0 : i32
    %c0_i32_1 = arith.constant 0 : i32
    return %c0_i32, %c0_i32_0 : i32, i32
  }
  func.func @transform_18(%arg0: i32) -> (i32, i32) {
    %c0_i32 = arith.constant 0 : i32
    %c0_i32_0 = arith.constant 0 : i32
    %c0_i32_1 = arith.constant 0 : i32
    return %c0_i32, %c0_i32_0 : i32, i32
  }
  func.func @transform_19(%arg0: i32) -> (i32, i32) {
    %c0_i32 = arith.constant 0 : i32
    %c0_i32_0 = arith.constant 0 : i32
    %c0_i32_1 = arith.constant 0 : i32
    return %c0_i32, %c0_i32_0 : i32, i32
  }
  func.func @transform_20(%arg0: i32) -> (i32, i32) {
    %c0_i32 = arith.constant 0 : i32
    %c0_i32_0 = arith.constant 0 : i32
    %c0_i32_1 = arith.constant 0 : i32
    return %c0_i32, %c0_i32_0 : i32, i32
  }
  func.func @transform_21(%arg0: i32) -> (i32, i32) {
    %c0_i32 = arith.constant 0 : i32
    %c0_i32_0 = arith.constant 0 : i32
    %c0_i32_1 = arith.constant 0 : i32
    return %c0_i32, %c0_i32_0 : i32, i32
  }
  func.func @transform_22(%arg0: i32) -> (i32, i32) {
    %c0_i32 = arith.constant 0 : i32
    %c0_i32_0 = arith.constant 0 : i32
    %c0_i32_1 = arith.constant 0 : i32
    return %c0_i32, %c0_i32_0 : i32, i32
  }
  func.func @transform_23(%arg0: i32) -> (i32, i32) {
    %c0_i32 = arith.constant 0 : i32
    %c0_i32_0 = arith.constant 0 : i32
    %c0_i32_1 = arith.constant 0 : i32
    return %c0_i32, %c0_i32_0 : i32, i32
  }
  func.func @transform_24(%arg0: i32) -> (i32, i32, i32) {
    %c0_i32 = arith.constant 0 : i32
    %c0_i32_0 = arith.constant 0 : i32
    %c0_i32_1 = arith.constant 0 : i32
    return %arg0, %c0_i32, %c0_i32_0 : i32, i32, i32
  }
  func.func @transform_25(%arg0: i32) -> (i32, i32, i32) {
    %c0_i32 = arith.constant 0 : i32
    %c0_i32_0 = arith.constant 0 : i32
    %c0_i32_1 = arith.constant 0 : i32
    return %arg0, %c0_i32, %c0_i32_0 : i32, i32, i32
  }
  func.func @transform_26(%arg0: i32) -> (i32, i32, i32) {
    %c0_i32 = arith.constant 0 : i32
    %c0_i32_0 = arith.constant 0 : i32
    %c0_i32_1 = arith.constant 0 : i32
    return %arg0, %c0_i32, %c0_i32_0 : i32, i32, i32
  }
  func.func @transform_27(%arg0: i32) -> (i32, i32, i32) {
    %c0_i32 = arith.constant 0 : i32
    %c0_i32_0 = arith.constant 0 : i32
    %c0_i32_1 = arith.constant 0 : i32
    return %arg0, %c0_i32, %c0_i32_0 : i32, i32, i32
  }
  func.func @transform_28(%arg0: i32) -> (i32, i32, i32) {
    %c0_i32 = arith.constant 0 : i32
    %c0_i32_0 = arith.constant 0 : i32
    %c0_i32_1 = arith.constant 0 : i32
    return %arg0, %c0_i32, %c0_i32_0 : i32, i32, i32
  }
  func.func @transform_29(%arg0: i32) -> (i32, i32, i32) {
    %c0_i32 = arith.constant 0 : i32
    %c0_i32_0 = arith.constant 0 : i32
    %c0_i32_1 = arith.constant 0 : i32
    return %arg0, %c0_i32, %c0_i32_0 : i32, i32, i32
  }
  func.func @transform_30(%arg0: i32) -> (i32, i32, i32) {
    %c0_i32 = arith.constant 0 : i32
    %c0_i32_0 = arith.constant 0 : i32
    %c0_i32_1 = arith.constant 0 : i32
    return %arg0, %c0_i32, %c0_i32_0 : i32, i32, i32
  }
  func.func @transform_31(%arg0: i32) -> (i32, i32, i32) {
    %c0_i32 = arith.constant 0 : i32
    %c0_i32_0 = arith.constant 0 : i32
    %c0_i32_1 = arith.constant 0 : i32
    return %arg0, %c0_i32, %c0_i32_0 : i32, i32, i32
  }
  func.func @transform_32(%arg0: i32) -> (i32, i32, i32) {
    %c0_i32 = arith.constant 0 : i32
    %c0_i32_0 = arith.constant 0 : i32
    %c0_i32_1 = arith.constant 0 : i32
    return %arg0, %c0_i32, %c0_i32_0 : i32, i32, i32
  }
  func.func @transform_33(%arg0: i32) -> (i32, i32, i32) {
    %c0_i32 = arith.constant 0 : i32
    %c0_i32_0 = arith.constant 0 : i32
    %c0_i32_1 = arith.constant 0 : i32
    return %arg0, %c0_i32, %c0_i32_0 : i32, i32, i32
  }
  func.func @transform_34(%arg0: i32) -> (i32, i32, i32) {
    %c0_i32 = arith.constant 0 : i32
    %c0_i32_0 = arith.constant 0 : i32
    %c0_i32_1 = arith.constant 0 : i32
    return %arg0, %c0_i32, %c0_i32_0 : i32, i32, i32
  }
  func.func @transform_35(%arg0: i32) -> (i32, i32, i32) {
    %c0_i32 = arith.constant 0 : i32
    %c0_i32_0 = arith.constant 0 : i32
    %c0_i32_1 = arith.constant 0 : i32
    return %arg0, %c0_i32, %c0_i32_0 : i32, i32, i32
  }
  func.func @transform_36(%arg0: i32) -> (i32, i32, i32) {
    %c0_i32 = arith.constant 0 : i32
    %c0_i32_0 = arith.constant 0 : i32
    %c0_i32_1 = arith.constant 0 : i32
    return %arg0, %c0_i32, %c0_i32_0 : i32, i32, i32
  }
  func.func @transform_37(%arg0: i32) -> (i32, i32, i32) {
    %c0_i32 = arith.constant 0 : i32
    %c0_i32_0 = arith.constant 0 : i32
    %c0_i32_1 = arith.constant 0 : i32
    return %arg0, %c0_i32, %c0_i32_0 : i32, i32, i32
  }
  func.func @transform_38(%arg0: i32) -> (i32, i32, i32) {
    %c0_i32 = arith.constant 0 : i32
    %c0_i32_0 = arith.constant 0 : i32
    %c0_i32_1 = arith.constant 0 : i32
    return %arg0, %c0_i32, %c0_i32_0 : i32, i32, i32
  }
  func.func @transform_39(%arg0: i32) -> (i32, i32, i32) {
    %c0_i32 = arith.constant 0 : i32
    %c0_i32_0 = arith.constant 0 : i32
    %c0_i32_1 = arith.constant 0 : i32
    return %arg0, %c0_i32, %c0_i32_0 : i32, i32, i32
  }
  func.func @transform_40(%arg0: i32) -> (i32, i32) {
    %c0_i32 = arith.constant 0 : i32
    %c0_i32_0 = arith.constant 0 : i32
    %c0_i32_1 = arith.constant 0 : i32
    return %c0_i32, %c0_i32_0 : i32, i32
  }
  func.func @transform_41(%arg0: i32) -> (i32, i32) {
    %c0_i32 = arith.constant 0 : i32
    %c0_i32_0 = arith.constant 0 : i32
    %c0_i32_1 = arith.constant 0 : i32
    return %c0_i32, %c0_i32_0 : i32, i32
  }
  func.func @transform_42(%arg0: i32) -> (i32, i32) {
    %c0_i32 = arith.constant 0 : i32
    %c0_i32_0 = arith.constant 0 : i32
    %c0_i32_1 = arith.constant 0 : i32
    return %c0_i32, %c0_i32_0 : i32, i32
  }
  func.func @transform_43(%arg0: i32) -> (i32, i32) {
    %c0_i32 = arith.constant 0 : i32
    %c0_i32_0 = arith.constant 0 : i32
    %c0_i32_1 = arith.constant 0 : i32
    return %c0_i32, %c0_i32_0 : i32, i32
  }
  func.func @transform_44(%arg0: i32) -> (i32, i32) {
    %c0_i32 = arith.constant 0 : i32
    %c0_i32_0 = arith.constant 0 : i32
    %c0_i32_1 = arith.constant 0 : i32
    return %c0_i32, %c0_i32_0 : i32, i32
  }
  func.func @transform_45(%arg0: i32) -> (i32, i32) {
    %c0_i32 = arith.constant 0 : i32
    %c0_i32_0 = arith.constant 0 : i32
    %c0_i32_1 = arith.constant 0 : i32
    return %c0_i32, %c0_i32_0 : i32, i32
  }
  func.func @transform_46(%arg0: i32) -> (i32, i32) {
    %c0_i32 = arith.constant 0 : i32
    %c0_i32_0 = arith.constant 0 : i32
    %c0_i32_1 = arith.constant 0 : i32
    return %c0_i32, %c0_i32_0 : i32, i32
  }
  func.func @transform_47(%arg0: i32) -> (i32, i32) {
    %c0_i32 = arith.constant 0 : i32
    %c0_i32_0 = arith.constant 0 : i32
    %c0_i32_1 = arith.constant 0 : i32
    return %c0_i32, %c0_i32_0 : i32, i32
  }
  func.func @transform_48(%arg0: i32) -> (i32, i32) {
    %c0_i32 = arith.constant 0 : i32
    %c0_i32_0 = arith.constant 0 : i32
    %c0_i32_1 = arith.constant 0 : i32
    return %c0_i32, %c0_i32_0 : i32, i32
  }
  func.func @transform_49(%arg0: i32) -> (i32, i32) {
    %c0_i32 = arith.constant 0 : i32
    %c0_i32_0 = arith.constant 0 : i32
    %c0_i32_1 = arith.constant 0 : i32
    return %c0_i32, %c0_i32_0 : i32, i32
  }
  func.func @transform_50(%arg0: i32) -> (i32, i32) {
    %c0_i32 = arith.constant 0 : i32
    %c0_i32_0 = arith.constant 0 : i32
    %c0_i32_1 = arith.constant 0 : i32
    return %c0_i32, %c0_i32_0 : i32, i32
  }
}

</mosaic_0001>

<llo_original>
// kernel: srm_forward.1
$region0: #{srm_forward.1}
  #allocation0 [shape = 'u32[]', space=smem, size = 0x4, offset = 0x4, fixed_abs, tag = 'smem constant byte address 0x4 - core index']
  #allocation1 [shape = 'u32[144,128]{1,0:T(1,128)}', space=vmem, size = 0x12000, scoped, tag = 'internal scratch']
  #allocation2 [shape = 'f32[32,128]{1,0:T(8,128)}', space=vmem, size = 0x4000, scoped, tag = 'scratch operand']
  %s0 = inlined_call_operand.smem [shape: u32[51], index: -1, kind: input, shape index: {}]
  %s1 = sld [smem:[%s0]]
  %s2 = scalar_lea.smem %s0, 1
  %s3 = sld [smem:[%s2]]
  %s4 = scalar_lea.smem %s0, 2
  %s5 = sld [smem:[%s4]]
  %s6 = scalar_lea.smem %s0, 3
  %s7 = sld [smem:[%s6]]
  %s8 = scalar_lea.smem %s0, 4
  %s9 = sld [smem:[%s8]]
  %s10 = scalar_lea.smem %s0, 5
  %s11 = sld [smem:[%s10]]
  %s12 = scalar_lea.smem %s0, 6
  %s13 = sld [smem:[%s12]]
  %s14 = scalar_lea.smem %s0, 7
  %s15 = sld [smem:[%s14]]
  %s16 = scalar_lea.smem %s0, 8
  %s17 = sld [smem:[%s16]]
  %s18 = scalar_lea.smem %s0, 9
  %s19 = sld [smem:[%s18]]
  %s20 = scalar_lea.smem %s0, 10
  %s21 = sld [smem:[%s20]]
  %s22 = scalar_lea.smem %s0, 11
  %s23 = sld [smem:[%s22]]
  %s24 = scalar_lea.smem %s0, 12
  %s25 = sld [smem:[%s24]]
  %s26 = scalar_lea.smem %s0, 13
  %s27 = sld [smem:[%s26]]
  %s28 = scalar_lea.smem %s0, 14
  %s29 = sld [smem:[%s28]]
  %s30 = scalar_lea.smem %s0, 15
  %s31 = sld [smem:[%s30]]
  %s32 = scalar_lea.smem %s0, 16
  %s33 = sld [smem:[%s32]]
  %s34 = scalar_lea.smem %s0, 17
  %s35 = sld [smem:[%s34]]
  %s36 = scalar_lea.smem %s0, 18
  %s37 = sld [smem:[%s36]]
  %s38 = scalar_lea.smem %s0, 19
  %s39 = sld [smem:[%s38]]
  %s40 = scalar_lea.smem %s0, 20
  %s41 = sld [smem:[%s40]]
  %s42 = scalar_lea.smem %s0, 21
  %s43 = sld [smem:[%s42]]
  %s44 = scalar_lea.smem %s0, 22
  %s45 = sld [smem:[%s44]]
  %s46 = scalar_lea.smem %s0, 23
  %s47 = sld [smem:[%s46]]
  %s48 = scalar_lea.smem %s0, 24
  %s49 = sld [smem:[%s48]]
  %s50 = scalar_lea.smem %s0, 25
  %s51 = sld [smem:[%s50]]
  %s52 = scalar_lea.smem %s0, 26
  %s53 = sld [smem:[%s52]]
  %s54 = scalar_lea.smem %s0, 27
  %s55 = sld [smem:[%s54]]
  %s56 = scalar_lea.smem %s0, 28
  %s57 = sld [smem:[%s56]]
  %s58 = scalar_lea.smem %s0, 29
  %s59 = sld [smem:[%s58]]
  %s60 = scalar_lea.smem %s0, 30
  %s61 = sld [smem:[%s60]]
  %s62 = scalar_lea.smem %s0, 31
  %s63 = sld [smem:[%s62]]
  %s64 = scalar_lea.smem %s0, 32
  %s65 = sld [smem:[%s64]]
  %s66 = scalar_lea.smem %s0, 33
  %s67 = sld [smem:[%s66]]
  %s68 = scalar_lea.smem %s0, 34
  %s69 = sld [smem:[%s68]]
  %s70 = scalar_lea.smem %s0, 35
  %s71 = sld [smem:[%s70]]
  %s72 = scalar_lea.smem %s0, 36
  %s73 = sld [smem:[%s72]]
  %s74 = scalar_lea.smem %s0, 37
  %s75 = sld [smem:[%s74]]
  %s76 = scalar_lea.smem %s0, 38
  %s77 = sld [smem:[%s76]]
  %s78 = scalar_lea.smem %s0, 39
  %s79 = sld [smem:[%s78]]
  %s80 = scalar_lea.smem %s0, 40
  %s81 = sld [smem:[%s80]]
  %s82 = scalar_lea.smem %s0, 41
  %s83 = sld [smem:[%s82]]
  %s84 = scalar_lea.smem %s0, 42
  %s85 = sld [smem:[%s84]]
  %s86 = scalar_lea.smem %s0, 43
  %s87 = sld [smem:[%s86]]
  %s88 = scalar_lea.smem %s0, 44
  %s89 = sld [smem:[%s88]]
  %s90 = scalar_lea.smem %s0, 45
  %s91 = sld [smem:[%s90]]
  %s92 = scalar_lea.smem %s0, 46
  %s93 = sld [smem:[%s92]]
  %s94 = scalar_lea.smem %s0, 47
  %s95 = sld [smem:[%s94]]
  %s96 = scalar_lea.smem %s0, 48
  %s97 = sld [smem:[%s96]]
  %s98 = scalar_lea.smem %s0, 49
  %s99 = sld [smem:[%s98]]
  %s100 = scalar_lea.smem %s0, 50
  %s101 = sld [smem:[%s100]]
  %s102 = sld [smem:[#allocation0]]
  $region377: #{srm_forward.1} parent=0
    _
  %s104 = ssub.s32 1, %s102
  %s105 = scalar_select 0, %s104, %s102
  $region1: #{srm_forward.1} parent=0
    #allocation3 [shape = 'u8[32768]{0}', space=vmem, size = 0x8000, scoped, tag = 'input window, operand 8, single buffered']
    #allocation4 [shape = 's32[2]{0}', space=sflag, size = 0x8, scoped, tag = 'scoped memory for srm_forward.1']
    #allocation5 [shape = 'u8[512]{0}', space=vmem, size = 0x400, scoped, tag = 'input window, operand 9, single buffered']
    #allocation6 [shape = 's32[1]{0}', space=sflag, size = 0x4, scoped, tag = 'scoped memory for srm_forward.1']
    #allocation7 [shape = 'u8[32768]{0}', space=vmem, size = 0x8000, scoped, tag = 'input window, operand 10, single buffered']
    #allocation8 [shape = 'u8[32768]{0}', space=vmem, size = 0x8000, scoped, tag = 'input window, operand 12, single buffered']
    #allocation9 [shape = 's32[1]{0}', space=sflag, size = 0x4, scoped, tag = 'scoped memory for srm_forward.1']
    #allocation10 [shape = 'u8[32768]{0}', space=vmem, size = 0x8000, scoped, tag = 'input window, operand 16, single buffered']
    #allocation11 [shape = 'u8[512]{0}', space=vmem, size = 0x400, scoped, tag = 'input window, operand 17, single buffered']
    #allocation12 [shape = 's32[1]{0}', space=sflag, size = 0x4, scoped, tag = 'scoped memory for srm_forward.1']
    #allocation13 [shape = 'u8[32768]{0}', space=vmem, size = 0x8000, scoped, tag = 'input window, operand 18, single buffered']
    #allocation14 [shape = 'u8[512]{0}', space=vmem, size = 0x400, scoped, tag = 'input window, operand 19, single buffered']
    #allocation15 [shape = 's32[1]{0}', space=sflag, size = 0x4, scoped, tag = 'scoped memory for srm_forward.1']
    #allocation16 [shape = 'u8[32768]{0}', space=vmem, size = 0x8000, scoped, tag = 'input window, operand 20, single buffered']
    #allocation17 [shape = 'u8[512]{0}', space=vmem, size = 0x400, scoped, tag = 'input window, operand 21, single buffered']
    #allocation18 [shape = 's32[1]{0}', space=sflag, size = 0x4, scoped, tag = 'scoped memory for srm_forward.1']
    #allocation19 [shape = 'u8[32768]{0}', space=vmem, size = 0x8000, scoped, tag = 'input window, operand 22, single buffered']
    #allocation20 [shape = 'u8[512]{0}', space=vmem, size = 0x400, scoped, tag = 'input window, operand 23, single buffered']
    #allocation21 [shape = 's32[1]{0}', space=sflag, size = 0x4, scoped, tag = 'scoped memory for srm_forward.1']
    #allocation22 [shape = 'u8[1024]{0}', space=vmem, size = 0x400, scoped, tag = 'input window, operand 24']
    #allocation23 [shape = 'u8[1024]{0}', space=vmem, size = 0x400, scoped, tag = 'input window, operand 25']
    #allocation24 [shape = 'u8[1024]{0}', space=vmem, size = 0x400, scoped, tag = 'input window, operand 27']
    #allocation25 [shape = 'u8[1024]{0}', space=vmem, size = 0x400, scoped, tag = 'input window, operand 29']
    #allocation26 [shape = 'u8[1024]{0}', space=vmem, size = 0x400, scoped, tag = 'input window, operand 31']
    #allocation27 [shape = 'u8[1024]{0}', space=vmem, size = 0x400, scoped, tag = 'input window, operand 33']
    #allocation28 [shape = 'u8[1024]{0}', space=vmem, size = 0x400, scoped, tag = 'input window, operand 34']
    #allocation29 [shape = 'u8[1024]{0}', space=vmem, size = 0x400, scoped, tag = 'input window, operand 35']
    #allocation30 [shape = 'u8[65536]{0}', space=vmem, size = 0x10000, scoped, tag = 'input window, operand 36']
    #allocation31 [shape = 'u8[1024]{0}', space=vmem, size = 0x400, scoped, tag = 'input window, operand 37']
    #allocation32 [shape = 'u8[65536]{0}', space=vmem, size = 0x10000, scoped, tag = 'input window, operand 38']
    #allocation33 [shape = 'u8[1024]{0}', space=vmem, size = 0x400, scoped, tag = 'input window, operand 39']
    #allocation34 [shape = 'u8[32768]{0}', space=vmem, size = 0x8000, scoped, tag = 'input window, operand 40, single buffered']
    #allocation35 [shape = 'u8[512]{0}', space=vmem, size = 0x400, scoped, tag = 'input window, operand 41, single buffered']
    #allocation36 [shape = 'u8[512]{0}', space=vmem, size = 0x400, scoped, tag = 'input window, operand 42, single buffered']
    #allocation37 [shape = 'u8[512]{0}', space=vmem, size = 0x400, scoped, tag = 'input window, operand 43, single buffered']
    #allocation38 [shape = 'u8[32768]{0}', space=vmem, size = 0x8000, scoped, tag = 'input window, operand 44, single buffered']
    #allocation39 [shape = 'u8[512]{0}', space=vmem, size = 0x400, scoped, tag = 'input window, operand 45, single buffered']
    #allocation40 [shape = 'u8[512]{0}', space=vmem, size = 0x400, scoped, tag = 'input window, operand 46, single buffered']
    #allocation41 [shape = 's32[1]{0}', space=sflag, size = 0x4, scoped, tag = 'scoped memory for srm_forward.1']
    #allocation42 [shape = 'u8[512]{0}', space=vmem, size = 0x400, scoped, tag = 'input window, operand 47, single buffered']
    #allocation43 [shape = 'u8[32768]{0}', space=vmem, size = 0x8000, scoped, tag = 'input window, operand 48, single buffered']
    #allocation44 [shape = 's32[1]{0}', space=sflag, size = 0x4, scoped, tag = 'scoped memory for srm_forward.1']
    #allocation45 [shape = 'u8[512]{0}', space=vmem, size = 0x400, scoped, tag = 'input window, operand 49, single buffered']
    %106 = vsyncpa [#allocation4], 0
    %107 = vsyncpa [#allocation6], 0
    %108 = vsyncpa [#allocation9], 0
    %109 = vsyncpa [#allocation12], 0
    %110 = vsyncpa [#allocation15], 0
    %111 = vsyncpa [#allocation18], 0
    %112 = vsyncpa [#allocation21], 0
    %113 = vsyncpa [#allocation41], 0
    %114 = vsyncpa [#allocation44], 0
    loop: start=0, step=1, limit=4
    $region2: #{srm_forward.1} parent=1 // loop_pre_header
      _
    $region3: #{srm_forward.1} parent=1 // loop_header
      %s116 = sphi 0, %s120
      %p117 = scmp.ge.s32.totalorder %s116, 4
      %s124 = sphi 0, %s124
      %s126 = sphi 0, %s124
      %s127 = sphi 0, %s126
      %s141 = sphi 0, %s127
      %s145 = sphi 0, %s145
      %s147 = sphi 0, %s145
      %s148 = sphi 0, %s147
      %s162 = sphi 0, %s148
      %s166 = sphi 0, %s166
      %s168 = sphi 0, %s166
      %s169 = sphi 0, %s168
      %s183 = sphi 0, %s169
      %s187 = sphi 0, %s187
      %s189 = sphi 0, %s187
      %s190 = sphi 0, %s189
      %s204 = sphi 0, %s190
      %s208 = sphi 0, %s208
      %s210 = sphi 0, %s208
      %s211 = sphi 0, %s210
      %s225 = sphi 0, %s211
      %s229 = sphi 0, %s229
      %s231 = sphi 0, %s229
      %s232 = sphi 0, %s231
      %s246 = sphi 0, %s232
      %s250 = sphi 0, %s250
      %s252 = sphi 0, %s250
      %s253 = sphi 0, %s252
      %s267 = sphi 0, %s253
      %s271 = sphi 0, %s271
      %s273 = sphi 0, %s271
      %s274 = sphi 0, %s273
      %s288 = sphi 0, %s274
      %s292 = sphi 0, %s292
      %s294 = sphi 0, %s292
      %s295 = sphi 0, %s294
      %s309 = sphi 0, %s295
      %s313 = sphi 0, %s313
      %s315 = sphi 0, %s313
      %s316 = sphi 0, %s315
      %s330 = sphi 0, %s316
      %s334 = sphi 0, %s334
      %s336 = sphi 0, %s334
      %s337 = sphi 0, %s336
      %s351 = sphi 0, %s337
      %s355 = sphi 0, %s355
      %s357 = sphi 0, %s355
      %s358 = sphi 0, %s357
      %s372 = sphi 0, %s358
      %s376 = sphi 0, %s376
      %s378 = sphi 0, %s376
      %s379 = sphi 0, %s378
      %s393 = sphi 0, %s379
      %s397 = sphi 0, %s397
      %s399 = sphi 0, %s397
      %s400 = sphi 0, %s399
      %s414 = sphi 0, %s400
      %s418 = sphi 0, %s418
      %s420 = sphi 0, %s418
      %s421 = sphi 0, %s420
      %s435 = sphi 0, %s421
      %s439 = sphi 0, %s439
      %s441 = sphi 0, %s439
      %s442 = sphi 0, %s441
      %s456 = sphi 0, %s442
      %s460 = sphi 0, %s460
      %s462 = sphi 0, %s460
      %s463 = sphi 0, %s462
      %s477 = sphi 0, %s463
      %s481 = sphi 0, %s481
      %s483 = sphi 0, %s481
      %s484 = sphi 0, %s483
      %s498 = sphi 0, %s484
      %s502 = sphi 0, %s502
      %s504 = sphi 0, %s502
      %s505 = sphi 0, %s504
      %s519 = sphi 0, %s505
      %s523 = sphi 0, %s523
      %s525 = sphi 0, %s523
      %s526 = sphi 0, %s525
      %s540 = sphi 0, %s526
      %s544 = sphi 0, %s544
      %s546 = sphi 0, %s544
      %s547 = sphi 0, %s546
      %s561 = sphi 0, %s547
      %s565 = sphi 0, %s565
      %s567 = sphi 0, %s565
      %s568 = sphi 0, %s567
      %s582 = sphi 0, %s568
      %s586 = sphi 0, %s586
      %s588 = sphi 0, %s586
      %s589 = sphi 0, %s588
      %s603 = sphi 0, %s589
      %s607 = sphi 0, %s607
      %s609 = sphi 0, %s607
      %s610 = sphi 0, %s609
      %s624 = sphi 0, %s610
      %s630 = sphi 0, %s632
      %s633 = sphi 0, %s630
      %s634 = sphi 0, %s633
      %s650 = sphi 0, %s634
      %s656 = sphi 0, %s658
      %s659 = sphi 0, %s656
      %s660 = sphi 0, %s659
      %s676 = sphi 0, %s660
      %s682 = sphi 0, %s684
      %s685 = sphi 0, %s682
      %s686 = sphi 0, %s685
      %s702 = sphi 0, %s686
      %s708 = sphi 0, %s710
      %s711 = sphi 0, %s708
      %s712 = sphi 0, %s711
      %s728 = sphi 0, %s712
      %s734 = sphi 0, %s736
      %s737 = sphi 0, %s734
      %s738 = sphi 0, %s737
      %s754 = sphi 0, %s738
      %s760 = sphi 0, %s762
      %s763 = sphi 0, %s760
      %s764 = sphi 0, %s763
      %s780 = sphi 0, %s764
      %s786 = sphi 0, %s788
      %s789 = sphi 0, %s786
      %s790 = sphi 0, %s789
      %s806 = sphi 0, %s790
      %s812 = sphi 0, %s814
      %s815 = sphi 0, %s812
      %s816 = sphi 0, %s815
      %s832 = sphi 0, %s816
      %s838 = sphi 0, %s840
      %s841 = sphi 0, %s838
      %s842 = sphi 0, %s841
      %s858 = sphi 0, %s842
      %s864 = sphi 0, %s866
      %s867 = sphi 0, %s864
      %s868 = sphi 0, %s867
      %s884 = sphi 0, %s868
      %s890 = sphi 0, %s892
      %s893 = sphi 0, %s890
      %s894 = sphi 0, %s893
      %s910 = sphi 0, %s894
      %s916 = sphi 0, %s918
      %s919 = sphi 0, %s916
      %s920 = sphi 0, %s919
      %s936 = sphi 0, %s920
      %s942 = sphi 0, %s944
      %s945 = sphi 0, %s942
      %s946 = sphi 0, %s945
      %s962 = sphi 0, %s946
      %s968 = sphi 0, %s970
      %s971 = sphi 0, %s968
      %s972 = sphi 0, %s971
      %s988 = sphi 0, %s972
      %s994 = sphi 0, %s996
      %s997 = sphi 0, %s994
      %s998 = sphi 0, %s997
      %s1014 = sphi 0, %s998
      %s1020 = sphi 0, %s1022
      %s1023 = sphi 0, %s1020
      %s1024 = sphi 0, %s1023
      %s1040 = sphi 0, %s1024
      %s1044 = sphi 0, %s1044
      %s1046 = sphi 0, %s1044
      %s1047 = sphi 0, %s1046
      %s1061 = sphi 0, %s1047
      %s1065 = sphi 0, %s1065
      %s1067 = sphi 0, %s1065
      %s1068 = sphi 0, %s1067
      %s1082 = sphi 0, %s1068
      %s1086 = sphi 0, %s1086
      %s1088 = sphi 0, %s1086
      %s1089 = sphi 0, %s1088
      %s1103 = sphi 0, %s1089
      %s1107 = sphi 0, %s1107
      %s1109 = sphi 0, %s1107
      %s1110 = sphi 0, %s1109
      %s1124 = sphi 0, %s1110
      %s1128 = sphi 0, %s1128
      %s1130 = sphi 0, %s1128
      %s1131 = sphi 0, %s1130
      %s1145 = sphi 0, %s1131
      %s1149 = sphi 0, %s1149
      %s1151 = sphi 0, %s1149
      %s1152 = sphi 0, %s1151
      %s1166 = sphi 0, %s1152
      %s1170 = sphi 0, %s1170
      %s1172 = sphi 0, %s1170
      %s1173 = sphi 0, %s1172
      %s1187 = sphi 0, %s1173
      %s1191 = sphi 0, %s1191
      %s1193 = sphi 0, %s1191
      %s1194 = sphi 0, %s1193
      %s1208 = sphi 0, %s1194
      %s1212 = sphi 0, %s1212
      %s1214 = sphi 0, %s1212
      %s1215 = sphi 0, %s1214
      %s1229 = sphi 0, %s1215
      %s1233 = sphi 0, %s1233
      %s1235 = sphi 0, %s1233
      %s1236 = sphi 0, %s1235
      %s1250 = sphi 0, %s1236
      %s1254 = sphi 0, %s1254
      %s1256 = sphi 0, %s1254
      %s1257 = sphi 0, %s1256
      %s1271 = sphi 0, %s1257
    $region4: #{srm_forward.1} parent=1 // loop_header_branch
      %119 = sbr.rel (%p117) target = $region8
    $region5: #{srm_forward.1} parent=1 // loop_body
      %s121 = ssub.s32 %s116, 1
      %s122 = ssub.s32 %s116, 2
      %s123 = sadd.s32 %s116, 1
      %s125 = sadd.s32 %s124, 1
      %p128 = scmp.eq.s32.totalorder %s116, 1
      %p129 = scmp.ne.s32.totalorder %s124, %s126
      %p130 = scmp.eq.s32.totalorder %s116, 0
      %p131 = por %p129, %p130
      %p132 = scmp.ne.s32.totalorder %s124, %s126
      %p133 = scmp.eq.s32.totalorder %s121, 1
      %p134 = por %p132, %p133
      %p135 = scmp.ne.s32.totalorder %s126, %s127
      %p136 = scmp.eq.s32.totalorder %s121, 0
      %p137 = por %p135, %p136
      %p138 = scmp.ne.s32.totalorder %s126, %s127
      %p139 = scmp.eq.s32.totalorder %s122, 1
      %p140 = por %p138, %p139
      %p142 = scmp.ne.s32.totalorder %s127, %s141
      %p143 = scmp.eq.s32.totalorder %s122, 0
      %p144 = por %p142, %p143
      %s146 = sadd.s32 %s145, 1
      %p149 = scmp.eq.s32.totalorder %s116, 1
      %p150 = scmp.ne.s32.totalorder %s145, %s147
      %p151 = scmp.eq.s32.totalorder %s116, 0
      %p152 = por %p150, %p151
      %p153 = scmp.ne.s32.totalorder %s145, %s147
      %p154 = scmp.eq.s32.totalorder %s121, 1
      %p155 = por %p153, %p154
      %p156 = scmp.ne.s32.totalorder %s147, %s148
      %p157 = scmp.eq.s32.totalorder %s121, 0
      %p158 = por %p156, %p157
      %p159 = scmp.ne.s32.totalorder %s147, %s148
      %p160 = scmp.eq.s32.totalorder %s122, 1
      %p161 = por %p159, %p160
      %p163 = scmp.ne.s32.totalorder %s148, %s162
      %p164 = scmp.eq.s32.totalorder %s122, 0
      %p165 = por %p163, %p164
      %s167 = sadd.s32 %s166, 1
      %p170 = scmp.eq.s32.totalorder %s116, 1
      %p171 = scmp.ne.s32.totalorder %s166, %s168
      %p172 = scmp.eq.s32.totalorder %s116, 0
      %p173 = por %p171, %p172
      %p174 = scmp.ne.s32.totalorder %s166, %s168
      %p175 = scmp.eq.s32.totalorder %s121, 1
      %p176 = por %p174, %p175
      %p177 = scmp.ne.s32.totalorder %s168, %s169
      %p178 = scmp.eq.s32.totalorder %s121, 0
      %p179 = por %p177, %p178
      %p180 = scmp.ne.s32.totalorder %s168, %s169
      %p181 = scmp.eq.s32.totalorder %s122, 1
      %p182 = por %p180, %p181
      %p184 = scmp.ne.s32.totalorder %s169, %s183
      %p185 = scmp.eq.s32.totalorder %s122, 0
      %p186 = por %p184, %p185
      %s188 = sadd.s32 %s187, 1
      %p191 = scmp.eq.s32.totalorder %s116, 1
      %p192 = scmp.ne.s32.totalorder %s187, %s189
      %p193 = scmp.eq.s32.totalorder %s116, 0
      %p194 = por %p192, %p193
      %p195 = scmp.ne.s32.totalorder %s187, %s189
      %p196 = scmp.eq.s32.totalorder %s121, 1
      %p197 = por %p195, %p196
      %p198 = scmp.ne.s32.totalorder %s189, %s190
      %p199 = scmp.eq.s32.totalorder %s121, 0
      %p200 = por %p198, %p199
      %p201 = scmp.ne.s32.totalorder %s189, %s190
      %p202 = scmp.eq.s32.totalorder %s122, 1
      %p203 = por %p201, %p202
      %p205 = scmp.ne.s32.totalorder %s190, %s204
      %p206 = scmp.eq.s32.totalorder %s122, 0
      %p207 = por %p205, %p206
      %s209 = sadd.s32 %s208, 1
      %p212 = scmp.eq.s32.totalorder %s116, 1
      %p213 = scmp.ne.s32.totalorder %s208, %s210
      %p214 = scmp.eq.s32.totalorder %s116, 0
      %p215 = por %p213, %p214
      %p216 = scmp.ne.s32.totalorder %s208, %s210
      %p217 = scmp.eq.s32.totalorder %s121, 1
      %p218 = por %p216, %p217
      %p219 = scmp.ne.s32.totalorder %s210, %s211
      %p220 = scmp.eq.s32.totalorder %s121, 0
      %p221 = por %p219, %p220
      %p222 = scmp.ne.s32.totalorder %s210, %s211
      %p223 = scmp.eq.s32.totalorder %s122, 1
      %p224 = por %p222, %p223
      %p226 = scmp.ne.s32.totalorder %s211, %s225
      %p227 = scmp.eq.s32.totalorder %s122, 0
      %p228 = por %p226, %p227
      %s230 = sadd.s32 %s229, 1
      %p233 = scmp.eq.s32.totalorder %s116, 1
      %p234 = scmp.ne.s32.totalorder %s229, %s231
      %p235 = scmp.eq.s32.totalorder %s116, 0
      %p236 = por %p234, %p235
      %p237 = scmp.ne.s32.totalorder %s229, %s231
      %p238 = scmp.eq.s32.totalorder %s121, 1
      %p239 = por %p237, %p238
      %p240 = scmp.ne.s32.totalorder %s231, %s232
      %p241 = scmp.eq.s32.totalorder %s121, 0
      %p242 = por %p240, %p241
      %p243 = scmp.ne.s32.totalorder %s231, %s232
      %p244 = scmp.eq.s32.totalorder %s122, 1
      %p245 = por %p243, %p244
      %p247 = scmp.ne.s32.totalorder %s232, %s246
      %p248 = scmp.eq.s32.totalorder %s122, 0
      %p249 = por %p247, %p248
      %s251 = sadd.s32 %s250, 1
      %p254 = scmp.eq.s32.totalorder %s116, 1
      %p255 = scmp.ne.s32.totalorder %s250, %s252
      %p256 = scmp.eq.s32.totalorder %s116, 0
      %p257 = por %p255, %p256
      %p258 = scmp.ne.s32.totalorder %s250, %s252
      %p259 = scmp.eq.s32.totalorder %s121, 1
      %p260 = por %p258, %p259
      %p261 = scmp.ne.s32.totalorder %s252, %s253
      %p262 = scmp.eq.s32.totalorder %s121, 0
      %p263 = por %p261, %p262
      %p264 = scmp.ne.s32.totalorder %s252, %s253
      %p265 = scmp.eq.s32.totalorder %s122, 1
      %p266 = por %p264, %p265
      %p268 = scmp.ne.s32.totalorder %s253, %s267
      %p269 = scmp.eq.s32.totalorder %s122, 0
      %p270 = por %p268, %p269
      %s272 = sadd.s32 %s271, 1
      %p275 = scmp.eq.s32.totalorder %s116, 1
      %p276 = scmp.ne.s32.totalorder %s271, %s273
      %p277 = scmp.eq.s32.totalorder %s116, 0
      %p278 = por %p276, %p277
      %p279 = scmp.ne.s32.totalorder %s271, %s273
      %p280 = scmp.eq.s32.totalorder %s121, 1
      %p281 = por %p279, %p280
      %p282 = scmp.ne.s32.totalorder %s273, %s274
      %p283 = scmp.eq.s32.totalorder %s121, 0
      %p284 = por %p282, %p283
      %p285 = scmp.ne.s32.totalorder %s273, %s274
      %p286 = scmp.eq.s32.totalorder %s122, 1
      %p287 = por %p285, %p286
      %p289 = scmp.ne.s32.totalorder %s274, %s288
      %p290 = scmp.eq.s32.totalorder %s122, 0
      %p291 = por %p289, %p290
      %s293 = sadd.s32 %s292, 1
      %p296 = scmp.eq.s32.totalorder %s116, 1
      %p297 = scmp.ne.s32.totalorder %s292, %s294
      %p298 = scmp.eq.s32.totalorder %s116, 0
      %p299 = por %p297, %p298
      %p300 = scmp.ne.s32.totalorder %s292, %s294
      %p301 = scmp.eq.s32.totalorder %s121, 1
      %p302 = por %p300, %p301
      %p303 = scmp.ne.s32.totalorder %s294, %s295
      %p304 = scmp.eq.s32.totalorder %s121, 0
      %p305 = por %p303, %p304
      %p306 = scmp.ne.s32.totalorder %s294, %s295
      %p307 = scmp.eq.s32.totalorder %s122, 1
      %p308 = por %p306, %p307
      %p310 = scmp.ne.s32.totalorder %s295, %s309
      %p311 = scmp.eq.s32.totalorder %s122, 0
      %p312 = por %p310, %p311
      %s314 = sadd.s32 %s313, 1
      %p317 = scmp.eq.s32.totalorder %s116, 1
      %p318 = scmp.ne.s32.totalorder %s313, %s315
      %p319 = scmp.eq.s32.totalorder %s116, 0
      %p320 = por %p318, %p319
      %p321 = scmp.ne.s32.totalorder %s313, %s315
      %p322 = scmp.eq.s32.totalorder %s121, 1
      %p323 = por %p321, %p322
      %p324 = scmp.ne.s32.totalorder %s315, %s316
      %p325 = scmp.eq.s32.totalorder %s121, 0
      %p326 = por %p324, %p325
      %p327 = scmp.ne.s32.totalorder %s315, %s316
      %p328 = scmp.eq.s32.totalorder %s122, 1
      %p329 = por %p327, %p328
      %p331 = scmp.ne.s32.totalorder %s316, %s330
      %p332 = scmp.eq.s32.totalorder %s122, 0
      %p333 = por %p331, %p332
      %s335 = sadd.s32 %s334, 1
      %p338 = scmp.eq.s32.totalorder %s116, 1
      %p339 = scmp.ne.s32.totalorder %s334, %s336
      %p340 = scmp.eq.s32.totalorder %s116, 0
      %p341 = por %p339, %p340
      %p342 = scmp.ne.s32.totalorder %s334, %s336
      %p343 = scmp.eq.s32.totalorder %s121, 1
      %p344 = por %p342, %p343
      %p345 = scmp.ne.s32.totalorder %s336, %s337
      %p346 = scmp.eq.s32.totalorder %s121, 0
      %p347 = por %p345, %p346
      %p348 = scmp.ne.s32.totalorder %s336, %s337
      %p349 = scmp.eq.s32.totalorder %s122, 1
      %p350 = por %p348, %p349
      %p352 = scmp.ne.s32.totalorder %s337, %s351
      %p353 = scmp.eq.s32.totalorder %s122, 0
      %p354 = por %p352, %p353
      %s356 = sadd.s32 %s355, 1
      %p359 = scmp.eq.s32.totalorder %s116, 1
      %p360 = scmp.ne.s32.totalorder %s355, %s357
      %p361 = scmp.eq.s32.totalorder %s116, 0
      %p362 = por %p360, %p361
      %p363 = scmp.ne.s32.totalorder %s355, %s357
      %p364 = scmp.eq.s32.totalorder %s121, 1
      %p365 = por %p363, %p364
      %p366 = scmp.ne.s32.totalorder %s357, %s358
      %p367 = scmp.eq.s32.totalorder %s121, 0
      %p368 = por %p366, %p367
      %p369 = scmp.ne.s32.totalorder %s357, %s358
      %p370 = scmp.eq.s32.totalorder %s122, 1
      %p371 = por %p369, %p370
      %p373 = scmp.ne.s32.totalorder %s358, %s372
      %p374 = scmp.eq.s32.totalorder %s122, 0
      %p375 = por %p373, %p374
      %s377 = sadd.s32 %s376, 1
      %p380 = scmp.eq.s32.totalorder %s116, 1
      %p381 = scmp.ne.s32.totalorder %s376, %s378
      %p382 = scmp.eq.s32.totalorder %s116, 0
      %p383 = por %p381, %p382
      %p384 = scmp.ne.s32.totalorder %s376, %s378
      %p385 = scmp.eq.s32.totalorder %s121, 1
      %p386 = por %p384, %p385
      %p387 = scmp.ne.s32.totalorder %s378, %s379
      %p388 = scmp.eq.s32.totalorder %s121, 0
      %p389 = por %p387, %p388
      %p390 = scmp.ne.s32.totalorder %s378, %s379
      %p391 = scmp.eq.s32.totalorder %s122, 1
      %p392 = por %p390, %p391
      %p394 = scmp.ne.s32.totalorder %s379, %s393
      %p395 = scmp.eq.s32.totalorder %s122, 0
      %p396 = por %p394, %p395
      %s398 = sadd.s32 %s397, 1
      %p401 = scmp.eq.s32.totalorder %s116, 1
      %p402 = scmp.ne.s32.totalorder %s397, %s399
      %p403 = scmp.eq.s32.totalorder %s116, 0
      %p404 = por %p402, %p403
      %p405 = scmp.ne.s32.totalorder %s397, %s399
      %p406 = scmp.eq.s32.totalorder %s121, 1
      %p407 = por %p405, %p406
      %p408 = scmp.ne.s32.totalorder %s399, %s400
      %p409 = scmp.eq.s32.totalorder %s121, 0
      %p410 = por %p408, %p409
      %p411 = scmp.ne.s32.totalorder %s399, %s400
      %p412 = scmp.eq.s32.totalorder %s122, 1
      %p413 = por %p411, %p412
      %p415 = scmp.ne.s32.totalorder %s400, %s414
      %p416 = scmp.eq.s32.totalorder %s122, 0
      %p417 = por %p415, %p416
      %s419 = sadd.s32 %s418, 1
      %p422 = scmp.eq.s32.totalorder %s116, 1
      %p423 = scmp.ne.s32.totalorder %s418, %s420
      %p424 = scmp.eq.s32.totalorder %s116, 0
      %p425 = por %p423, %p424
      %p426 = scmp.ne.s32.totalorder %s418, %s420
      %p427 = scmp.eq.s32.totalorder %s121, 1
      %p428 = por %p426, %p427
      %p429 = scmp.ne.s32.totalorder %s420, %s421
      %p430 = scmp.eq.s32.totalorder %s121, 0
      %p431 = por %p429, %p430
      %p432 = scmp.ne.s32.totalorder %s420, %s421
      %p433 = scmp.eq.s32.totalorder %s122, 1
      %p434 = por %p432, %p433
      %p436 = scmp.ne.s32.totalorder %s421, %s435
      %p437 = scmp.eq.s32.totalorder %s122, 0
      %p438 = por %p436, %p437
      %s440 = sadd.s32 %s439, 1
      %p443 = scmp.eq.s32.totalorder %s116, 1
      %p444 = scmp.ne.s32.totalorder %s439, %s441
      %p445 = scmp.eq.s32.totalorder %s116, 0
      %p446 = por %p444, %p445
      %p447 = scmp.ne.s32.totalorder %s439, %s441
      %p448 = scmp.eq.s32.totalorder %s121, 1
      %p449 = por %p447, %p448
      %p450 = scmp.ne.s32.totalorder %s441, %s442
      %p451 = scmp.eq.s32.totalorder %s121, 0
      %p452 = por %p450, %p451
      %p453 = scmp.ne.s32.totalorder %s441, %s442
      %p454 = scmp.eq.s32.totalorder %s122, 1
      %p455 = por %p453, %p454
      %p457 = scmp.ne.s32.totalorder %s442, %s456
      %p458 = scmp.eq.s32.totalorder %s122, 0
      %p459 = por %p457, %p458
      %s461 = sadd.s32 %s460, 1
      %p464 = scmp.eq.s32.totalorder %s116, 1
      %p465 = scmp.ne.s32.totalorder %s460, %s462
      %p466 = scmp.eq.s32.totalorder %s116, 0
      %p467 = por %p465, %p466
      %p468 = scmp.ne.s32.totalorder %s460, %s462
      %p469 = scmp.eq.s32.totalorder %s121, 1
      %p470 = por %p468, %p469
      %p471 = scmp.ne.s32.totalorder %s462, %s463
      %p472 = scmp.eq.s32.totalorder %s121, 0
      %p473 = por %p471, %p472
      %p474 = scmp.ne.s32.totalorder %s462, %s463
      %p475 = scmp.eq.s32.totalorder %s122, 1
      %p476 = por %p474, %p475
      %p478 = scmp.ne.s32.totalorder %s463, %s477
      %p479 = scmp.eq.s32.totalorder %s122, 0
      %p480 = por %p478, %p479
      %s482 = sadd.s32 %s481, 1
      %p485 = scmp.eq.s32.totalorder %s116, 1
      %p486 = scmp.ne.s32.totalorder %s481, %s483
      %p487 = scmp.eq.s32.totalorder %s116, 0
      %p488 = por %p486, %p487
      %p489 = scmp.ne.s32.totalorder %s481, %s483
      %p490 = scmp.eq.s32.totalorder %s121, 1
      %p491 = por %p489, %p490
      %p492 = scmp.ne.s32.totalorder %s483, %s484
      %p493 = scmp.eq.s32.totalorder %s121, 0
      %p494 = por %p492, %p493
      %p495 = scmp.ne.s32.totalorder %s483, %s484
      %p496 = scmp.eq.s32.totalorder %s122, 1
      %p497 = por %p495, %p496
      %p499 = scmp.ne.s32.totalorder %s484, %s498
      %p500 = scmp.eq.s32.totalorder %s122, 0
      %p501 = por %p499, %p500
      %s503 = sadd.s32 %s502, 1
      %p506 = scmp.eq.s32.totalorder %s116, 1
      %p507 = scmp.ne.s32.totalorder %s502, %s504
      %p508 = scmp.eq.s32.totalorder %s116, 0
      %p509 = por %p507, %p508
      %p510 = scmp.ne.s32.totalorder %s502, %s504
      %p511 = scmp.eq.s32.totalorder %s121, 1
      %p512 = por %p510, %p511
      %p513 = scmp.ne.s32.totalorder %s504, %s505
      %p514 = scmp.eq.s32.totalorder %s121, 0
      %p515 = por %p513, %p514
      %p516 = scmp.ne.s32.totalorder %s504, %s505
      %p517 = scmp.eq.s32.totalorder %s122, 1
      %p518 = por %p516, %p517
      %p520 = scmp.ne.s32.totalorder %s505, %s519
      %p521 = scmp.eq.s32.totalorder %s122, 0
      %p522 = por %p520, %p521
      %s524 = sadd.s32 %s523, 1
      %p527 = scmp.eq.s32.totalorder %s116, 1
      %p528 = scmp.ne.s32.totalorder %s523, %s525
      %p529 = scmp.eq.s32.totalorder %s116, 0
      %p530 = por %p528, %p529
      %p531 = scmp.ne.s32.totalorder %s523, %s525
      %p532 = scmp.eq.s32.totalorder %s121, 1
      %p533 = por %p531, %p532
      %p534 = scmp.ne.s32.totalorder %s525, %s526
      %p535 = scmp.eq.s32.totalorder %s121, 0
      %p536 = por %p534, %p535
      %p537 = scmp.ne.s32.totalorder %s525, %s526
      %p538 = scmp.eq.s32.totalorder %s122, 1
      %p539 = por %p537, %p538
      %p541 = scmp.ne.s32.totalorder %s526, %s540
      %p542 = scmp.eq.s32.totalorder %s122, 0
      %p543 = por %p541, %p542
      %s545 = sadd.s32 %s544, 1
      %p548 = scmp.eq.s32.totalorder %s116, 1
      %p549 = scmp.ne.s32.totalorder %s544, %s546
      %p550 = scmp.eq.s32.totalorder %s116, 0
      %p551 = por %p549, %p550
      %p552 = scmp.ne.s32.totalorder %s544, %s546
      %p553 = scmp.eq.s32.totalorder %s121, 1
      %p554 = por %p552, %p553
      %p555 = scmp.ne.s32.totalorder %s546, %s547
      %p556 = scmp.eq.s32.totalorder %s121, 0
      %p557 = por %p555, %p556
      %p558 = scmp.ne.s32.totalorder %s546, %s547
      %p559 = scmp.eq.s32.totalorder %s122, 1
      %p560 = por %p558, %p559
      %p562 = scmp.ne.s32.totalorder %s547, %s561
      %p563 = scmp.eq.s32.totalorder %s122, 0
      %p564 = por %p562, %p563
      %s566 = sadd.s32 %s565, 1
      %p569 = scmp.eq.s32.totalorder %s116, 1
      %p570 = scmp.ne.s32.totalorder %s565, %s567
      %p571 = scmp.eq.s32.totalorder %s116, 0
      %p572 = por %p570, %p571
      %p573 = scmp.ne.s32.totalorder %s565, %s567
      %p574 = scmp.eq.s32.totalorder %s121, 1
      %p575 = por %p573, %p574
      %p576 = scmp.ne.s32.totalorder %s567, %s568
      %p577 = scmp.eq.s32.totalorder %s121, 0
      %p578 = por %p576, %p577
      %p579 = scmp.ne.s32.totalorder %s567, %s568
      %p580 = scmp.eq.s32.totalorder %s122, 1
      %p581 = por %p579, %p580
      %p583 = scmp.ne.s32.totalorder %s568, %s582
      %p584 = scmp.eq.s32.totalorder %s122, 0
      %p585 = por %p583, %p584
      %s587 = sadd.s32 %s586, 1
      %p590 = scmp.eq.s32.totalorder %s116, 1
      %p591 = scmp.ne.s32.totalorder %s586, %s588
      %p592 = scmp.eq.s32.totalorder %s116, 0
      %p593 = por %p591, %p592
      %p594 = scmp.ne.s32.totalorder %s586, %s588
      %p595 = scmp.eq.s32.totalorder %s121, 1
      %p596 = por %p594, %p595
      %p597 = scmp.ne.s32.totalorder %s588, %s589
      %p598 = scmp.eq.s32.totalorder %s121, 0
      %p599 = por %p597, %p598
      %p600 = scmp.ne.s32.totalorder %s588, %s589
      %p601 = scmp.eq.s32.totalorder %s122, 1
      %p602 = por %p600, %p601
      %p604 = scmp.ne.s32.totalorder %s589, %s603
      %p605 = scmp.eq.s32.totalorder %s122, 0
      %p606 = por %p604, %p605
      %s608 = sadd.s32 %s607, 1
      %p611 = scmp.eq.s32.totalorder %s116, 1
      %p612 = scmp.ne.s32.totalorder %s607, %s609
      %p613 = scmp.eq.s32.totalorder %s116, 0
      %p614 = por %p612, %p613
      %p615 = scmp.ne.s32.totalorder %s607, %s609
      %p616 = scmp.eq.s32.totalorder %s121, 1
      %p617 = por %p615, %p616
      %p618 = scmp.ne.s32.totalorder %s609, %s610
      %p619 = scmp.eq.s32.totalorder %s121, 0
      %p620 = por %p618, %p619
      %p621 = scmp.ne.s32.totalorder %s609, %s610
      %p622 = scmp.eq.s32.totalorder %s122, 1
      %p623 = por %p621, %p622
      %p625 = scmp.ne.s32.totalorder %s610, %s624
      %p626 = scmp.eq.s32.totalorder %s122, 0
      %p627 = por %p625, %p626
      %s628 = ssub.s32 %s116, %s123
      %p629 = scmp.eq.s32.totalorder %s628, 0
      %s631 = sadd.s32 %s630, 1
      %s632 = scalar_select %p629, %s630, %s631
      %p635 = pneg %p629
      %p636 = scmp.eq.s32.totalorder %s116, 1
      %p637 = por %p635, %p636
      %p638 = scmp.ne.s32.totalorder %s630, %s633
      %p639 = scmp.eq.s32.totalorder %s116, 0
      %p640 = por %p638, %p639
      %p641 = scmp.ne.s32.totalorder %s630, %s633
      %p642 = scmp.eq.s32.totalorder %s121, 1
      %p643 = por %p641, %p642
      %p644 = scmp.ne.s32.totalorder %s633, %s634
      %p645 = scmp.eq.s32.totalorder %s121, 0
      %p646 = por %p644, %p645
      %p647 = scmp.ne.s32.totalorder %s633, %s634
      %p648 = scmp.eq.s32.totalorder %s122, 1
      %p649 = por %p647, %p648
      %p651 = scmp.ne.s32.totalorder %s634, %s650
      %p652 = scmp.eq.s32.totalorder %s122, 0
      %p653 = por %p651, %p652
      %s654 = ssub.s32 %s116, %s123
      %p655 = scmp.eq.s32.totalorder %s654, 0
      %s657 = sadd.s32 %s656, 1
      %s658 = scalar_select %p655, %s656, %s657
      %p661 = pneg %p655
      %p662 = scmp.eq.s32.totalorder %s116, 1
      %p663 = por %p661, %p662
      %p664 = scmp.ne.s32.totalorder %s656, %s659
      %p665 = scmp.eq.s32.totalorder %s116, 0
      %p666 = por %p664, %p665
      %p667 = scmp.ne.s32.totalorder %s656, %s659
      %p668 = scmp.eq.s32.totalorder %s121, 1
      %p669 = por %p667, %p668
      %p670 = scmp.ne.s32.totalorder %s659, %s660
      %p671 = scmp.eq.s32.totalorder %s121, 0
      %p672 = por %p670, %p671
      %p673 = scmp.ne.s32.totalorder %s659, %s660
      %p674 = scmp.eq.s32.totalorder %s122, 1
      %p675 = por %p673, %p674
      %p677 = scmp.ne.s32.totalorder %s660, %s676
      %p678 = scmp.eq.s32.totalorder %s122, 0
      %p679 = por %p677, %p678
      %s680 = ssub.s32 %s116, %s123
      %p681 = scmp.eq.s32.totalorder %s680, 0
      %s683 = sadd.s32 %s682, 1
      %s684 = scalar_select %p681, %s682, %s683
      %p687 = pneg %p681
      %p688 = scmp.eq.s32.totalorder %s116, 1
      %p689 = por %p687, %p688
      %p690 = scmp.ne.s32.totalorder %s682, %s685
      %p691 = scmp.eq.s32.totalorder %s116, 0
      %p692 = por %p690, %p691
      %p693 = scmp.ne.s32.totalorder %s682, %s685
      %p694 = scmp.eq.s32.totalorder %s121, 1
      %p695 = por %p693, %p694
      %p696 = scmp.ne.s32.totalorder %s685, %s686
      %p697 = scmp.eq.s32.totalorder %s121, 0
      %p698 = por %p696, %p697
      %p699 = scmp.ne.s32.totalorder %s685, %s686
      %p700 = scmp.eq.s32.totalorder %s122, 1
      %p701 = por %p699, %p700
      %p703 = scmp.ne.s32.totalorder %s686, %s702
      %p704 = scmp.eq.s32.totalorder %s122, 0
      %p705 = por %p703, %p704
      %s706 = ssub.s32 %s116, %s123
      %p707 = scmp.eq.s32.totalorder %s706, 0
      %s709 = sadd.s32 %s708, 1
      %s710 = scalar_select %p707, %s708, %s709
      %p713 = pneg %p707
      %p714 = scmp.eq.s32.totalorder %s116, 1
      %p715 = por %p713, %p714
      %p716 = scmp.ne.s32.totalorder %s708, %s711
      %p717 = scmp.eq.s32.totalorder %s116, 0
      %p718 = por %p716, %p717
      %p719 = scmp.ne.s32.totalorder %s708, %s711
      %p720 = scmp.eq.s32.totalorder %s121, 1
      %p721 = por %p719, %p720
      %p722 = scmp.ne.s32.totalorder %s711, %s712
      %p723 = scmp.eq.s32.totalorder %s121, 0
      %p724 = por %p722, %p723
      %p725 = scmp.ne.s32.totalorder %s711, %s712
      %p726 = scmp.eq.s32.totalorder %s122, 1
      %p727 = por %p725, %p726
      %p729 = scmp.ne.s32.totalorder %s712, %s728
      %p730 = scmp.eq.s32.totalorder %s122, 0
      %p731 = por %p729, %p730
      %s732 = ssub.s32 %s116, %s123
      %p733 = scmp.eq.s32.totalorder %s732, 0
      %s735 = sadd.s32 %s734, 1
      %s736 = scalar_select %p733, %s734, %s735
      %p739 = pneg %p733
      %p740 = scmp.eq.s32.totalorder %s116, 1
      %p741 = por %p739, %p740
      %p742 = scmp.ne.s32.totalorder %s734, %s737
      %p743 = scmp.eq.s32.totalorder %s116, 0
      %p744 = por %p742, %p743
      %p745 = scmp.ne.s32.totalorder %s734, %s737
      %p746 = scmp.eq.s32.totalorder %s121, 1
      %p747 = por %p745, %p746
      %p748 = scmp.ne.s32.totalorder %s737, %s738
      %p749 = scmp.eq.s32.totalorder %s121, 0
      %p750 = por %p748, %p749
      %p751 = scmp.ne.s32.totalorder %s737, %s738
      %p752 = scmp.eq.s32.totalorder %s122, 1
      %p753 = por %p751, %p752
      %p755 = scmp.ne.s32.totalorder %s738, %s754
      %p756 = scmp.eq.s32.totalorder %s122, 0
      %p757 = por %p755, %p756
      %s758 = ssub.s32 %s116, %s123
      %p759 = scmp.eq.s32.totalorder %s758, 0
      %s761 = sadd.s32 %s760, 1
      %s762 = scalar_select %p759, %s760, %s761
      %p765 = pneg %p759
      %p766 = scmp.eq.s32.totalorder %s116, 1
      %p767 = por %p765, %p766
      %p768 = scmp.ne.s32.totalorder %s760, %s763
      %p769 = scmp.eq.s32.totalorder %s116, 0
      %p770 = por %p768, %p769
      %p771 = scmp.ne.s32.totalorder %s760, %s763
      %p772 = scmp.eq.s32.totalorder %s121, 1
      %p773 = por %p771, %p772
      %p774 = scmp.ne.s32.totalorder %s763, %s764
      %p775 = scmp.eq.s32.totalorder %s121, 0
      %p776 = por %p774, %p775
      %p777 = scmp.ne.s32.totalorder %s763, %s764
      %p778 = scmp.eq.s32.totalorder %s122, 1
      %p779 = por %p777, %p778
      %p781 = scmp.ne.s32.totalorder %s764, %s780
      %p782 = scmp.eq.s32.totalorder %s122, 0
      %p783 = por %p781, %p782
      %s784 = ssub.s32 %s116, %s123
      %p785 = scmp.eq.s32.totalorder %s784, 0
      %s787 = sadd.s32 %s786, 1
      %s788 = scalar_select %p785, %s786, %s787
      %p791 = pneg %p785
      %p792 = scmp.eq.s32.totalorder %s116, 1
      %p793 = por %p791, %p792
      %p794 = scmp.ne.s32.totalorder %s786, %s789
      %p795 = scmp.eq.s32.totalorder %s116, 0
      %p796 = por %p794, %p795
      %p797 = scmp.ne.s32.totalorder %s786, %s789
      %p798 = scmp.eq.s32.totalorder %s121, 1
      %p799 = por %p797, %p798
      %p800 = scmp.ne.s32.totalorder %s789, %s790
      %p801 = scmp.eq.s32.totalorder %s121, 0
      %p802 = por %p800, %p801
      %p803 = scmp.ne.s32.totalorder %s789, %s790
      %p804 = scmp.eq.s32.totalorder %s122, 1
      %p805 = por %p803, %p804
      %p807 = scmp.ne.s32.totalorder %s790, %s806
      %p808 = scmp.eq.s32.totalorder %s122, 0
      %p809 = por %p807, %p808
      %s810 = ssub.s32 %s116, %s123
      %p811 = scmp.eq.s32.totalorder %s810, 0
      %s813 = sadd.s32 %s812, 1
      %s814 = scalar_select %p811, %s812, %s813
      %p817 = pneg %p811
      %p818 = scmp.eq.s32.totalorder %s116, 1
      %p819 = por %p817, %p818
      %p820 = scmp.ne.s32.totalorder %s812, %s815
      %p821 = scmp.eq.s32.totalorder %s116, 0
      %p822 = por %p820, %p821
      %p823 = scmp.ne.s32.totalorder %s812, %s815
      %p824 = scmp.eq.s32.totalorder %s121, 1
      %p825 = por %p823, %p824
      %p826 = scmp.ne.s32.totalorder %s815, %s816
      %p827 = scmp.eq.s32.totalorder %s121, 0
      %p828 = por %p826, %p827
      %p829 = scmp.ne.s32.totalorder %s815, %s816
      %p830 = scmp.eq.s32.totalorder %s122, 1
      %p831 = por %p829, %p830
      %p833 = scmp.ne.s32.totalorder %s816, %s832
      %p834 = scmp.eq.s32.totalorder %s122, 0
      %p835 = por %p833, %p834
      %s836 = ssub.s32 %s116, %s123
      %p837 = scmp.eq.s32.totalorder %s836, 0
      %s839 = sadd.s32 %s838, 1
      %s840 = scalar_select %p837, %s838, %s839
      %p843 = pneg %p837
      %p844 = scmp.eq.s32.totalorder %s116, 1
      %p845 = por %p843, %p844
      %p846 = scmp.ne.s32.totalorder %s838, %s841
      %p847 = scmp.eq.s32.totalorder %s116, 0
      %p848 = por %p846, %p847
      %p849 = scmp.ne.s32.totalorder %s838, %s841
      %p850 = scmp.eq.s32.totalorder %s121, 1
      %p851 = por %p849, %p850
      %p852 = scmp.ne.s32.totalorder %s841, %s842
      %p853 = scmp.eq.s32.totalorder %s121, 0
      %p854 = por %p852, %p853
      %p855 = scmp.ne.s32.totalorder %s841, %s842
      %p856 = scmp.eq.s32.totalorder %s122, 1
      %p857 = por %p855, %p856
      %p859 = scmp.ne.s32.totalorder %s842, %s858
      %p860 = scmp.eq.s32.totalorder %s122, 0
      %p861 = por %p859, %p860
      %s862 = ssub.s32 %s116, %s123
      %p863 = scmp.eq.s32.totalorder %s862, 0
      %s865 = sadd.s32 %s864, 1
      %s866 = scalar_select %p863, %s864, %s865
      %p869 = pneg %p863
      %p870 = scmp.eq.s32.totalorder %s116, 1
      %p871 = por %p869, %p870
      %p872 = scmp.ne.s32.totalorder %s864, %s867
      %p873 = scmp.eq.s32.totalorder %s116, 0
      %p874 = por %p872, %p873
      %p875 = scmp.ne.s32.totalorder %s864, %s867
      %p876 = scmp.eq.s32.totalorder %s121, 1
      %p877 = por %p875, %p876
      %p878 = scmp.ne.s32.totalorder %s867, %s868
      %p879 = scmp.eq.s32.totalorder %s121, 0
      %p880 = por %p878, %p879
      %p881 = scmp.ne.s32.totalorder %s867, %s868
      %p882 = scmp.eq.s32.totalorder %s122, 1
      %p883 = por %p881, %p882
      %p885 = scmp.ne.s32.totalorder %s868, %s884
      %p886 = scmp.eq.s32.totalorder %s122, 0
      %p887 = por %p885, %p886
      %s888 = ssub.s32 %s116, %s123
      %p889 = scmp.eq.s32.totalorder %s888, 0
      %s891 = sadd.s32 %s890, 1
      %s892 = scalar_select %p889, %s890, %s891
      %p895 = pneg %p889
      %p896 = scmp.eq.s32.totalorder %s116, 1
      %p897 = por %p895, %p896
      %p898 = scmp.ne.s32.totalorder %s890, %s893
      %p899 = scmp.eq.s32.totalorder %s116, 0
      %p900 = por %p898, %p899
      %p901 = scmp.ne.s32.totalorder %s890, %s893
      %p902 = scmp.eq.s32.totalorder %s121, 1
      %p903 = por %p901, %p902
      %p904 = scmp.ne.s32.totalorder %s893, %s894
      %p905 = scmp.eq.s32.totalorder %s121, 0
      %p906 = por %p904, %p905
      %p907 = scmp.ne.s32.totalorder %s893, %s894
      %p908 = scmp.eq.s32.totalorder %s122, 1
      %p909 = por %p907, %p908
      %p911 = scmp.ne.s32.totalorder %s894, %s910
      %p912 = scmp.eq.s32.totalorder %s122, 0
      %p913 = por %p911, %p912
      %s914 = ssub.s32 %s116, %s123
      %p915 = scmp.eq.s32.totalorder %s914, 0
      %s917 = sadd.s32 %s916, 1
      %s918 = scalar_select %p915, %s916, %s917
      %p921 = pneg %p915
      %p922 = scmp.eq.s32.totalorder %s116, 1
      %p923 = por %p921, %p922
      %p924 = scmp.ne.s32.totalorder %s916, %s919
      %p925 = scmp.eq.s32.totalorder %s116, 0
      %p926 = por %p924, %p925
      %p927 = scmp.ne.s32.totalorder %s916, %s919
      %p928 = scmp.eq.s32.totalorder %s121, 1
      %p929 = por %p927, %p928
      %p930 = scmp.ne.s32.totalorder %s919, %s920
      %p931 = scmp.eq.s32.totalorder %s121, 0
      %p932 = por %p930, %p931
      %p933 = scmp.ne.s32.totalorder %s919, %s920
      %p934 = scmp.eq.s32.totalorder %s122, 1
      %p935 = por %p933, %p934
      %p937 = scmp.ne.s32.totalorder %s920, %s936
      %p938 = scmp.eq.s32.totalorder %s122, 0
      %p939 = por %p937, %p938
      %s940 = ssub.s32 %s116, %s123
      %p941 = scmp.eq.s32.totalorder %s940, 0
      %s943 = sadd.s32 %s942, 1
      %s944 = scalar_select %p941, %s942, %s943
      %p947 = pneg %p941
      %p948 = scmp.eq.s32.totalorder %s116, 1
      %p949 = por %p947, %p948
      %p950 = scmp.ne.s32.totalorder %s942, %s945
      %p951 = scmp.eq.s32.totalorder %s116, 0
      %p952 = por %p950, %p951
      %p953 = scmp.ne.s32.totalorder %s942, %s945
      %p954 = scmp.eq.s32.totalorder %s121, 1
      %p955 = por %p953, %p954
      %p956 = scmp.ne.s32.totalorder %s945, %s946
      %p957 = scmp.eq.s32.totalorder %s121, 0
      %p958 = por %p956, %p957
      %p959 = scmp.ne.s32.totalorder %s945, %s946
      %p960 = scmp.eq.s32.totalorder %s122, 1
      %p961 = por %p959, %p960
      %p963 = scmp.ne.s32.totalorder %s946, %s962
      %p964 = scmp.eq.s32.totalorder %s122, 0
      %p965 = por %p963, %p964
      %s966 = ssub.s32 %s116, %s123
      %p967 = scmp.eq.s32.totalorder %s966, 0
      %s969 = sadd.s32 %s968, 1
      %s970 = scalar_select %p967, %s968, %s969
      %p973 = pneg %p967
      %p974 = scmp.eq.s32.totalorder %s116, 1
      %p975 = por %p973, %p974
      %p976 = scmp.ne.s32.totalorder %s968, %s971
      %p977 = scmp.eq.s32.totalorder %s116, 0
      %p978 = por %p976, %p977
      %p979 = scmp.ne.s32.totalorder %s968, %s971
      %p980 = scmp.eq.s32.totalorder %s121, 1
      %p981 = por %p979, %p980
      %p982 = scmp.ne.s32.totalorder %s971, %s972
      %p983 = scmp.eq.s32.totalorder %s121, 0
      %p984 = por %p982, %p983
      %p985 = scmp.ne.s32.totalorder %s971, %s972
      %p986 = scmp.eq.s32.totalorder %s122, 1
      %p987 = por %p985, %p986
      %p989 = scmp.ne.s32.totalorder %s972, %s988
      %p990 = scmp.eq.s32.totalorder %s122, 0
      %p991 = por %p989, %p990
      %s992 = ssub.s32 %s116, %s123
      %p993 = scmp.eq.s32.totalorder %s992, 0
      %s995 = sadd.s32 %s994, 1
      %s996 = scalar_select %p993, %s994, %s995
      %p999 = pneg %p993
      %p1000 = scmp.eq.s32.totalorder %s116, 1
      %p1001 = por %p999, %p1000
      %p1002 = scmp.ne.s32.totalorder %s994, %s997
      %p1003 = scmp.eq.s32.totalorder %s116, 0
      %p1004 = por %p1002, %p1003
      %p1005 = scmp.ne.s32.totalorder %s994, %s997
      %p1006 = scmp.eq.s32.totalorder %s121, 1
      %p1007 = por %p1005, %p1006
      %p1008 = scmp.ne.s32.totalorder %s997, %s998
      %p1009 = scmp.eq.s32.totalorder %s121, 0
      %p1010 = por %p1008, %p1009
      %p1011 = scmp.ne.s32.totalorder %s997, %s998
      %p1012 = scmp.eq.s32.totalorder %s122, 1
      %p1013 = por %p1011, %p1012
      %p1015 = scmp.ne.s32.totalorder %s998, %s1014
      %p1016 = scmp.eq.s32.totalorder %s122, 0
      %p1017 = por %p1015, %p1016
      %s1018 = ssub.s32 %s116, %s123
      %p1019 = scmp.eq.s32.totalorder %s1018, 0
      %s1021 = sadd.s32 %s1020, 1
      %s1022 = scalar_select %p1019, %s1020, %s1021
      %p1025 = pneg %p1019
      %p1026 = scmp.eq.s32.totalorder %s116, 1
      %p1027 = por %p1025, %p1026
      %p1028 = scmp.ne.s32.totalorder %s1020, %s1023
      %p1029 = scmp.eq.s32.totalorder %s116, 0
      %p1030 = por %p1028, %p1029
      %p1031 = scmp.ne.s32.totalorder %s1020, %s1023
      %p1032 = scmp.eq.s32.totalorder %s121, 1
      %p1033 = por %p1031, %p1032
      %p1034 = scmp.ne.s32.totalorder %s1023, %s1024
      %p1035 = scmp.eq.s32.totalorder %s121, 0
      %p1036 = por %p1034, %p1035
      %p1037 = scmp.ne.s32.totalorder %s1023, %s1024
      %p1038 = scmp.eq.s32.totalorder %s122, 1
      %p1039 = por %p1037, %p1038
      %p1041 = scmp.ne.s32.totalorder %s1024, %s1040
      %p1042 = scmp.eq.s32.totalorder %s122, 0
      %p1043 = por %p1041, %p1042
      %s1045 = sadd.s32 %s1044, 1
      %p1048 = scmp.eq.s32.totalorder %s116, 1
      %p1049 = scmp.ne.s32.totalorder %s1044, %s1046
      %p1050 = scmp.eq.s32.totalorder %s116, 0
      %p1051 = por %p1049, %p1050
      %p1052 = scmp.ne.s32.totalorder %s1044, %s1046
      %p1053 = scmp.eq.s32.totalorder %s121, 1
      %p1054 = por %p1052, %p1053
      %p1055 = scmp.ne.s32.totalorder %s1046, %s1047
      %p1056 = scmp.eq.s32.totalorder %s121, 0
      %p1057 = por %p1055, %p1056
      %p1058 = scmp.ne.s32.totalorder %s1046, %s1047
      %p1059 = scmp.eq.s32.totalorder %s122, 1
      %p1060 = por %p1058, %p1059
      %p1062 = scmp.ne.s32.totalorder %s1047, %s1061
      %p1063 = scmp.eq.s32.totalorder %s122, 0
      %p1064 = por %p1062, %p1063
      %s1066 = sadd.s32 %s1065, 1
      %p1069 = scmp.eq.s32.totalorder %s116, 1
      %p1070 = scmp.ne.s32.totalorder %s1065, %s1067
      %p1071 = scmp.eq.s32.totalorder %s116, 0
      %p1072 = por %p1070, %p1071
      %p1073 = scmp.ne.s32.totalorder %s1065, %s1067
      %p1074 = scmp.eq.s32.totalorder %s121, 1
      %p1075 = por %p1073, %p1074
      %p1076 = scmp.ne.s32.totalorder %s1067, %s1068
      %p1077 = scmp.eq.s32.totalorder %s121, 0
      %p1078 = por %p1076, %p1077
      %p1079 = scmp.ne.s32.totalorder %s1067, %s1068
      %p1080 = scmp.eq.s32.totalorder %s122, 1
      %p1081 = por %p1079, %p1080
      %p1083 = scmp.ne.s32.totalorder %s1068, %s1082
      %p1084 = scmp.eq.s32.totalorder %s122, 0
      %p1085 = por %p1083, %p1084
      %s1087 = sadd.s32 %s1086, 1
      %p1090 = scmp.eq.s32.totalorder %s116, 1
      %p1091 = scmp.ne.s32.totalorder %s1086, %s1088
      %p1092 = scmp.eq.s32.totalorder %s116, 0
      %p1093 = por %p1091, %p1092
      %p1094 = scmp.ne.s32.totalorder %s1086, %s1088
      %p1095 = scmp.eq.s32.totalorder %s121, 1
      %p1096 = por %p1094, %p1095
      %p1097 = scmp.ne.s32.totalorder %s1088, %s1089
      %p1098 = scmp.eq.s32.totalorder %s121, 0
      %p1099 = por %p1097, %p1098
      %p1100 = scmp.ne.s32.totalorder %s1088, %s1089
      %p1101 = scmp.eq.s32.totalorder %s122, 1
      %p1102 = por %p1100, %p1101
      %p1104 = scmp.ne.s32.totalorder %s1089, %s1103
      %p1105 = scmp.eq.s32.totalorder %s122, 0
      %p1106 = por %p1104, %p1105
      %s1108 = sadd.s32 %s1107, 1
      %p1111 = scmp.eq.s32.totalorder %s116, 1
      %p1112 = scmp.ne.s32.totalorder %s1107, %s1109
      %p1113 = scmp.eq.s32.totalorder %s116, 0
      %p1114 = por %p1112, %p1113
      %p1115 = scmp.ne.s32.totalorder %s1107, %s1109
      %p1116 = scmp.eq.s32.totalorder %s121, 1
      %p1117 = por %p1115, %p1116
      %p1118 = scmp.ne.s32.totalorder %s1109, %s1110
      %p1119 = scmp.eq.s32.totalorder %s121, 0
      %p1120 = por %p1118, %p1119
      %p1121 = scmp.ne.s32.totalorder %s1109, %s1110
      %p1122 = scmp.eq.s32.totalorder %s122, 1
      %p1123 = por %p1121, %p1122
      %p1125 = scmp.ne.s32.totalorder %s1110, %s1124
      %p1126 = scmp.eq.s32.totalorder %s122, 0
      %p1127 = por %p1125, %p1126
      %s1129 = sadd.s32 %s1128, 1
      %p1132 = scmp.eq.s32.totalorder %s116, 1
      %p1133 = scmp.ne.s32.totalorder %s1128, %s1130
      %p1134 = scmp.eq.s32.totalorder %s116, 0
      %p1135 = por %p1133, %p1134
      %p1136 = scmp.ne.s32.totalorder %s1128, %s1130
      %p1137 = scmp.eq.s32.totalorder %s121, 1
      %p1138 = por %p1136, %p1137
      %p1139 = scmp.ne.s32.totalorder %s1130, %s1131
      %p1140 = scmp.eq.s32.totalorder %s121, 0
      %p1141 = por %p1139, %p1140
      %p1142 = scmp.ne.s32.totalorder %s1130, %s1131
      %p1143 = scmp.eq.s32.totalorder %s122, 1
      %p1144 = por %p1142, %p1143
      %p1146 = scmp.ne.s32.totalorder %s1131, %s1145
      %p1147 = scmp.eq.s32.totalorder %s122, 0
      %p1148 = por %p1146, %p1147
      %s1150 = sadd.s32 %s1149, 1
      %p1153 = scmp.eq.s32.totalorder %s116, 1
      %p1154 = scmp.ne.s32.totalorder %s1149, %s1151
      %p1155 = scmp.eq.s32.totalorder %s116, 0
      %p1156 = por %p1154, %p1155
      %p1157 = scmp.ne.s32.totalorder %s1149, %s1151
      %p1158 = scmp.eq.s32.totalorder %s121, 1
      %p1159 = por %p1157, %p1158
      %p1160 = scmp.ne.s32.totalorder %s1151, %s1152
      %p1161 = scmp.eq.s32.totalorder %s121, 0
      %p1162 = por %p1160, %p1161
      %p1163 = scmp.ne.s32.totalorder %s1151, %s1152
      %p1164 = scmp.eq.s32.totalorder %s122, 1
      %p1165 = por %p1163, %p1164
      %p1167 = scmp.ne.s32.totalorder %s1152, %s1166
      %p1168 = scmp.eq.s32.totalorder %s122, 0
      %p1169 = por %p1167, %p1168
      %s1171 = sadd.s32 %s1170, 1
      %p1174 = scmp.eq.s32.totalorder %s116, 1
      %p1175 = scmp.ne.s32.totalorder %s1170, %s1172
      %p1176 = scmp.eq.s32.totalorder %s116, 0
      %p1177 = por %p1175, %p1176
      %p1178 = scmp.ne.s32.totalorder %s1170, %s1172
      %p1179 = scmp.eq.s32.totalorder %s121, 1
      %p1180 = por %p1178, %p1179
      %p1181 = scmp.ne.s32.totalorder %s1172, %s1173
      %p1182 = scmp.eq.s32.totalorder %s121, 0
      %p1183 = por %p1181, %p1182
      %p1184 = scmp.ne.s32.totalorder %s1172, %s1173
      %p1185 = scmp.eq.s32.totalorder %s122, 1
      %p1186 = por %p1184, %p1185
      %p1188 = scmp.ne.s32.totalorder %s1173, %s1187
      %p1189 = scmp.eq.s32.totalorder %s122, 0
      %p1190 = por %p1188, %p1189
      %s1192 = sadd.s32 %s1191, 1
      %p1195 = scmp.eq.s32.totalorder %s116, 1
      %p1196 = scmp.ne.s32.totalorder %s1191, %s1193
      %p1197 = scmp.eq.s32.totalorder %s116, 0
      %p1198 = por %p1196, %p1197
      %p1199 = scmp.ne.s32.totalorder %s1191, %s1193
      %p1200 = scmp.eq.s32.totalorder %s121, 1
      %p1201 = por %p1199, %p1200
      %p1202 = scmp.ne.s32.totalorder %s1193, %s1194
      %p1203 = scmp.eq.s32.totalorder %s121, 0
      %p1204 = por %p1202, %p1203
      %p1205 = scmp.ne.s32.totalorder %s1193, %s1194
      %p1206 = scmp.eq.s32.totalorder %s122, 1
      %p1207 = por %p1205, %p1206
      %p1209 = scmp.ne.s32.totalorder %s1194, %s1208
      %p1210 = scmp.eq.s32.totalorder %s122, 0
      %p1211 = por %p1209, %p1210
      %s1213 = sadd.s32 %s1212, 1
      %p1216 = scmp.eq.s32.totalorder %s116, 1
      %p1217 = scmp.ne.s32.totalorder %s1212, %s1214
      %p1218 = scmp.eq.s32.totalorder %s116, 0
      %p1219 = por %p1217, %p1218
      %p1220 = scmp.ne.s32.totalorder %s1212, %s1214
      %p1221 = scmp.eq.s32.totalorder %s121, 1
      %p1222 = por %p1220, %p1221
      %p1223 = scmp.ne.s32.totalorder %s1214, %s1215
      %p1224 = scmp.eq.s32.totalorder %s121, 0
      %p1225 = por %p1223, %p1224
      %p1226 = scmp.ne.s32.totalorder %s1214, %s1215
      %p1227 = scmp.eq.s32.totalorder %s122, 1
      %p1228 = por %p1226, %p1227
      %p1230 = scmp.ne.s32.totalorder %s1215, %s1229
      %p1231 = scmp.eq.s32.totalorder %s122, 0
      %p1232 = por %p1230, %p1231
      %s1234 = sadd.s32 %s1233, 1
      %p1237 = scmp.eq.s32.totalorder %s116, 1
      %p1238 = scmp.ne.s32.totalorder %s1233, %s1235
      %p1239 = scmp.eq.s32.totalorder %s116, 0
      %p1240 = por %p1238, %p1239
      %p1241 = scmp.ne.s32.totalorder %s1233, %s1235
      %p1242 = scmp.eq.s32.totalorder %s121, 1
      %p1243 = por %p1241, %p1242
      %p1244 = scmp.ne.s32.totalorder %s1235, %s1236
      %p1245 = scmp.eq.s32.totalorder %s121, 0
      %p1246 = por %p1244, %p1245
      %p1247 = scmp.ne.s32.totalorder %s1235, %s1236
      %p1248 = scmp.eq.s32.totalorder %s122, 1
      %p1249 = por %p1247, %p1248
      %p1251 = scmp.ne.s32.totalorder %s1236, %s1250
      %p1252 = scmp.eq.s32.totalorder %s122, 0
      %p1253 = por %p1251, %p1252
      %s1255 = sadd.s32 %s1254, 1
      %p1258 = scmp.eq.s32.totalorder %s116, 1
      %p1259 = scmp.ne.s32.totalorder %s1254, %s1256
      %p1260 = scmp.eq.s32.totalorder %s116, 0
      %p1261 = por %p1259, %p1260
      %p1262 = scmp.ne.s32.totalorder %s1254, %s1256
      %p1263 = scmp.eq.s32.totalorder %s121, 1
      %p1264 = por %p1262, %p1263
      %p1265 = scmp.ne.s32.totalorder %s1256, %s1257
      %p1266 = scmp.eq.s32.totalorder %s121, 0
      %p1267 = por %p1265, %p1266
      %p1268 = scmp.ne.s32.totalorder %s1256, %s1257
      %p1269 = scmp.eq.s32.totalorder %s122, 1
      %p1270 = por %p1268, %p1269
      %p1272 = scmp.ne.s32.totalorder %s1257, %s1271
      %p1273 = scmp.eq.s32.totalorder %s122, 0
      %p1274 = por %p1272, %p1273
      %p1275 = scmp.le.s32.totalorder 1, %s116
      %p1276 = scmp.lt.s32.totalorder %s116, 3
      %p1277 = pnand %p1275, %p1276
      %p1278 = pneg %p1277
      // Predicated region
      $region9: #{srm_forward.1} parent=5 // pred_check
        _
      $region10: #{srm_forward.1} parent=5 // pred_check_branch
        %1280 = sbr.rel (%p1277) target = $region12
      $region11: #{srm_forward.1} parent=5 // pred_region
        %s1281 = ssub.s32 %s116, 1
        // Predicated region
        $region13: #{srm_forward.1} parent=11 // pred_check
          %p1282 = pneg %p137
        $region14: #{srm_forward.1} parent=11 // pred_check_branch
          %1284 = sbr.rel (%p1282) target = $region16
        $region15: #{srm_forward.1} parent=11 // pred_region
          _
        $region16: #{srm_forward.1} parent=11 // pred_fallthru
          _
        // Predicated region
        $region17: #{srm_forward.1} parent=11 // pred_check
          %p1285 = pneg %p158
        $region18: #{srm_forward.1} parent=11 // pred_check_branch
          %1287 = sbr.rel (%p1285) target = $region20
        $region19: #{srm_forward.1} parent=11 // pred_region
          _
        $region20: #{srm_forward.1} parent=11 // pred_fallthru
          _
        // Predicated region
        $region21: #{srm_forward.1} parent=11 // pred_check
          %p1288 = pneg %p179
        $region22: #{srm_forward.1} parent=11 // pred_check_branch
          %1290 = sbr.rel (%p1288) target = $region24
        $region23: #{srm_forward.1} parent=11 // pred_region
          _
        $region24: #{srm_forward.1} parent=11 // pred_fallthru
          _
        // Predicated region
        $region25: #{srm_forward.1} parent=11 // pred_check
          %p1291 = pneg %p200
        $region26: #{srm_forward.1} parent=11 // pred_check_branch
          %1293 = sbr.rel (%p1291) target = $region28
        $region27: #{srm_forward.1} parent=11 // pred_region
          _
        $region28: #{srm_forward.1} parent=11 // pred_fallthru
          _
        // Predicated region
        $region29: #{srm_forward.1} parent=11 // pred_check
          %p1294 = pneg %p221
        $region30: #{srm_forward.1} parent=11 // pred_check_branch
          %1296 = sbr.rel (%p1294) target = $region32
        $region31: #{srm_forward.1} parent=11 // pred_region
          _
        $region32: #{srm_forward.1} parent=11 // pred_fallthru
          _
        // Predicated region
        $region33: #{srm_forward.1} parent=11 // pred_check
          %p1297 = pneg %p242
        $region34: #{srm_forward.1} parent=11 // pred_check_branch
          %1299 = sbr.rel (%p1297) target = $region36
        $region35: #{srm_forward.1} parent=11 // pred_region
          _
        $region36: #{srm_forward.1} parent=11 // pred_fallthru
          _
        // Predicated region
        $region37: #{srm_forward.1} parent=11 // pred_check
          %p1300 = pneg %p263
        $region38: #{srm_forward.1} parent=11 // pred_check_branch
          %1302 = sbr.rel (%p1300) target = $region40
        $region39: #{srm_forward.1} parent=11 // pred_region
          _
        $region40: #{srm_forward.1} parent=11 // pred_fallthru
          _
        // Predicated region
        $region41: #{srm_forward.1} parent=11 // pred_check
          %p1303 = pneg %p284
        $region42: #{srm_forward.1} parent=11 // pred_check_branch
          %1305 = sbr.rel (%p1303) target = $region44
        $region43: #{srm_forward.1} parent=11 // pred_region
          _
        $region44: #{srm_forward.1} parent=11 // pred_fallthru
          _
        // Predicated region
        $region45: #{srm_forward.1} parent=11 // pred_check
          %p1306 = pneg %p305
        $region46: #{srm_forward.1} parent=11 // pred_check_branch
          %1308 = sbr.rel (%p1306) target = $region48
        $region47: #{srm_forward.1} parent=11 // pred_region
          %s1310 = ssub.s32 1024, 1024
          %1311 = vsyncadd [#allocation4], %s1310
          %s1312 = sshll.u32 [#allocation3], 4
          %s1313 = int_to_ptr.vmem [resolvable:$true] %s1312
          %1318 = dma.hbm_to_vmem [thread:$0]  %s17, 1024, %s1313, [#allocation4], 64, 64, 4
        $region48: #{srm_forward.1} parent=11 // pred_fallthru
          _
        // Predicated region
        $region49: #{srm_forward.1} parent=11 // pred_check
          %p1319 = pneg %p326
        $region50: #{srm_forward.1} parent=11 // pred_check_branch
          %1321 = sbr.rel (%p1319) target = $region52
        $region51: #{srm_forward.1} parent=11 // pred_region
          %s1323 = ssub.s32 16, 16
          %1324 = vsyncadd [#allocation6], %s1323
          %s1326 = sshll.u32 [#allocation5], 4
          %s1327 = int_to_ptr.vmem [resolvable:$true] %s1326
          %1329 = dma.hbm_to_vmem [thread:$0]  %s19, 16, %s1327, [#allocation6]
        $region52: #{srm_forward.1} parent=11 // pred_fallthru
          _
        // Predicated region
        $region53: #{srm_forward.1} parent=11 // pred_check
          %p1330 = pneg %p347
        $region54: #{srm_forward.1} parent=11 // pred_check_branch
          %1332 = sbr.rel (%p1330) target = $region56
        $region55: #{srm_forward.1} parent=11 // pred_region
          %s1334 = ssub.s32 1024, 1024
          %1335 = vsyncadd [#allocation6], %s1334
          %s1336 = sshll.u32 [#allocation7], 4
          %s1337 = int_to_ptr.vmem [resolvable:$true] %s1336
          %1342 = dma.hbm_to_vmem [thread:$0]  %s21, 1024, %s1337, [#allocation6], 64, 64, 4
        $region56: #{srm_forward.1} parent=11 // pred_fallthru
          _
        // Predicated region
        $region57: #{srm_forward.1} parent=11 // pred_check
          %p1343 = pneg %p368
        $region58: #{srm_forward.1} parent=11 // pred_check_branch
          %1345 = sbr.rel (%p1343) target = $region60
        $region59: #{srm_forward.1} parent=11 // pred_region
          _
        $region60: #{srm_forward.1} parent=11 // pred_fallthru
          _
        // Predicated region
        $region61: #{srm_forward.1} parent=11 // pred_check
          %p1346 = pneg %p389
        $region62: #{srm_forward.1} parent=11 // pred_check_branch
          %1348 = sbr.rel (%p1346) target = $region64
        $region63: #{srm_forward.1} parent=11 // pred_region
          %s1350 = ssub.s32 1024, 1024
          %1351 = vsyncadd [#allocation9], %s1350
          %s1352 = sshll.u32 [#allocation8], 4
          %s1353 = int_to_ptr.vmem [resolvable:$true] %s1352
          %1358 = dma.hbm_to_vmem [thread:$0]  %s25, 1024, %s1353, [#allocation9], 64, 64, 4
        $region64: #{srm_forward.1} parent=11 // pred_fallthru
          _
        // Predicated region
        $region65: #{srm_forward.1} parent=11 // pred_check
          %p1359 = pneg %p410
        $region66: #{srm_forward.1} parent=11 // pred_check_branch
          %1361 = sbr.rel (%p1359) target = $region68
        $region67: #{srm_forward.1} parent=11 // pred_region
          _
        $region68: #{srm_forward.1} parent=11 // pred_fallthru
          _
        // Predicated region
        $region69: #{srm_forward.1} parent=11 // pred_check
          %p1362 = pneg %p431
        $region70: #{srm_forward.1} parent=11 // pred_check_branch
          %1364 = sbr.rel (%p1362) target = $region72
        $region71: #{srm_forward.1} parent=11 // pred_region
          _
        $region72: #{srm_forward.1} parent=11 // pred_fallthru
          _
        // Predicated region
        $region73: #{srm_forward.1} parent=11 // pred_check
          %p1365 = pneg %p452
        $region74: #{srm_forward.1} parent=11 // pred_check_branch
          %1367 = sbr.rel (%p1365) target = $region76
        $region75: #{srm_forward.1} parent=11 // pred_region
          _
        $region76: #{srm_forward.1} parent=11 // pred_fallthru
          _
        // Predicated region
        $region77: #{srm_forward.1} parent=11 // pred_check
          %p1368 = pneg %p473
        $region78: #{srm_forward.1} parent=11 // pred_check_branch
          %1370 = sbr.rel (%p1368) target = $region80
        $region79: #{srm_forward.1} parent=11 // pred_region
          %s1372 = ssub.s32 1024, 1024
          %1373 = vsyncadd [#allocation9], %s1372
          %s1374 = sshll.u32 [#allocation10], 4
          %s1375 = int_to_ptr.vmem [resolvable:$true] %s1374
          %1380 = dma.hbm_to_vmem [thread:$0]  %s33, 1024, %s1375, [#allocation9], 64, 64, 4
        $region80: #{srm_forward.1} parent=11 // pred_fallthru
          _
        // Predicated region
        $region81: #{srm_forward.1} parent=11 // pred_check
          %p1381 = pneg %p494
        $region82: #{srm_forward.1} parent=11 // pred_check_branch
          %1383 = sbr.rel (%p1381) target = $region84
        $region83: #{srm_forward.1} parent=11 // pred_region
          %s1385 = ssub.s32 16, 16
          %1386 = vsyncadd [#allocation12], %s1385
          %s1388 = sshll.u32 [#allocation11], 4
          %s1389 = int_to_ptr.vmem [resolvable:$true] %s1388
          %1391 = dma.hbm_to_vmem [thread:$0]  %s35, 16, %s1389, [#allocation12]
        $region84: #{srm_forward.1} parent=11 // pred_fallthru
          _
        // Predicated region
        $region85: #{srm_forward.1} parent=11 // pred_check
          %p1392 = pneg %p515
        $region86: #{srm_forward.1} parent=11 // pred_check_branch
          %1394 = sbr.rel (%p1392) target = $region88
        $region87: #{srm_forward.1} parent=11 // pred_region
          %s1396 = ssub.s32 1024, 1024
          %1397 = vsyncadd [#allocation12], %s1396
          %s1398 = sshll.u32 [#allocation13], 4
          %s1399 = int_to_ptr.vmem [resolvable:$true] %s1398
          %1404 = dma.hbm_to_vmem [thread:$0]  %s37, 1024, %s1399, [#allocation12], 64, 64, 4
        $region88: #{srm_forward.1} parent=11 // pred_fallthru
          _
        // Predicated region
        $region89: #{srm_forward.1} parent=11 // pred_check
          %p1405 = pneg %p536
        $region90: #{srm_forward.1} parent=11 // pred_check_branch
          %1407 = sbr.rel (%p1405) target = $region92
        $region91: #{srm_forward.1} parent=11 // pred_region
          %s1409 = ssub.s32 16, 16
          %1410 = vsyncadd [#allocation15], %s1409
          %s1412 = sshll.u32 [#allocation14], 4
          %s1413 = int_to_ptr.vmem [resolvable:$true] %s1412
          %1415 = dma.hbm_to_vmem [thread:$0]  %s39, 16, %s1413, [#allocation15]
        $region92: #{srm_forward.1} parent=11 // pred_fallthru
          _
        // Predicated region
        $region93: #{srm_forward.1} parent=11 // pred_check
          %p1416 = pneg %p557
        $region94: #{srm_forward.1} parent=11 // pred_check_branch
          %1418 = sbr.rel (%p1416) target = $region96
        $region95: #{srm_forward.1} parent=11 // pred_region
          %s1420 = ssub.s32 1024, 1024
          %1421 = vsyncadd [#allocation15], %s1420
          %s1422 = sshll.u32 [#allocation16], 4
          %s1423 = int_to_ptr.vmem [resolvable:$true] %s1422
          %1428 = dma.hbm_to_vmem [thread:$0]  %s41, 1024, %s1423, [#allocation15], 64, 64, 4
        $region96: #{srm_forward.1} parent=11 // pred_fallthru
          _
        // Predicated region
        $region97: #{srm_forward.1} parent=11 // pred_check
          %p1429 = pneg %p578
        $region98: #{srm_forward.1} parent=11 // pred_check_branch
          %1431 = sbr.rel (%p1429) target = $region100
        $region99: #{srm_forward.1} parent=11 // pred_region
          %s1433 = ssub.s32 16, 16
          %1434 = vsyncadd [#allocation18], %s1433
          %s1436 = sshll.u32 [#allocation17], 4
          %s1437 = int_to_ptr.vmem [resolvable:$true] %s1436
          %1439 = dma.hbm_to_vmem [thread:$0]  %s43, 16, %s1437, [#allocation18]
        $region100: #{srm_forward.1} parent=11 // pred_fallthru
          _
        // Predicated region
        $region101: #{srm_forward.1} parent=11 // pred_check
          %p1440 = pneg %p599
        $region102: #{srm_forward.1} parent=11 // pred_check_branch
          %1442 = sbr.rel (%p1440) target = $region104
        $region103: #{srm_forward.1} parent=11 // pred_region
          %s1444 = ssub.s32 1024, 1024
          %1445 = vsyncadd [#allocation18], %s1444
          %s1446 = sshll.u32 [#allocation19], 4
          %s1447 = int_to_ptr.vmem [resolvable:$true] %s1446
          %1452 = dma.hbm_to_vmem [thread:$0]  %s45, 1024, %s1447, [#allocation18], 64, 64, 4
        $region104: #{srm_forward.1} parent=11 // pred_fallthru
          _
        // Predicated region
        $region105: #{srm_forward.1} parent=11 // pred_check
          %p1453 = pneg %p620
        $region106: #{srm_forward.1} parent=11 // pred_check_branch
          %1455 = sbr.rel (%p1453) target = $region108
        $region107: #{srm_forward.1} parent=11 // pred_region
          %s1457 = ssub.s32 16, 16
          %1458 = vsyncadd [#allocation21], %s1457
          %s1460 = sshll.u32 [#allocation20], 4
          %s1461 = int_to_ptr.vmem [resolvable:$true] %s1460
          %1463 = dma.hbm_to_vmem [thread:$0]  %s47, 16, %s1461, [#allocation21]
        $region108: #{srm_forward.1} parent=11 // pred_fallthru
          _
        // Predicated region
        $region109: #{srm_forward.1} parent=11 // pred_check
          %p1464 = pneg %p1057
        $region110: #{srm_forward.1} parent=11 // pred_check_branch
          %1466 = sbr.rel (%p1464) target = $region112
        $region111: #{srm_forward.1} parent=11 // pred_region
          %s1468 = ssub.s32 1024, 1024
          %1469 = vsyncadd [#allocation6], %s1468
          %s1470 = sshll.u32 [#allocation34], 4
          %s1471 = int_to_ptr.vmem [resolvable:$true] %s1470
          %1476 = dma.hbm_to_vmem [thread:$0]  %s81, 1024, %s1471, [#allocation6], 64, 64, 4
        $region112: #{srm_forward.1} parent=11 // pred_fallthru
          _
        // Predicated region
        $region113: #{srm_forward.1} parent=11 // pred_check
          %p1477 = pneg %p1078
        $region114: #{srm_forward.1} parent=11 // pred_check_branch
          %1479 = sbr.rel (%p1477) target = $region116
        $region115: #{srm_forward.1} parent=11 // pred_region
          %s1481 = ssub.s32 16, 16
          %1482 = vsyncadd [#allocation9], %s1481
          %s1484 = sshll.u32 [#allocation35], 4
          %s1485 = int_to_ptr.vmem [resolvable:$true] %s1484
          %1487 = dma.hbm_to_vmem [thread:$0]  %s83, 16, %s1485, [#allocation9]
        $region116: #{srm_forward.1} parent=11 // pred_fallthru
          _
        // Predicated region
        $region117: #{srm_forward.1} parent=11 // pred_check
          %p1488 = pneg %p1099
        $region118: #{srm_forward.1} parent=11 // pred_check_branch
          %1490 = sbr.rel (%p1488) target = $region120
        $region119: #{srm_forward.1} parent=11 // pred_region
          %s1492 = ssub.s32 16, 16
          %1493 = vsyncadd [#allocation12], %s1492
          %s1495 = sshll.u32 [#allocation36], 4
          %s1496 = int_to_ptr.vmem [resolvable:$true] %s1495
          %1498 = dma.hbm_to_vmem [thread:$0]  %s85, 16, %s1496, [#allocation12]
        $region120: #{srm_forward.1} parent=11 // pred_fallthru
          _
        // Predicated region
        $region121: #{srm_forward.1} parent=11 // pred_check
          %p1499 = pneg %p1120
        $region122: #{srm_forward.1} parent=11 // pred_check_branch
          %1501 = sbr.rel (%p1499) target = $region124
        $region123: #{srm_forward.1} parent=11 // pred_region
          %s1503 = ssub.s32 16, 16
          %1504 = vsyncadd [#allocation15], %s1503
          %s1506 = sshll.u32 [#allocation37], 4
          %s1507 = int_to_ptr.vmem [resolvable:$true] %s1506
          %1509 = dma.hbm_to_vmem [thread:$0]  %s87, 16, %s1507, [#allocation15]
        $region124: #{srm_forward.1} parent=11 // pred_fallthru
          _
        // Predicated region
        $region125: #{srm_forward.1} parent=11 // pred_check
          %p1510 = pneg %p1141
        $region126: #{srm_forward.1} parent=11 // pred_check_branch
          %1512 = sbr.rel (%p1510) target = $region128
        $region127: #{srm_forward.1} parent=11 // pred_region
          %s1514 = ssub.s32 1024, 1024
          %1515 = vsyncadd [#allocation18], %s1514
          %s1516 = sshll.u32 [#allocation38], 4
          %s1517 = int_to_ptr.vmem [resolvable:$true] %s1516
          %1522 = dma.hbm_to_vmem [thread:$0]  %s89, 1024, %s1517, [#allocation18], 64, 64, 4
        $region128: #{srm_forward.1} parent=11 // pred_fallthru
          _
        // Predicated region
        $region129: #{srm_forward.1} parent=11 // pred_check
          %p1523 = pneg %p1162
        $region130: #{srm_forward.1} parent=11 // pred_check_branch
          %1525 = sbr.rel (%p1523) target = $region132
        $region131: #{srm_forward.1} parent=11 // pred_region
          %s1527 = ssub.s32 16, 16
          %1528 = vsyncadd [#allocation21], %s1527
          %s1530 = sshll.u32 [#allocation39], 4
          %s1531 = int_to_ptr.vmem [resolvable:$true] %s1530
          %1533 = dma.hbm_to_vmem [thread:$0]  %s91, 16, %s1531, [#allocation21]
        $region132: #{srm_forward.1} parent=11 // pred_fallthru
          _
        // Predicated region
        $region133: #{srm_forward.1} parent=11 // pred_check
          %p1534 = pneg %p1183
        $region134: #{srm_forward.1} parent=11 // pred_check_branch
          %1536 = sbr.rel (%p1534) target = $region136
        $region135: #{srm_forward.1} parent=11 // pred_region
          %s1538 = ssub.s32 16, 16
          %1539 = vsyncadd [#allocation41], %s1538
          %s1541 = sshll.u32 [#allocation40], 4
          %s1542 = int_to_ptr.vmem [resolvable:$true] %s1541
          %1544 = dma.hbm_to_vmem [thread:$0]  %s93, 16, %s1542, [#allocation41]
        $region136: #{srm_forward.1} parent=11 // pred_fallthru
          _
        // Predicated region
        $region137: #{srm_forward.1} parent=11 // pred_check
          %p1545 = pneg %p1204
        $region138: #{srm_forward.1} parent=11 // pred_check_branch
          %1547 = sbr.rel (%p1545) target = $region140
        $region139: #{srm_forward.1} parent=11 // pred_region
          %s1549 = ssub.s32 16, 16
          %1550 = vsyncadd [#allocation41], %s1549
          %s1552 = sshll.u32 [#allocation42], 4
          %s1553 = int_to_ptr.vmem [resolvable:$true] %s1552
          %1555 = dma.hbm_to_vmem [thread:$0]  %s95, 16, %s1553, [#allocation41]
        $region140: #{srm_forward.1} parent=11 // pred_fallthru
          _
        // Predicated region
        $region141: #{srm_forward.1} parent=11 // pred_check
          %p1556 = pneg %p1225
        $region142: #{srm_forward.1} parent=11 // pred_check_branch
          %1558 = sbr.rel (%p1556) target = $region144
        $region143: #{srm_forward.1} parent=11 // pred_region
          %s1560 = ssub.s32 1024, 1024
          %1561 = vsyncadd [#allocation44], %s1560
          %s1562 = sshll.u32 [#allocation43], 4
          %s1563 = int_to_ptr.vmem [resolvable:$true] %s1562
          %1568 = dma.hbm_to_vmem [thread:$0]  %s97, 1024, %s1563, [#allocation44], 64, 64, 4
        $region144: #{srm_forward.1} parent=11 // pred_fallthru
          _
        // Predicated region
        $region145: #{srm_forward.1} parent=11 // pred_check
          %p1569 = pneg %p1246
        $region146: #{srm_forward.1} parent=11 // pred_check_branch
          %1571 = sbr.rel (%p1569) target = $region148
        $region147: #{srm_forward.1} parent=11 // pred_region
          %s1573 = ssub.s32 16, 16
          %1574 = vsyncadd [#allocation44], %s1573
          %s1576 = sshll.u32 [#allocation45], 4
          %s1577 = int_to_ptr.vmem [resolvable:$true] %s1576
          %1579 = dma.hbm_to_vmem [thread:$0]  %s99, 16, %s1577, [#allocation44]
        $region148: #{srm_forward.1} parent=11 // pred_fallthru
          _
      $region12: #{srm_forward.1} parent=5 // pred_fallthru
        _
      %p1580 = scmp.lt.s32.totalorder %s116, 2
      // Predicated region
      $region149: #{srm_forward.1} parent=5 // pred_check
        %p1581 = pneg %p1580
      $region150: #{srm_forward.1} parent=5 // pred_check_branch
        %1583 = sbr.rel (%p1581) target = $region152
      $region151: #{srm_forward.1} parent=5 // pred_region
        // Predicated region
        $region153: #{srm_forward.1} parent=151 // pred_check
          %p1584 = pneg %p640
        $region154: #{srm_forward.1} parent=151 // pred_check_branch
          %1586 = sbr.rel (%p1584) target = $region156
        $region155: #{srm_forward.1} parent=151 // pred_region
          %s1587 = sand.u32 %s116, 1
          %s1588 = scalar_lea.sflag [#allocation4], %s1587
          %s1589 = sand.u32 %s630, 1
          %s1590 = scalar_lea.vmem [#allocation22], %s1589
          %s1592 = ssub.s32 16, 16
          %1593 = vsyncadd %s1588, %s1592
          %s1594 = smul.addr %s116, 16
          %s1595 = scalar_lea.hbm %s49, %s1594
          %s1597 = sshll.u32 %s1590, 4
          %s1598 = int_to_ptr.vmem [resolvable:$true] %s1597
          %1600 = dma.hbm_to_vmem [thread:$0]  %s1595, 16, %s1598, %s1588
        $region156: #{srm_forward.1} parent=151 // pred_fallthru
          _
        // Predicated region
        $region157: #{srm_forward.1} parent=151 // pred_check
          %p1601 = pneg %p666
        $region158: #{srm_forward.1} parent=151 // pred_check_branch
          %1603 = sbr.rel (%p1601) target = $region160
        $region159: #{srm_forward.1} parent=151 // pred_region
          %s1604 = sand.u32 %s116, 1
          %s1605 = scalar_lea.sflag [#allocation4], %s1604
          %s1606 = sand.u32 %s656, 1
          %s1607 = scalar_lea.vmem [#allocation23], %s1606
          %s1609 = ssub.s32 16, 16
          %1610 = vsyncadd %s1605, %s1609
          %s1611 = smul.addr %s116, 16
          %s1612 = scalar_lea.hbm %s51, %s1611
          %s1614 = sshll.u32 %s1607, 4
          %s1615 = int_to_ptr.vmem [resolvable:$true] %s1614
          %1617 = dma.hbm_to_vmem [thread:$0]  %s1612, 16, %s1615, %s1605
        $region160: #{srm_forward.1} parent=151 // pred_fallthru
          _
        // Predicated region
        $region161: #{srm_forward.1} parent=151 // pred_check
          %p1618 = pneg %p692
        $region162: #{srm_forward.1} parent=151 // pred_check_branch
          %1620 = sbr.rel (%p1618) target = $region164
        $region163: #{srm_forward.1} parent=151 // pred_region
          %p1621 = scmp.lt.s32.totalorder %s116, 1
          %s1622 = scalar_select %p1621, %s116, 1
          %s1623 = smul.addr %s1622, 16
          %s1624 = smul.addr %s1623, 4
          %s1625 = scalar_lea.vmem %s53, %s1624
        $region164: #{srm_forward.1} parent=151 // pred_fallthru
          _
        // Predicated region
        $region165: #{srm_forward.1} parent=151 // pred_check
          %p1626 = pneg %p718
        $region166: #{srm_forward.1} parent=151 // pred_check_branch
          %1628 = sbr.rel (%p1626) target = $region168
        $region167: #{srm_forward.1} parent=151 // pred_region
          %s1629 = sand.u32 %s116, 1
          %s1630 = scalar_lea.sflag [#allocation4], %s1629
          %s1631 = sand.u32 %s708, 1
          %s1632 = scalar_lea.vmem [#allocation24], %s1631
          %s1634 = ssub.s32 16, 16
          %1635 = vsyncadd %s1630, %s1634
          %s1636 = smul.addr %s116, 16
          %s1637 = scalar_lea.hbm %s55, %s1636
          %s1639 = sshll.u32 %s1632, 4
          %s1640 = int_to_ptr.vmem [resolvable:$true] %s1639
          %1642 = dma.hbm_to_vmem [thread:$0]  %s1637, 16, %s1640, %s1630
        $region168: #{srm_forward.1} parent=151 // pred_fallthru
          _
        // Predicated region
        $region169: #{srm_forward.1} parent=151 // pred_check
          %p1643 = pneg %p744
        $region170: #{srm_forward.1} parent=151 // pred_check_branch
          %1645 = sbr.rel (%p1643) target = $region172
        $region171: #{srm_forward.1} parent=151 // pred_region
          %p1646 = scmp.lt.s32.totalorder %s116, 1
          %s1647 = scalar_select %p1646, %s116, 1
          %s1648 = smul.addr %s1647, 16
          %s1649 = smul.addr %s1648, 4
          %s1650 = scalar_lea.vmem %s57, %s1649
        $region172: #{srm_forward.1} parent=151 // pred_fallthru
          _
        // Predicated region
        $region173: #{srm_forward.1} parent=151 // pred_check
          %p1651 = pneg %p770
        $region174: #{srm_forward.1} parent=151 // pred_check_branch
          %1653 = sbr.rel (%p1651) target = $region176
        $region175: #{srm_forward.1} parent=151 // pred_region
          %s1654 = sand.u32 %s116, 1
          %s1655 = scalar_lea.sflag [#allocation4], %s1654
          %s1656 = sand.u32 %s760, 1
          %s1657 = scalar_lea.vmem [#allocation25], %s1656
          %s1659 = ssub.s32 16, 16
          %1660 = vsyncadd %s1655, %s1659
          %s1661 = smul.addr %s116, 16
          %s1662 = scalar_lea.hbm %s59, %s1661
          %s1664 = sshll.u32 %s1657, 4
          %s1665 = int_to_ptr.vmem [resolvable:$true] %s1664
          %1667 = dma.hbm_to_vmem [thread:$0]  %s1662, 16, %s1665, %s1655
        $region176: #{srm_forward.1} parent=151 // pred_fallthru
          _
        // Predicated region
        $region177: #{srm_forward.1} parent=151 // pred_check
          %p1668 = pneg %p796
        $region178: #{srm_forward.1} parent=151 // pred_check_branch
          %1670 = sbr.rel (%p1668) target = $region180
        $region179: #{srm_forward.1} parent=151 // pred_region
          %p1671 = scmp.lt.s32.totalorder %s116, 1
          %s1672 = scalar_select %p1671, %s116, 1
          %s1673 = smul.addr %s1672, 16
          %s1674 = smul.addr %s1673, 4
          %s1675 = scalar_lea.vmem %s61, %s1674
        $region180: #{srm_forward.1} parent=151 // pred_fallthru
          _
        // Predicated region
        $region181: #{srm_forward.1} parent=151 // pred_check
          %p1676 = pneg %p822
        $region182: #{srm_forward.1} parent=151 // pred_check_branch
          %1678 = sbr.rel (%p1676) target = $region184
        $region183: #{srm_forward.1} parent=151 // pred_region
          %s1679 = sand.u32 %s116, 1
          %s1680 = scalar_lea.sflag [#allocation4], %s1679
          %s1681 = sand.u32 %s812, 1
          %s1682 = scalar_lea.vmem [#allocation26], %s1681
          %s1684 = ssub.s32 16, 16
          %1685 = vsyncadd %s1680, %s1684
          %s1686 = smul.addr %s116, 16
          %s1687 = scalar_lea.hbm %s63, %s1686
          %s1689 = sshll.u32 %s1682, 4
          %s1690 = int_to_ptr.vmem [resolvable:$true] %s1689
          %1692 = dma.hbm_to_vmem [thread:$0]  %s1687, 16, %s1690, %s1680
        $region184: #{srm_forward.1} parent=151 // pred_fallthru
          _
        // Predicated region
        $region185: #{srm_forward.1} parent=151 // pred_check
          %p1693 = pneg %p848
        $region186: #{srm_forward.1} parent=151 // pred_check_branch
          %1695 = sbr.rel (%p1693) target = $region188
        $region187: #{srm_forward.1} parent=151 // pred_region
          %p1696 = scmp.lt.s32.totalorder %s116, 1
          %s1697 = scalar_select %p1696, %s116, 1
          %s1698 = smul.addr %s1697, 16
          %s1699 = smul.addr %s1698, 4
          %s1700 = scalar_lea.vmem %s65, %s1699
        $region188: #{srm_forward.1} parent=151 // pred_fallthru
          _
        // Predicated region
        $region189: #{srm_forward.1} parent=151 // pred_check
          %p1701 = pneg %p874
        $region190: #{srm_forward.1} parent=151 // pred_check_branch
          %1703 = sbr.rel (%p1701) target = $region192
        $region191: #{srm_forward.1} parent=151 // pred_region
          %s1704 = sand.u32 %s116, 1
          %s1705 = scalar_lea.sflag [#allocation4], %s1704
          %s1706 = sand.u32 %s864, 1
          %s1707 = scalar_lea.vmem [#allocation27], %s1706
          %s1709 = ssub.s32 16, 16
          %1710 = vsyncadd %s1705, %s1709
          %s1711 = smul.addr %s116, 16
          %s1712 = scalar_lea.hbm %s67, %s1711
          %s1714 = sshll.u32 %s1707, 4
          %s1715 = int_to_ptr.vmem [resolvable:$true] %s1714
          %1717 = dma.hbm_to_vmem [thread:$0]  %s1712, 16, %s1715, %s1705
        $region192: #{srm_forward.1} parent=151 // pred_fallthru
          _
        // Predicated region
        $region193: #{srm_forward.1} parent=151 // pred_check
          %p1718 = pneg %p900
        $region194: #{srm_forward.1} parent=151 // pred_check_branch
          %1720 = sbr.rel (%p1718) target = $region196
        $region195: #{srm_forward.1} parent=151 // pred_region
          %s1721 = sand.u32 %s116, 1
          %s1722 = scalar_lea.sflag [#allocation4], %s1721
          %s1723 = sand.u32 %s890, 1
          %s1724 = scalar_lea.vmem [#allocation28], %s1723
          %s1726 = ssub.s32 16, 16
          %1727 = vsyncadd %s1722, %s1726
          %s1728 = smul.addr %s116, 16
          %s1729 = scalar_lea.hbm %s69, %s1728
          %s1731 = sshll.u32 %s1724, 4
          %s1732 = int_to_ptr.vmem [resolvable:$true] %s1731
          %1734 = dma.hbm_to_vmem [thread:$0]  %s1729, 16, %s1732, %s1722
        $region196: #{srm_forward.1} parent=151 // pred_fallthru
          _
        // Predicated region
        $region197: #{srm_forward.1} parent=151 // pred_check
          %p1735 = pneg %p926
        $region198: #{srm_forward.1} parent=151 // pred_check_branch
          %1737 = sbr.rel (%p1735) target = $region200
        $region199: #{srm_forward.1} parent=151 // pred_region
          %s1738 = sand.u32 %s116, 1
          %s1739 = scalar_lea.sflag [#allocation4], %s1738
          %s1740 = sand.u32 %s916, 1
          %s1741 = scalar_lea.vmem [#allocation29], %s1740
          %s1743 = ssub.s32 16, 16
          %1744 = vsyncadd %s1739, %s1743
          %s1745 = smul.addr %s116, 16
          %s1746 = scalar_lea.hbm %s71, %s1745
          %s1748 = sshll.u32 %s1741, 4
          %s1749 = int_to_ptr.vmem [resolvable:$true] %s1748
          %1751 = dma.hbm_to_vmem [thread:$0]  %s1746, 16, %s1749, %s1739
        $region200: #{srm_forward.1} parent=151 // pred_fallthru
          _
        // Predicated region
        $region201: #{srm_forward.1} parent=151 // pred_check
          %p1752 = pneg %p952
        $region202: #{srm_forward.1} parent=151 // pred_check_branch
          %1754 = sbr.rel (%p1752) target = $region204
        $region203: #{srm_forward.1} parent=151 // pred_region
          %s1755 = sand.u32 %s116, 1
          %s1756 = scalar_lea.sflag [#allocation4], %s1755
          %s1757 = sand.u32 %s942, 1
          %s1758 = smul.addr %s1757, 64
          %s1759 = scalar_lea.vmem [#allocation30], %s1758
          %s1761 = ssub.s32 1024, 1024
          %1762 = vsyncadd %s1756, %s1761
          %s1763 = smul.addr %s116, 16
          %s1764 = smul.addr %s1763, 64
          %s1765 = scalar_lea.hbm %s73, %s1764
          %s1766 = sshll.u32 %s1759, 4
          %s1767 = int_to_ptr.vmem [resolvable:$true] %s1766
          %1772 = dma.hbm_to_vmem [thread:$0]  %s1765, 1024, %s1767, %s1756, 64, 64, 4
        $region204: #{srm_forward.1} parent=151 // pred_fallthru
          _
        // Predicated region
        $region205: #{srm_forward.1} parent=151 // pred_check
          %p1773 = pneg %p978
        $region206: #{srm_forward.1} parent=151 // pred_check_branch
          %1775 = sbr.rel (%p1773) target = $region208
        $region207: #{srm_forward.1} parent=151 // pred_region
          %s1776 = sand.u32 %s116, 1
          %s1777 = scalar_lea.sflag [#allocation4], %s1776
          %s1778 = sand.u32 %s968, 1
          %s1779 = scalar_lea.vmem [#allocation31], %s1778
          %s1781 = ssub.s32 16, 16
          %1782 = vsyncadd %s1777, %s1781
          %s1783 = smul.addr %s116, 16
          %s1784 = scalar_lea.hbm %s75, %s1783
          %s1786 = sshll.u32 %s1779, 4
          %s1787 = int_to_ptr.vmem [resolvable:$true] %s1786
          %1789 = dma.hbm_to_vmem [thread:$0]  %s1784, 16, %s1787, %s1777
        $region208: #{srm_forward.1} parent=151 // pred_fallthru
          _
        // Predicated region
        $region209: #{srm_forward.1} parent=151 // pred_check
          %p1790 = pneg %p1004
        $region210: #{srm_forward.1} parent=151 // pred_check_branch
          %1792 = sbr.rel (%p1790) target = $region212
        $region211: #{srm_forward.1} parent=151 // pred_region
          %s1793 = sand.u32 %s116, 1
          %s1794 = scalar_lea.sflag [#allocation4], %s1793
          %s1795 = sand.u32 %s994, 1
          %s1796 = smul.addr %s1795, 64
          %s1797 = scalar_lea.vmem [#allocation32], %s1796
          %s1799 = ssub.s32 1024, 1024
          %1800 = vsyncadd %s1794, %s1799
          %s1801 = smul.addr %s116, 16
          %s1802 = smul.addr %s1801, 64
          %s1803 = scalar_lea.hbm %s77, %s1802
          %s1804 = sshll.u32 %s1797, 4
          %s1805 = int_to_ptr.vmem [resolvable:$true] %s1804
          %1810 = dma.hbm_to_vmem [thread:$0]  %s1803, 1024, %s1805, %s1794, 64, 64, 4
        $region212: #{srm_forward.1} parent=151 // pred_fallthru
          _
        // Predicated region
        $region213: #{srm_forward.1} parent=151 // pred_check
          %p1811 = pneg %p1030
        $region214: #{srm_forward.1} parent=151 // pred_check_branch
          %1813 = sbr.rel (%p1811) target = $region216
        $region215: #{srm_forward.1} parent=151 // pred_region
          %s1814 = sand.u32 %s116, 1
          %s1815 = scalar_lea.sflag [#allocation4], %s1814
          %s1816 = sand.u32 %s1020, 1
          %s1817 = scalar_lea.vmem [#allocation33], %s1816
          %s1819 = ssub.s32 16, 16
          %1820 = vsyncadd %s1815, %s1819
          %s1821 = smul.addr %s116, 16
          %s1822 = scalar_lea.hbm %s79, %s1821
          %s1824 = sshll.u32 %s1817, 4
          %s1825 = int_to_ptr.vmem [resolvable:$true] %s1824
          %1827 = dma.hbm_to_vmem [thread:$0]  %s1822, 16, %s1825, %s1815
        $region216: #{srm_forward.1} parent=151 // pred_fallthru
          _
      $region152: #{srm_forward.1} parent=5 // pred_fallthru
        _
      %p1828 = scmp.le.s32.totalorder 1, %s116
      %p1829 = scmp.lt.s32.totalorder %s116, 3
      %p1830 = pnand %p1828, %p1829
      %p1831 = pneg %p1830
      // Predicated region
      $region217: #{srm_forward.1} parent=5 // pred_check
        _
      $region218: #{srm_forward.1} parent=5 // pred_check_branch
        %1833 = sbr.rel (%p1830) target = $region220
      $region219: #{srm_forward.1} parent=5 // pred_region
        %s1834 = ssub.s32 %s116, 1
        // Predicated region
        $region221: #{srm_forward.1} parent=219 // pred_check
          %p1835 = pneg %p305
        $region222: #{srm_forward.1} parent=219 // pred_check_branch
          %1837 = sbr.rel (%p1835) target = $region224
        $region223: #{srm_forward.1} parent=219 // pred_region
          %1838 = dma.done [#allocation4], 1024
        $region224: #{srm_forward.1} parent=219 // pred_fallthru
          _
        // Predicated region
        $region225: #{srm_forward.1} parent=219 // pred_check
          %p1839 = pneg %p326
        $region226: #{srm_forward.1} parent=219 // pred_check_branch
          %1841 = sbr.rel (%p1839) target = $region228
        $region227: #{srm_forward.1} parent=219 // pred_region
          %1842 = dma.done [#allocation6], 16
        $region228: #{srm_forward.1} parent=219 // pred_fallthru
          _
        // Predicated region
        $region229: #{srm_forward.1} parent=219 // pred_check
          %p1843 = pneg %p347
        $region230: #{srm_forward.1} parent=219 // pred_check_branch
          %1845 = sbr.rel (%p1843) target = $region232
        $region231: #{srm_forward.1} parent=219 // pred_region
          %1846 = dma.done [#allocation6], 1024
        $region232: #{srm_forward.1} parent=219 // pred_fallthru
          _
        // Predicated region
        $region233: #{srm_forward.1} parent=219 // pred_check
          %p1847 = pneg %p389
        $region234: #{srm_forward.1} parent=219 // pred_check_branch
          %1849 = sbr.rel (%p1847) target = $region236
        $region235: #{srm_forward.1} parent=219 // pred_region
          %1850 = dma.done [#allocation9], 1024
        $region236: #{srm_forward.1} parent=219 // pred_fallthru
          _
        // Predicated region
        $region237: #{srm_forward.1} parent=219 // pred_check
          %p1851 = pneg %p473
        $region238: #{srm_forward.1} parent=219 // pred_check_branch
          %1853 = sbr.rel (%p1851) target = $region240
        $region239: #{srm_forward.1} parent=219 // pred_region
          %1854 = dma.done [#allocation9], 1024
        $region240: #{srm_forward.1} parent=219 // pred_fallthru
          _
        // Predicated region
        $region241: #{srm_forward.1} parent=219 // pred_check
          %p1855 = pneg %p494
        $region242: #{srm_forward.1} parent=219 // pred_check_branch
          %1857 = sbr.rel (%p1855) target = $region244
        $region243: #{srm_forward.1} parent=219 // pred_region
          %1858 = dma.done [#allocation12], 16
        $region244: #{srm_forward.1} parent=219 // pred_fallthru
          _
        // Predicated region
        $region245: #{srm_forward.1} parent=219 // pred_check
          %p1859 = pneg %p515
        $region246: #{srm_forward.1} parent=219 // pred_check_branch
          %1861 = sbr.rel (%p1859) target = $region248
        $region247: #{srm_forward.1} parent=219 // pred_region
          %1862 = dma.done [#allocation12], 1024
        $region248: #{srm_forward.1} parent=219 // pred_fallthru
          _
        // Predicated region
        $region249: #{srm_forward.1} parent=219 // pred_check
          %p1863 = pneg %p536
        $region250: #{srm_forward.1} parent=219 // pred_check_branch
          %1865 = sbr.rel (%p1863) target = $region252
        $region251: #{srm_forward.1} parent=219 // pred_region
          %1866 = dma.done [#allocation15], 16
        $region252: #{srm_forward.1} parent=219 // pred_fallthru
          _
        // Predicated region
        $region253: #{srm_forward.1} parent=219 // pred_check
          %p1867 = pneg %p557
        $region254: #{srm_forward.1} parent=219 // pred_check_branch
          %1869 = sbr.rel (%p1867) target = $region256
        $region255: #{srm_forward.1} parent=219 // pred_region
          %1870 = dma.done [#allocation15], 1024
        $region256: #{srm_forward.1} parent=219 // pred_fallthru
          _
        // Predicated region
        $region257: #{srm_forward.1} parent=219 // pred_check
          %p1871 = pneg %p578
        $region258: #{srm_forward.1} parent=219 // pred_check_branch
          %1873 = sbr.rel (%p1871) target = $region260
        $region259: #{srm_forward.1} parent=219 // pred_region
          %1874 = dma.done [#allocation18], 16
        $region260: #{srm_forward.1} parent=219 // pred_fallthru
          _
        // Predicated region
        $region261: #{srm_forward.1} parent=219 // pred_check
          %p1875 = pneg %p599
        $region262: #{srm_forward.1} parent=219 // pred_check_branch
          %1877 = sbr.rel (%p1875) target = $region264
        $region263: #{srm_forward.1} parent=219 // pred_region
          %1878 = dma.done [#allocation18], 1024
        $region264: #{srm_forward.1} parent=219 // pred_fallthru
          _
        // Predicated region
        $region265: #{srm_forward.1} parent=219 // pred_check
          %p1879 = pneg %p620
        $region266: #{srm_forward.1} parent=219 // pred_check_branch
          %1881 = sbr.rel (%p1879) target = $region268
        $region267: #{srm_forward.1} parent=219 // pred_region
          %1882 = dma.done [#allocation21], 16
        $region268: #{srm_forward.1} parent=219 // pred_fallthru
          _
        %s1883 = sand.u32 %s121, 1
        %s1884 = scalar_lea.sflag [#allocation4], %s1883
        %s1885 = sand.u32 %s633, 1
        %s1886 = scalar_lea.vmem [#allocation22], %s1885
        // Predicated region
        $region269: #{srm_forward.1} parent=219 // pred_check
          %p1887 = pneg %p646
        $region270: #{srm_forward.1} parent=219 // pred_check_branch
          %1889 = sbr.rel (%p1887) target = $region272
        $region271: #{srm_forward.1} parent=219 // pred_region
          %1890 = dma.done %s1884, 16
        $region272: #{srm_forward.1} parent=219 // pred_fallthru
          _
        %s1891 = sand.u32 %s121, 1
        %s1892 = scalar_lea.sflag [#allocation4], %s1891
        %s1893 = sand.u32 %s659, 1
        %s1894 = scalar_lea.vmem [#allocation23], %s1893
        // Predicated region
        $region273: #{srm_forward.1} parent=219 // pred_check
          %p1895 = pneg %p672
        $region274: #{srm_forward.1} parent=219 // pred_check_branch
          %1897 = sbr.rel (%p1895) target = $region276
        $region275: #{srm_forward.1} parent=219 // pred_region
          %1898 = dma.done %s1892, 16
        $region276: #{srm_forward.1} parent=219 // pred_fallthru
          _
        %s1899 = sand.u32 %s121, 1
        %s1900 = scalar_lea.sflag [#allocation4], %s1899
        %s1901 = sand.u32 %s711, 1
        %s1902 = scalar_lea.vmem [#allocation24], %s1901
        // Predicated region
        $region277: #{srm_forward.1} parent=219 // pred_check
          %p1903 = pneg %p724
        $region278: #{srm_forward.1} parent=219 // pred_check_branch
          %1905 = sbr.rel (%p1903) target = $region280
        $region279: #{srm_forward.1} parent=219 // pred_region
          %1906 = dma.done %s1900, 16
        $region280: #{srm_forward.1} parent=219 // pred_fallthru
          _
        %s1907 = sand.u32 %s121, 1
        %s1908 = scalar_lea.sflag [#allocation4], %s1907
        %s1909 = sand.u32 %s763, 1
        %s1910 = scalar_lea.vmem [#allocation25], %s1909
        // Predicated region
        $region281: #{srm_forward.1} parent=219 // pred_check
          %p1911 = pneg %p776
        $region282: #{srm_forward.1} parent=219 // pred_check_branch
          %1913 = sbr.rel (%p1911) target = $region284
        $region283: #{srm_forward.1} parent=219 // pred_region
          %1914 = dma.done %s1908, 16
        $region284: #{srm_forward.1} parent=219 // pred_fallthru
          _
        %s1915 = sand.u32 %s121, 1
        %s1916 = scalar_lea.sflag [#allocation4], %s1915
        %s1917 = sand.u32 %s815, 1
        %s1918 = scalar_lea.vmem [#allocation26], %s1917
        // Predicated region
        $region285: #{srm_forward.1} parent=219 // pred_check
          %p1919 = pneg %p828
        $region286: #{srm_forward.1} parent=219 // pred_check_branch
          %1921 = sbr.rel (%p1919) target = $region288
        $region287: #{srm_forward.1} parent=219 // pred_region
          %1922 = dma.done %s1916, 16
        $region288: #{srm_forward.1} parent=219 // pred_fallthru
          _
        %s1923 = sand.u32 %s121, 1
        %s1924 = scalar_lea.sflag [#allocation4], %s1923
        %s1925 = sand.u32 %s867, 1
        %s1926 = scalar_lea.vmem [#allocation27], %s1925
        // Predicated region
        $region289: #{srm_forward.1} parent=219 // pred_check
          %p1927 = pneg %p880
        $region290: #{srm_forward.1} parent=219 // pred_check_branch
          %1929 = sbr.rel (%p1927) target = $region292
        $region291: #{srm_forward.1} parent=219 // pred_region
          %1930 = dma.done %s1924, 16
        $region292: #{srm_forward.1} parent=219 // pred_fallthru
          _
        %s1931 = sand.u32 %s121, 1
        %s1932 = scalar_lea.sflag [#allocation4], %s1931
        %s1933 = sand.u32 %s893, 1
        %s1934 = scalar_lea.vmem [#allocation28], %s1933
        // Predicated region
        $region293: #{srm_forward.1} parent=219 // pred_check
          %p1935 = pneg %p906
        $region294: #{srm_forward.1} parent=219 // pred_check_branch
          %1937 = sbr.rel (%p1935) target = $region296
        $region295: #{srm_forward.1} parent=219 // pred_region
          %1938 = dma.done %s1932, 16
        $region296: #{srm_forward.1} parent=219 // pred_fallthru
          _
        %s1939 = sand.u32 %s121, 1
        %s1940 = scalar_lea.sflag [#allocation4], %s1939
        %s1941 = sand.u32 %s919, 1
        %s1942 = scalar_lea.vmem [#allocation29], %s1941
        // Predicated region
        $region297: #{srm_forward.1} parent=219 // pred_check
          %p1943 = pneg %p932
        $region298: #{srm_forward.1} parent=219 // pred_check_branch
          %1945 = sbr.rel (%p1943) target = $region300
        $region299: #{srm_forward.1} parent=219 // pred_region
          %1946 = dma.done %s1940, 16
        $region300: #{srm_forward.1} parent=219 // pred_fallthru
          _
        %s1947 = sand.u32 %s121, 1
        %s1948 = scalar_lea.sflag [#allocation4], %s1947
        %s1949 = sand.u32 %s945, 1
        %s1950 = smul.addr %s1949, 64
        %s1951 = scalar_lea.vmem [#allocation30], %s1950
        // Predicated region
        $region301: #{srm_forward.1} parent=219 // pred_check
          %p1952 = pneg %p958
        $region302: #{srm_forward.1} parent=219 // pred_check_branch
          %1954 = sbr.rel (%p1952) target = $region304
        $region303: #{srm_forward.1} parent=219 // pred_region
          %1955 = dma.done %s1948, 1024
        $region304: #{srm_forward.1} parent=219 // pred_fallthru
          _
        %s1956 = sand.u32 %s121, 1
        %s1957 = scalar_lea.sflag [#allocation4], %s1956
        %s1958 = sand.u32 %s971, 1
        %s1959 = scalar_lea.vmem [#allocation31], %s1958
        // Predicated region
        $region305: #{srm_forward.1} parent=219 // pred_check
          %p1960 = pneg %p984
        $region306: #{srm_forward.1} parent=219 // pred_check_branch
          %1962 = sbr.rel (%p1960) target = $region308
        $region307: #{srm_forward.1} parent=219 // pred_region
          %1963 = dma.done %s1957, 16
        $region308: #{srm_forward.1} parent=219 // pred_fallthru
          _
        %s1964 = sand.u32 %s121, 1
        %s1965 = scalar_lea.sflag [#allocation4], %s1964
        %s1966 = sand.u32 %s997, 1
        %s1967 = smul.addr %s1966, 64
        %s1968 = scalar_lea.vmem [#allocation32], %s1967
        // Predicated region
        $region309: #{srm_forward.1} parent=219 // pred_check
          %p1969 = pneg %p1010
        $region310: #{srm_forward.1} parent=219 // pred_check_branch
          %1971 = sbr.rel (%p1969) target = $region312
        $region311: #{srm_forward.1} parent=219 // pred_region
          %1972 = dma.done %s1965, 1024
        $region312: #{srm_forward.1} parent=219 // pred_fallthru
          _
        %s1973 = sand.u32 %s121, 1
        %s1974 = scalar_lea.sflag [#allocation4], %s1973
        %s1975 = sand.u32 %s1023, 1
        %s1976 = scalar_lea.vmem [#allocation33], %s1975
        // Predicated region
        $region313: #{srm_forward.1} parent=219 // pred_check
          %p1977 = pneg %p1036
        $region314: #{srm_forward.1} parent=219 // pred_check_branch
          %1979 = sbr.rel (%p1977) target = $region316
        $region315: #{srm_forward.1} parent=219 // pred_region
          %1980 = dma.done %s1974, 16
        $region316: #{srm_forward.1} parent=219 // pred_fallthru
          _
        // Predicated region
        $region317: #{srm_forward.1} parent=219 // pred_check
          %p1981 = pneg %p1057
        $region318: #{srm_forward.1} parent=219 // pred_check_branch
          %1983 = sbr.rel (%p1981) target = $region320
        $region319: #{srm_forward.1} parent=219 // pred_region
          %1984 = dma.done [#allocation6], 1024
        $region320: #{srm_forward.1} parent=219 // pred_fallthru
          _
        // Predicated region
        $region321: #{srm_forward.1} parent=219 // pred_check
          %p1985 = pneg %p1078
        $region322: #{srm_forward.1} parent=219 // pred_check_branch
          %1987 = sbr.rel (%p1985) target = $region324
        $region323: #{srm_forward.1} parent=219 // pred_region
          %1988 = dma.done [#allocation9], 16
        $region324: #{srm_forward.1} parent=219 // pred_fallthru
          _
        // Predicated region
        $region325: #{srm_forward.1} parent=219 // pred_check
          %p1989 = pneg %p1099
        $region326: #{srm_forward.1} parent=219 // pred_check_branch
          %1991 = sbr.rel (%p1989) target = $region328
        $region327: #{srm_forward.1} parent=219 // pred_region
          %1992 = dma.done [#allocation12], 16
        $region328: #{srm_forward.1} parent=219 // pred_fallthru
          _
        // Predicated region
        $region329: #{srm_forward.1} parent=219 // pred_check
          %p1993 = pneg %p1120
        $region330: #{srm_forward.1} parent=219 // pred_check_branch
          %1995 = sbr.rel (%p1993) target = $region332
        $region331: #{srm_forward.1} parent=219 // pred_region
          %1996 = dma.done [#allocation15], 16
        $region332: #{srm_forward.1} parent=219 // pred_fallthru
          _
        // Predicated region
        $region333: #{srm_forward.1} parent=219 // pred_check
          %p1997 = pneg %p1141
        $region334: #{srm_forward.1} parent=219 // pred_check_branch
          %1999 = sbr.rel (%p1997) target = $region336
        $region335: #{srm_forward.1} parent=219 // pred_region
          %2000 = dma.done [#allocation18], 1024
        $region336: #{srm_forward.1} parent=219 // pred_fallthru
          _
        // Predicated region
        $region337: #{srm_forward.1} parent=219 // pred_check
          %p2001 = pneg %p1162
        $region338: #{srm_forward.1} parent=219 // pred_check_branch
          %2003 = sbr.rel (%p2001) target = $region340
        $region339: #{srm_forward.1} parent=219 // pred_region
          %2004 = dma.done [#allocation21], 16
        $region340: #{srm_forward.1} parent=219 // pred_fallthru
          _
        // Predicated region
        $region341: #{srm_forward.1} parent=219 // pred_check
          %p2005 = pneg %p1183
        $region342: #{srm_forward.1} parent=219 // pred_check_branch
          %2007 = sbr.rel (%p2005) target = $region344
        $region343: #{srm_forward.1} parent=219 // pred_region
          %2008 = dma.done [#allocation41], 16
        $region344: #{srm_forward.1} parent=219 // pred_fallthru
          _
        // Predicated region
        $region345: #{srm_forward.1} parent=219 // pred_check
          %p2009 = pneg %p1204
        $region346: #{srm_forward.1} parent=219 // pred_check_branch
          %2011 = sbr.rel (%p2009) target = $region348
        $region347: #{srm_forward.1} parent=219 // pred_region
          %2012 = dma.done [#allocation41], 16
        $region348: #{srm_forward.1} parent=219 // pred_fallthru
          _
        // Predicated region
        $region349: #{srm_forward.1} parent=219 // pred_check
          %p2013 = pneg %p1225
        $region350: #{srm_forward.1} parent=219 // pred_check_branch
          %2015 = sbr.rel (%p2013) target = $region352
        $region351: #{srm_forward.1} parent=219 // pred_region
          %2016 = dma.done [#allocation44], 1024
        $region352: #{srm_forward.1} parent=219 // pred_fallthru
          _
        // Predicated region
        $region353: #{srm_forward.1} parent=219 // pred_check
          %p2017 = pneg %p1246
        $region354: #{srm_forward.1} parent=219 // pred_check_branch
          %2019 = sbr.rel (%p2017) target = $region356
        $region355: #{srm_forward.1} parent=219 // pred_region
          %2020 = dma.done [#allocation44], 16
        $region356: #{srm_forward.1} parent=219 // pred_fallthru
          _
        %p2021 = pneg %p137
        %p2022 = pneg %p134
        %p2023 = pneg %p158
        %p2024 = pneg %p155
        %p2025 = pneg %p179
        %p2026 = pneg %p176
        %p2027 = pneg %p200
        %p2028 = pneg %p197
        %p2029 = pneg %p221
        %p2030 = pneg %p218
        %p2031 = pneg %p242
        %p2032 = pneg %p239
        %p2033 = pneg %p263
        %p2034 = pneg %p260
        %p2035 = pneg %p284
        %p2036 = pneg %p281
        %p2037 = pneg %p305
        %p2038 = pneg %p302
        %p2039 = pneg %p326
        %p2040 = pneg %p323
        %p2041 = pneg %p347
        %p2042 = pneg %p344
        %p2043 = pneg %p368
        %p2044 = pneg %p365
        %p2045 = pneg %p389
        %p2046 = pneg %p386
        %p2047 = pneg %p410
        %p2048 = pneg %p407
        %p2049 = pneg %p431
        %p2050 = pneg %p428
        %p2051 = pneg %p452
        %p2052 = pneg %p449
        %p2053 = pneg %p473
        %p2054 = pneg %p470
        %p2055 = pneg %p494
        %p2056 = pneg %p491
        %p2057 = pneg %p515
        %p2058 = pneg %p512
        %p2059 = pneg %p536
        %p2060 = pneg %p533
        %p2061 = pneg %p557
        %p2062 = pneg %p554
        %p2063 = pneg %p578
        %p2064 = pneg %p575
        %p2065 = pneg %p599
        %p2066 = pneg %p596
        %p2067 = pneg %p620
        %p2068 = pneg %p617
        %s2069 = sand.u32 %s121, 1
        %s2070 = scalar_lea.sflag [#allocation4], %s2069
        %s2071 = sand.u32 %s633, 1
        %s2072 = scalar_lea.vmem [#allocation22], %s2071
        %p2073 = pneg %p646
        %p2074 = pneg %p643
        %s2075 = sand.u32 %s121, 1
        %s2076 = scalar_lea.sflag [#allocation4], %s2075
        %s2077 = sand.u32 %s659, 1
        %s2078 = scalar_lea.vmem [#allocation23], %s2077
        %p2079 = pneg %p672
        %p2080 = pneg %p669
        %p2081 = scmp.lt.s32.totalorder %s121, 1
        %s2082 = scalar_select %p2081, %s121, 1
        %s2083 = smul.addr %s2082, 16
        %s2084 = smul.addr %s2083, 4
        %s2085 = scalar_lea.vmem %s53, %s2084
        %p2086 = pneg %p698
        %p2087 = pneg %p695
        %s2088 = sand.u32 %s121, 1
        %s2089 = scalar_lea.sflag [#allocation4], %s2088
        %s2090 = sand.u32 %s711, 1
        %s2091 = scalar_lea.vmem [#allocation24], %s2090
        %p2092 = pneg %p724
        %p2093 = pneg %p721
        %p2094 = scmp.lt.s32.totalorder %s121, 1
        %s2095 = scalar_select %p2094, %s121, 1
        %s2096 = smul.addr %s2095, 16
        %s2097 = smul.addr %s2096, 4
        %s2098 = scalar_lea.vmem %s57, %s2097
        %p2099 = pneg %p750
        %p2100 = pneg %p747
        %s2101 = sand.u32 %s121, 1
        %s2102 = scalar_lea.sflag [#allocation4], %s2101
        %s2103 = sand.u32 %s763, 1
        %s2104 = scalar_lea.vmem [#allocation25], %s2103
        %p2105 = pneg %p776
        %p2106 = pneg %p773
        %p2107 = scmp.lt.s32.totalorder %s121, 1
        %s2108 = scalar_select %p2107, %s121, 1
        %s2109 = smul.addr %s2108, 16
        %s2110 = smul.addr %s2109, 4
        %s2111 = scalar_lea.vmem %s61, %s2110
        %p2112 = pneg %p802
        %p2113 = pneg %p799
        %s2114 = sand.u32 %s121, 1
        %s2115 = scalar_lea.sflag [#allocation4], %s2114
        %s2116 = sand.u32 %s815, 1
        %s2117 = scalar_lea.vmem [#allocation26], %s2116
        %p2118 = pneg %p828
        %p2119 = pneg %p825
        %p2120 = scmp.lt.s32.totalorder %s121, 1
        %s2121 = scalar_select %p2120, %s121, 1
        %s2122 = smul.addr %s2121, 16
        %s2123 = smul.addr %s2122, 4
        %s2124 = scalar_lea.vmem %s65, %s2123
        %p2125 = pneg %p854
        %p2126 = pneg %p851
        %s2127 = sand.u32 %s121, 1
        %s2128 = scalar_lea.sflag [#allocation4], %s2127
        %s2129 = sand.u32 %s867, 1
        %s2130 = scalar_lea.vmem [#allocation27], %s2129
        %p2131 = pneg %p880
        %p2132 = pneg %p877
        %s2133 = sand.u32 %s121, 1
        %s2134 = scalar_lea.sflag [#allocation4], %s2133
        %s2135 = sand.u32 %s893, 1
        %s2136 = scalar_lea.vmem [#allocation28], %s2135
        %p2137 = pneg %p906
        %p2138 = pneg %p903
        %s2139 = sand.u32 %s121, 1
        %s2140 = scalar_lea.sflag [#allocation4], %s2139
        %s2141 = sand.u32 %s919, 1
        %s2142 = scalar_lea.vmem [#allocation29], %s2141
        %p2143 = pneg %p932
        %p2144 = pneg %p929
        %s2145 = sand.u32 %s121, 1
        %s2146 = scalar_lea.sflag [#allocation4], %s2145
        %s2147 = sand.u32 %s945, 1
        %s2148 = smul.addr %s2147, 64
        %s2149 = scalar_lea.vmem [#allocation30], %s2148
        %p2150 = pneg %p958
        %p2151 = pneg %p955
        %s2152 = sand.u32 %s121, 1
        %s2153 = scalar_lea.sflag [#allocation4], %s2152
        %s2154 = sand.u32 %s971, 1
        %s2155 = scalar_lea.vmem [#allocation31], %s2154
        %p2156 = pneg %p984
        %p2157 = pneg %p981
        %s2158 = sand.u32 %s121, 1
        %s2159 = scalar_lea.sflag [#allocation4], %s2158
        %s2160 = sand.u32 %s997, 1
        %s2161 = smul.addr %s2160, 64
        %s2162 = scalar_lea.vmem [#allocation32], %s2161
        %p2163 = pneg %p1010
        %p2164 = pneg %p1007
        %s2165 = sand.u32 %s121, 1
        %s2166 = scalar_lea.sflag [#allocation4], %s2165
        %s2167 = sand.u32 %s1023, 1
        %s2168 = scalar_lea.vmem [#allocation33], %s2167
        %p2169 = pneg %p1036
        %p2170 = pneg %p1033
        %p2171 = pneg %p1057
        %p2172 = pneg %p1054
        %p2173 = pneg %p1078
        %p2174 = pneg %p1075
        %p2175 = pneg %p1099
        %p2176 = pneg %p1096
        %p2177 = pneg %p1120
        %p2178 = pneg %p1117
        %p2179 = pneg %p1141
        %p2180 = pneg %p1138
        %p2181 = pneg %p1162
        %p2182 = pneg %p1159
        %p2183 = pneg %p1183
        %p2184 = pneg %p1180
        %p2185 = pneg %p1204
        %p2186 = pneg %p1201
        %p2187 = pneg %p1225
        %p2188 = pneg %p1222
        %p2189 = pneg %p1246
        %p2190 = pneg %p1243
        %p2191 = pneg %p1267
        %p2192 = pneg %p1264
        %p2193 = scmp.lt.s32.totalorder %s121, 1
        %s2194 = scalar_select %p2193, %s121, 1
        %s2195 = smul.addr %s2194, 16
        %s2196 = smul.addr %s2195, 4
        %s2197 = scalar_lea.vmem %s53, %s2196
        %p2198 = scmp.lt.s32.totalorder %s121, 1
        %s2199 = scalar_select %p2198, %s121, 1
        %s2200 = smul.addr %s2199, 16
        %s2201 = smul.addr %s2200, 4
        %s2202 = scalar_lea.vmem %s57, %s2201
        %p2203 = scmp.lt.s32.totalorder %s121, 1
        %s2204 = scalar_select %p2203, %s121, 1
        %s2205 = smul.addr %s2204, 16
        %s2206 = smul.addr %s2205, 4
        %s2207 = scalar_lea.vmem %s61, %s2206
        %p2208 = scmp.lt.s32.totalorder %s121, 1
        %s2209 = scalar_select %p2208, %s121, 1
        %s2210 = smul.addr %s2209, 16
        %s2211 = smul.addr %s2210, 4
        %s2212 = scalar_lea.vmem %s65, %s2211
        %p2214 = scmp.eq.s32.totalorder %s121, 0
        // Predicated region
        $region357: #{srm_forward.1} parent=219 // pred_check
          %p2215 = pneg %p2214
        $region358: #{srm_forward.1} parent=219 // pred_check_branch
          %2217 = sbr.rel (%p2215) target = $region360
        $region359: #{srm_forward.1} parent=219 // pred_region
          %2218 = vst [vmem:[#allocation2] sm:$0xff] 0.0
          %2219 = vst [vmem:[#allocation2 + $0x8] sm:$0xff] 0.0
          %2220 = vst [vmem:[#allocation2 + $0x10] sm:$0xff] 0.0
          %2221 = vst [vmem:[#allocation2 + $0x18] sm:$0xff] 0.0
          %v2222 = vld [vmem:[%s3] sm:$0xf]
          %v2223 = vld [vmem:[#allocation7] sm:$0xf]
          %v2224 = vld [vmem:[#allocation7 + $0x4] sm:$0xf]
          %v2225 = vld [vmem:[#allocation7 + $0x8] sm:$0xf]
          %v2226 = vld [vmem:[#allocation7 + $0xc] sm:$0xf]
          %v2227 = vld [vmem:[#allocation7 + $0x10] sm:$0xf]
          %v2228 = vld [vmem:[#allocation7 + $0x14] sm:$0xf]
          %v2229 = vld [vmem:[#allocation7 + $0x18] sm:$0xf]
          %v2230 = vld [vmem:[#allocation7 + $0x1c] sm:$0xf]
          %v2231 = vld [vmem:[#allocation7 + $0x20] sm:$0xf]
          %v2232 = vld [vmem:[#allocation7 + $0x24] sm:$0xf]
          %v2233 = vld [vmem:[#allocation7 + $0x28] sm:$0xf]
          %v2234 = vld [vmem:[#allocation7 + $0x2c] sm:$0xf]
          %v2235 = vld [vmem:[#allocation7 + $0x30] sm:$0xf]
          %v2236 = vld [vmem:[#allocation7 + $0x34] sm:$0xf]
          %v2237 = vld [vmem:[#allocation7 + $0x38] sm:$0xf]
          %v2238 = vld [vmem:[#allocation7 + $0x3c] sm:$0xf]
          %v2239 = vld [vmem:[%s23] sm:$0x1]
          %v2241 = vlaneseq
          %v2242 = vshrl.u32 %v2241, 7
          %v2243 = vsub.s32 0, %v2242
          %v2244 = vrot.slane %v2239, %v2243
          %v2262 = vunpack.c.l.b16 %v2223
          %v2263 = vunpack.c.l.b16 %v2224
          %v2264 = vunpack.c.l.b16 %v2225
          %v2265 = vunpack.c.l.b16 %v2226
          %v2266 = vunpack.c.l.b16 %v2227
          %v2267 = vunpack.c.l.b16 %v2228
          %v2268 = vunpack.c.l.b16 %v2229
          %v2269 = vunpack.c.l.b16 %v2230
          %v2270 = vunpack.c.l.b16 %v2231
          %v2271 = vunpack.c.l.b16 %v2232
          %v2272 = vunpack.c.l.b16 %v2233
          %v2273 = vunpack.c.l.b16 %v2234
          %v2274 = vunpack.c.l.b16 %v2235
          %v2275 = vunpack.c.l.b16 %v2236
          %v2276 = vunpack.c.l.b16 %v2237
          %v2277 = vunpack.c.l.b16 %v2238
          %v2278 = vpack.c.b16 %v2263, %v2262
          %v2279 = vpack.c.b16 %v2265, %v2264
          %v2280 = vpack.c.b16 %v2267, %v2266
          %v2281 = vpack.c.b16 %v2269, %v2268
          %v2282 = vpack.c.b16 %v2271, %v2270
          %v2283 = vpack.c.b16 %v2273, %v2272
          %v2284 = vpack.c.b16 %v2275, %v2274
          %v2285 = vpack.c.b16 %v2277, %v2276
          %2294 = vmatprep.subr.bf16.mxu0 0
          %2295 = vmatpush1.bf16.msra.mxu0 %v2278
          %2296 = vmatprep.subr.bf16.mxu0 0
          %2297 = vmatpush1.bf16.msra.mxu0 %v2279
          %2298 = vmatprep.subr.bf16.mxu0 0
          %2299 = vmatpush1.bf16.msra.mxu0 %v2280
          %2300 = vmatprep.subr.bf16.mxu0 0
          %2301 = vmatpush1.bf16.msra.mxu0 %v2281
          %2302 = vmatprep.subr.bf16.mxu0 0
          %2303 = vmatpush1.bf16.msra.mxu0 %v2282
          %2304 = vmatprep.subr.bf16.mxu0 0
          %2305 = vmatpush1.bf16.msra.mxu0 %v2283
          %2306 = vmatprep.subr.bf16.mxu0 0
          %2307 = vmatpush1.bf16.msra.mxu0 %v2284
          %2308 = vmatprep.subr.bf16.mxu0 0
          %2309 = vmatpush1.bf16.msra.mxu0 %v2285
          %2310 = vmatprep.subr.bf16.mxu0 0
          %2311 = vmatpush1.bf16.msra.mxu0 0
          %2312 = vmatprep.subr.bf16.mxu0 0
          %2313 = vmatpush1.bf16.msra.mxu0 0
          %2314 = vmatprep.subr.bf16.mxu0 0
          %2315 = vmatpush1.bf16.msra.mxu0 0
          %2316 = vmatprep.subr.bf16.mxu0 0
          %2317 = vmatpush1.bf16.msra.mxu0 0
          %2318 = vmatprep.subr.bf16.mxu0 0
          %2319 = vmatpush1.bf16.msra.mxu0 0
          %2320 = vmatprep.subr.bf16.mxu0 0
          %2321 = vmatpush1.bf16.msra.mxu0 0
          %2322 = vmatprep.subr.bf16.mxu0 0
          %2323 = vmatpush1.bf16.msra.mxu0 0
          %2324 = vmatprep.subr.bf16.mxu0 0
          %2325 = vmatpush1.bf16.msra.mxu0 0
          %2326 = vmatprep.mubr.bf16.mxu0 0
          %2327 = vmatmul.mubr.bf16.gmra.mrb[0].mxu0 %v2222
          %v2328 = vpop.f32.mrb[0].mxu0
          %v2329 = vadd.f32 %v2244, %v2328
          %v2330 = vpop.f32.mrb[0].mxu0
          %v2331 = vpop.f32.mrb[0].mxu0
          %v2332 = vpop.f32.mrb[0].mxu0
          %2333 = vdwg.mxu0
          %v2334 = vmul.f32 %v2329, 0.5
          %v2335 = vmul.f32 %v2329, 0.70710677
          %v2336 = verf.f32.pop %v2335
          %v2337 = vadd.f32 %v2336, 1.0
          %v2338 = vmul.f32 %v2334, %v2337
          %v2339 = vld [vmem:[#allocation8] sm:$0xf]
          %v2340 = vld [vmem:[#allocation8 + $0x4] sm:$0xf]
          %v2341 = vld [vmem:[#allocation8 + $0x8] sm:$0xf]
          %v2342 = vld [vmem:[#allocation8 + $0xc] sm:$0xf]
          %v2343 = vld [vmem:[#allocation8 + $0x10] sm:$0xf]
          %v2344 = vld [vmem:[#allocation8 + $0x14] sm:$0xf]
          %v2345 = vld [vmem:[#allocation8 + $0x18] sm:$0xf]
          %v2346 = vld [vmem:[#allocation8 + $0x1c] sm:$0xf]
          %v2347 = vld [vmem:[#allocation8 + $0x20] sm:$0xf]
          %v2348 = vld [vmem:[#allocation8 + $0x24] sm:$0xf]
          %v2349 = vld [vmem:[#allocation8 + $0x28] sm:$0xf]
          %v2350 = vld [vmem:[#allocation8 + $0x2c] sm:$0xf]
          %v2351 = vld [vmem:[#allocation8 + $0x30] sm:$0xf]
          %v2352 = vld [vmem:[#allocation8 + $0x34] sm:$0xf]
          %v2353 = vld [vmem:[#allocation8 + $0x38] sm:$0xf]
          %v2354 = vld [vmem:[#allocation8 + $0x3c] sm:$0xf]
          %v2355 = vld [vmem:[%s27] sm:$0x1]
          %v2356 = vpack.c.bf16 %v2338, %v2338
          %v2358 = vlaneseq
          %v2359 = vshrl.u32 %v2358, 7
          %v2360 = vsub.s32 0, %v2359
          %v2361 = vrot.slane %v2355, %v2360
          %v2379 = vunpack.c.l.b16 %v2339
          %v2380 = vunpack.c.l.b16 %v2340
          %v2381 = vunpack.c.l.b16 %v2341
          %v2382 = vunpack.c.l.b16 %v2342
          %v2383 = vunpack.c.l.b16 %v2343
          %v2384 = vunpack.c.l.b16 %v2344
          %v2385 = vunpack.c.l.b16 %v2345
          %v2386 = vunpack.c.l.b16 %v2346
          %v2387 = vunpack.c.l.b16 %v2347
          %v2388 = vunpack.c.l.b16 %v2348
          %v2389 = vunpack.c.l.b16 %v2349
          %v2390 = vunpack.c.l.b16 %v2350
          %v2391 = vunpack.c.l.b16 %v2351
          %v2392 = vunpack.c.l.b16 %v2352
          %v2393 = vunpack.c.l.b16 %v2353
          %v2394 = vunpack.c.l.b16 %v2354
          %v2395 = vpack.c.b16 %v2380, %v2379
          %v2396 = vpack.c.b16 %v2382, %v2381
          %v2397 = vpack.c.b16 %v2384, %v2383
          %v2398 = vpack.c.b16 %v2386, %v2385
          %v2399 = vpack.c.b16 %v2388, %v2387
          %v2400 = vpack.c.b16 %v2390, %v2389
          %v2401 = vpack.c.b16 %v2392, %v2391
          %v2402 = vpack.c.b16 %v2394, %v2393
          %2411 = vmatprep.subr.bf16.mxu0 0
          %2412 = vmatpush1.bf16.msra.mxu0 %v2395
          %2413 = vmatprep.subr.bf16.mxu0 0
          %2414 = vmatpush1.bf16.msra.mxu0 %v2396
          %2415 = vmatprep.subr.bf16.mxu0 0
          %2416 = vmatpush1.bf16.msra.mxu0 %v2397
          %2417 = vmatprep.subr.bf16.mxu0 0
          %2418 = vmatpush1.bf16.msra.mxu0 %v2398
          %2419 = vmatprep.subr.bf16.mxu0 0
          %2420 = vmatpush1.bf16.msra.mxu0 %v2399
          %2421 = vmatprep.subr.bf16.mxu0 0
          %2422 = vmatpush1.bf16.msra.mxu0 %v2400
          %2423 = vmatprep.subr.bf16.mxu0 0
          %2424 = vmatpush1.bf16.msra.mxu0 %v2401
          %2425 = vmatprep.subr.bf16.mxu0 0
          %2426 = vmatpush1.bf16.msra.mxu0 %v2402
          %2427 = vmatprep.subr.bf16.mxu0 0
          %2428 = vmatpush1.bf16.msra.mxu0 0
          %2429 = vmatprep.subr.bf16.mxu0 0
          %2430 = vmatpush1.bf16.msra.mxu0 0
          %2431 = vmatprep.subr.bf16.mxu0 0
          %2432 = vmatpush1.bf16.msra.mxu0 0
          %2433 = vmatprep.subr.bf16.mxu0 0
          %2434 = vmatpush1.bf16.msra.mxu0 0
          %2435 = vmatprep.subr.bf16.mxu0 0
          %2436 = vmatpush1.bf16.msra.mxu0 0
          %2437 = vmatprep.subr.bf16.mxu0 0
          %2438 = vmatpush1.bf16.msra.mxu0 0
          %2439 = vmatprep.subr.bf16.mxu0 0
          %2440 = vmatpush1.bf16.msra.mxu0 0
          %2441 = vmatprep.subr.bf16.mxu0 0
          %2442 = vmatpush1.bf16.msra.mxu0 0
          %2443 = vmatprep.mubr.bf16.mxu0 0
          %2444 = vmatmul.mubr.bf16.gmra.mrb[0].mxu0 %v2356
          %v2445 = vpop.f32.mrb[0].mxu0
          %v2446 = vadd.f32 %v2361, %v2445
          %v2447 = vpop.f32.mrb[0].mxu0
          %v2448 = vpop.f32.mrb[0].mxu0
          %v2449 = vpop.f32.mrb[0].mxu0
          %2450 = vdwg.mxu0
          %v2451 = vld [vmem:[%s29] sm:$0x1]
          %v2452 = vld [vmem:[%s31] sm:$0x1]
          %2453 = vadd.xlane.f32.xlu0 %v2446
          %v2454 = vpop.xlane.xlu0 %2453
          %v2455 = vmul.f32 %v2454, 0.03125
          %v2456 = vmul.f32 %v2446, %v2446
          %2457 = vadd.xlane.f32.xlu0 %v2456
          %v2458 = vpop.xlane.xlu0 %2457
          %v2459 = vmul.f32 %v2458, 0.03125
          %v2460 = vmul.f32 %v2455, %v2455
          %v2461 = vsub.f32 %v2459, %v2460
          %v2462 = vmax.f32 %v2461, 0.0
          %v2463 = vsub.f32 %v2446, %v2455
          %v2464 = vadd.f32 %v2462, 1e-05
          %v2465 = vrsqrt.pop %v2464
          %v2466 = vmul.f32 %v2463, %v2465
          %v2468 = vlaneseq
          %v2469 = vshrl.u32 %v2468, 7
          %v2470 = vsub.s32 0, %v2469
          %v2471 = vrot.slane %v2451, %v2470
          %v2473 = vmul.f32 %v2466, %v2471
          %v2475 = vlaneseq
          %v2476 = vshrl.u32 %v2475, 7
          %v2477 = vsub.s32 0, %v2476
          %v2478 = vrot.slane %v2452, %v2477
          %v2480 = vadd.f32 %v2473, %v2478
          %v2481 = vld [vmem:[%s7] sm:$0xf]
          %v2482 = vld [vmem:[%s7 + $0x4] sm:$0xf]
          %v2483 = vld [vmem:[#allocation10] sm:$0xf]
          %v2484 = vld [vmem:[#allocation10 + $0x4] sm:$0xf]
          %v2485 = vld [vmem:[#allocation10 + $0x8] sm:$0xf]
          %v2486 = vld [vmem:[#allocation10 + $0xc] sm:$0xf]
          %v2487 = vld [vmem:[#allocation10 + $0x10] sm:$0xf]
          %v2488 = vld [vmem:[#allocation10 + $0x14] sm:$0xf]
          %v2489 = vld [vmem:[#allocation10 + $0x18] sm:$0xf]
          %v2490 = vld [vmem:[#allocation10 + $0x1c] sm:$0xf]
          %v2491 = vld [vmem:[#allocation10 + $0x20] sm:$0xf]
          %v2492 = vld [vmem:[#allocation10 + $0x24] sm:$0xf]
          %v2493 = vld [vmem:[#allocation10 + $0x28] sm:$0xf]
          %v2494 = vld [vmem:[#allocation10 + $0x2c] sm:$0xf]
          %v2495 = vld [vmem:[#allocation10 + $0x30] sm:$0xf]
          %v2496 = vld [vmem:[#allocation10 + $0x34] sm:$0xf]
          %v2497 = vld [vmem:[#allocation10 + $0x38] sm:$0xf]
          %v2498 = vld [vmem:[#allocation10 + $0x3c] sm:$0xf]
          %v2499 = vld [vmem:[#allocation11] sm:$0x1]
          %v2501 = vlaneseq
          %v2502 = vshrl.u32 %v2501, 7
          %v2503 = vsub.s32 0, %v2502
          %v2504 = vrot.slane %v2499, %v2503
          %v2508 = vunpack.c.l.b16 %v2481
          %v2509 = vunpack.c.l.b16 %v2482
          %v2510 = vpack.c.b16 %v2509, %v2508
          %v2528 = vunpack.c.l.b16 %v2483
          %v2529 = vunpack.c.l.b16 %v2484
          %v2530 = vunpack.c.l.b16 %v2485
          %v2531 = vunpack.c.l.b16 %v2486
          %v2532 = vunpack.c.l.b16 %v2487
          %v2533 = vunpack.c.l.b16 %v2488
          %v2534 = vunpack.c.l.b16 %v2489
          %v2535 = vunpack.c.l.b16 %v2490
          %v2536 = vunpack.c.l.b16 %v2491
          %v2537 = vunpack.c.l.b16 %v2492
          %v2538 = vunpack.c.l.b16 %v2493
          %v2539 = vunpack.c.l.b16 %v2494
          %v2540 = vunpack.c.l.b16 %v2495
          %v2541 = vunpack.c.l.b16 %v2496
          %v2542 = vunpack.c.l.b16 %v2497
          %v2543 = vunpack.c.l.b16 %v2498
          %v2544 = vpack.c.b16 %v2529, %v2528
          %v2545 = vpack.c.b16 %v2531, %v2530
          %v2546 = vpack.c.b16 %v2533, %v2532
          %v2547 = vpack.c.b16 %v2535, %v2534
          %v2548 = vpack.c.b16 %v2537, %v2536
          %v2549 = vpack.c.b16 %v2539, %v2538
          %v2550 = vpack.c.b16 %v2541, %v2540
          %v2551 = vpack.c.b16 %v2543, %v2542
          %2560 = vmatprep.subr.bf16.mxu0 0
          %2561 = vmatpush1.bf16.msra.mxu0 %v2544
          %2562 = vmatprep.subr.bf16.mxu0 0
          %2563 = vmatpush1.bf16.msra.mxu0 %v2545
          %2564 = vmatprep.subr.bf16.mxu0 0
          %2565 = vmatpush1.bf16.msra.mxu0 %v2546
          %2566 = vmatprep.subr.bf16.mxu0 0
          %2567 = vmatpush1.bf16.msra.mxu0 %v2547
          %2568 = vmatprep.subr.bf16.mxu0 0
          %2569 = vmatpush1.bf16.msra.mxu0 %v2548
          %2570 = vmatprep.subr.bf16.mxu0 0
          %2571 = vmatpush1.bf16.msra.mxu0 %v2549
          %2572 = vmatprep.subr.bf16.mxu0 0
          %2573 = vmatpush1.bf16.msra.mxu0 %v2550
          %2574 = vmatprep.subr.bf16.mxu0 0
          %2575 = vmatpush1.bf16.msra.mxu0 %v2551
          %2576 = vmatprep.subr.bf16.mxu0 0
          %2577 = vmatpush1.bf16.msra.mxu0 0
          %2578 = vmatprep.subr.bf16.mxu0 0
          %2579 = vmatpush1.bf16.msra.mxu0 0
          %2580 = vmatprep.subr.bf16.mxu0 0
          %2581 = vmatpush1.bf16.msra.mxu0 0
          %2582 = vmatprep.subr.bf16.mxu0 0
          %2583 = vmatpush1.bf16.msra.mxu0 0
          %2584 = vmatprep.subr.bf16.mxu0 0
          %2585 = vmatpush1.bf16.msra.mxu0 0
          %2586 = vmatprep.subr.bf16.mxu0 0
          %2587 = vmatpush1.bf16.msra.mxu0 0
          %2588 = vmatprep.subr.bf16.mxu0 0
          %2589 = vmatpush1.bf16.msra.mxu0 0
          %2590 = vmatprep.subr.bf16.mxu0 0
          %2591 = vmatpush1.bf16.msra.mxu0 0
          %2592 = vmatprep.mubr.bf16.mxu0 0
          %2593 = vmatmul.mubr.bf16.gmra.mrb[0].mxu0 %v2510
          %v2594 = vpop.f32.mrb[0].mxu0
          %v2595 = vadd.f32 %v2504, %v2594
          %v2596 = vpop.f32.mrb[0].mxu0
          %v2597 = vpop.f32.mrb[0].mxu0
          %v2598 = vadd.f32 %v2504, %v2597
          %v2599 = vpop.f32.mrb[0].mxu0
          %2600 = vdwg.mxu0
          %v2601 = vxor.u32 %v2595, 2147483648
          %v2602 = vxor.u32 %v2598, 2147483648
          %v2603 = vmul.f32 %v2601, 1.442695
          %v2604 = vpow.pop %v2603
          %v2605 = vmul.f32 %v2602, 1.442695
          %v2606 = vpow.pop %v2605
          %v2607 = vadd.f32 %v2604, 1.0
          %v2608 = vadd.f32 %v2606, 1.0
          %v2609 = vrcp.pop %v2607
          %v2610 = vmul.f32 1.0, %v2609
          %v2611 = vrcp.pop %v2608
          %v2612 = vmul.f32 1.0, %v2611
          %v2613 = vmul.f32 %v2595, %v2610
          %v2614 = vmul.f32 %v2598, %v2612
          %v2615 = vld [vmem:[#allocation13] sm:$0xf]
          %v2616 = vld [vmem:[#allocation13 + $0x4] sm:$0xf]
          %v2617 = vld [vmem:[#allocation13 + $0x8] sm:$0xf]
          %v2618 = vld [vmem:[#allocation13 + $0xc] sm:$0xf]
          %v2619 = vld [vmem:[#allocation13 + $0x10] sm:$0xf]
          %v2620 = vld [vmem:[#allocation13 + $0x14] sm:$0xf]
          %v2621 = vld [vmem:[#allocation13 + $0x18] sm:$0xf]
          %v2622 = vld [vmem:[#allocation13 + $0x1c] sm:$0xf]
          %v2623 = vld [vmem:[#allocation13 + $0x20] sm:$0xf]
          %v2624 = vld [vmem:[#allocation13 + $0x24] sm:$0xf]
          %v2625 = vld [vmem:[#allocation13 + $0x28] sm:$0xf]
          %v2626 = vld [vmem:[#allocation13 + $0x2c] sm:$0xf]
          %v2627 = vld [vmem:[#allocation13 + $0x30] sm:$0xf]
          %v2628 = vld [vmem:[#allocation13 + $0x34] sm:$0xf]
          %v2629 = vld [vmem:[#allocation13 + $0x38] sm:$0xf]
          %v2630 = vld [vmem:[#allocation13 + $0x3c] sm:$0xf]
          %v2631 = vld [vmem:[#allocation14] sm:$0x1]
          %v2632 = vpack.c.bf16 %v2614, %v2613
          %v2634 = vlaneseq
          %v2635 = vshrl.u32 %v2634, 7
          %v2636 = vsub.s32 0, %v2635
          %v2637 = vrot.slane %v2631, %v2636
          %v2655 = vunpack.c.l.b16 %v2615
          %v2656 = vunpack.c.l.b16 %v2616
          %v2657 = vunpack.c.l.b16 %v2617
          %v2658 = vunpack.c.l.b16 %v2618
          %v2659 = vunpack.c.l.b16 %v2619
          %v2660 = vunpack.c.l.b16 %v2620
          %v2661 = vunpack.c.l.b16 %v2621
          %v2662 = vunpack.c.l.b16 %v2622
          %v2663 = vunpack.c.l.b16 %v2623
          %v2664 = vunpack.c.l.b16 %v2624
          %v2665 = vunpack.c.l.b16 %v2625
          %v2666 = vunpack.c.l.b16 %v2626
          %v2667 = vunpack.c.l.b16 %v2627
          %v2668 = vunpack.c.l.b16 %v2628
          %v2669 = vunpack.c.l.b16 %v2629
          %v2670 = vunpack.c.l.b16 %v2630
          %v2671 = vpack.c.b16 %v2656, %v2655
          %v2672 = vpack.c.b16 %v2658, %v2657
          %v2673 = vpack.c.b16 %v2660, %v2659
          %v2674 = vpack.c.b16 %v2662, %v2661
          %v2675 = vpack.c.b16 %v2664, %v2663
          %v2676 = vpack.c.b16 %v2666, %v2665
          %v2677 = vpack.c.b16 %v2668, %v2667
          %v2678 = vpack.c.b16 %v2670, %v2669
          %2687 = vmatprep.subr.bf16.mxu0 0
          %2688 = vmatpush1.bf16.msra.mxu0 %v2671
          %2689 = vmatprep.subr.bf16.mxu0 0
          %2690 = vmatpush1.bf16.msra.mxu0 %v2672
          %2691 = vmatprep.subr.bf16.mxu0 0
          %2692 = vmatpush1.bf16.msra.mxu0 %v2673
          %2693 = vmatprep.subr.bf16.mxu0 0
          %2694 = vmatpush1.bf16.msra.mxu0 %v2674
          %2695 = vmatprep.subr.bf16.mxu0 0
          %2696 = vmatpush1.bf16.msra.mxu0 %v2675
          %2697 = vmatprep.subr.bf16.mxu0 0
          %2698 = vmatpush1.bf16.msra.mxu0 %v2676
          %2699 = vmatprep.subr.bf16.mxu0 0
          %2700 = vmatpush1.bf16.msra.mxu0 %v2677
          %2701 = vmatprep.subr.bf16.mxu0 0
          %2702 = vmatpush1.bf16.msra.mxu0 %v2678
          %2703 = vmatprep.subr.bf16.mxu0 0
          %2704 = vmatpush1.bf16.msra.mxu0 0
          %2705 = vmatprep.subr.bf16.mxu0 0
          %2706 = vmatpush1.bf16.msra.mxu0 0
          %2707 = vmatprep.subr.bf16.mxu0 0
          %2708 = vmatpush1.bf16.msra.mxu0 0
          %2709 = vmatprep.subr.bf16.mxu0 0
          %2710 = vmatpush1.bf16.msra.mxu0 0
          %2711 = vmatprep.subr.bf16.mxu0 0
          %2712 = vmatpush1.bf16.msra.mxu0 0
          %2713 = vmatprep.subr.bf16.mxu0 0
          %2714 = vmatpush1.bf16.msra.mxu0 0
          %2715 = vmatprep.subr.bf16.mxu0 0
          %2716 = vmatpush1.bf16.msra.mxu0 0
          %2717 = vmatprep.subr.bf16.mxu0 0
          %2718 = vmatpush1.bf16.msra.mxu0 0
          %2719 = vmatprep.mubr.bf16.mxu0 0
          %2720 = vmatmul.mubr.bf16.gmra.mrb[0].mxu0 %v2632
          %v2721 = vpop.f32.mrb[0].mxu0
          %v2722 = vadd.f32 %v2637, %v2721
          %v2723 = vpop.f32.mrb[0].mxu0
          %v2724 = vpop.f32.mrb[0].mxu0
          %v2725 = vadd.f32 %v2637, %v2724
          %v2726 = vpop.f32.mrb[0].mxu0
          %2727 = vdwg.mxu0
          %v2728 = vld [vmem:[%s11] sm:$0xff]
          %v2729 = vld [vmem:[%s11 + $0x8] sm:$0xff]
          %2731 = vset.pattern.permute.xlu0 0
          %2732 = vperm.xlu0 %2731, %v2728
          %v2733 = vpop.permute.xlu0 %2732
          %2736 = vset.pattern.permute.xlu0 0
          %2737 = vperm.xlu0 %2736, %v2729
          %v2738 = vpop.permute.xlu0 %2737
          %v2740 = vmul.f32 %v2722, %v2733
          %v2741 = vmul.f32 %v2725, %v2738
          %v2742 = vld [vmem:[%s9] sm:$0x1]
          %v2743 = vld [vmem:[#allocation16] sm:$0xf]
          %v2744 = vld [vmem:[#allocation16 + $0x4] sm:$0xf]
          %v2745 = vld [vmem:[#allocation16 + $0x8] sm:$0xf]
          %v2746 = vld [vmem:[#allocation16 + $0xc] sm:$0xf]
          %v2747 = vld [vmem:[#allocation16 + $0x10] sm:$0xf]
          %v2748 = vld [vmem:[#allocation16 + $0x14] sm:$0xf]
          %v2749 = vld [vmem:[#allocation16 + $0x18] sm:$0xf]
          %v2750 = vld [vmem:[#allocation16 + $0x1c] sm:$0xf]
          %v2751 = vld [vmem:[#allocation16 + $0x20] sm:$0xf]
          %v2752 = vld [vmem:[#allocation16 + $0x24] sm:$0xf]
          %v2753 = vld [vmem:[#allocation16 + $0x28] sm:$0xf]
          %v2754 = vld [vmem:[#allocation16 + $0x2c] sm:$0xf]
          %v2755 = vld [vmem:[#allocation16 + $0x30] sm:$0xf]
          %v2756 = vld [vmem:[#allocation16 + $0x34] sm:$0xf]
          %v2757 = vld [vmem:[#allocation16 + $0x38] sm:$0xf]
          %v2758 = vld [vmem:[#allocation16 + $0x3c] sm:$0xf]
          %v2759 = vld [vmem:[#allocation17] sm:$0x1]
          %v2761 = vlaneseq
          %v2762 = vshrl.u32 %v2761, 7
          %v2763 = vsub.s32 0, %v2762
          %v2764 = vrot.slane %v2759, %v2763
          %v2782 = vunpack.c.l.b16 %v2743
          %v2783 = vunpack.c.l.b16 %v2744
          %v2784 = vunpack.c.l.b16 %v2745
          %v2785 = vunpack.c.l.b16 %v2746
          %v2786 = vunpack.c.l.b16 %v2747
          %v2787 = vunpack.c.l.b16 %v2748
          %v2788 = vunpack.c.l.b16 %v2749
          %v2789 = vunpack.c.l.b16 %v2750
          %v2790 = vunpack.c.l.b16 %v2751
          %v2791 = vunpack.c.l.b16 %v2752
          %v2792 = vunpack.c.l.b16 %v2753
          %v2793 = vunpack.c.l.b16 %v2754
          %v2794 = vunpack.c.l.b16 %v2755
          %v2795 = vunpack.c.l.b16 %v2756
          %v2796 = vunpack.c.l.b16 %v2757
          %v2797 = vunpack.c.l.b16 %v2758
          %v2798 = vpack.c.b16 %v2783, %v2782
          %v2799 = vpack.c.b16 %v2785, %v2784
          %v2800 = vpack.c.b16 %v2787, %v2786
          %v2801 = vpack.c.b16 %v2789, %v2788
          %v2802 = vpack.c.b16 %v2791, %v2790
          %v2803 = vpack.c.b16 %v2793, %v2792
          %v2804 = vpack.c.b16 %v2795, %v2794
          %v2805 = vpack.c.b16 %v2797, %v2796
          %2814 = vmatprep.subr.bf16.mxu0 0
          %2815 = vmatpush1.bf16.msra.mxu0 %v2798
          %2816 = vmatprep.subr.bf16.mxu0 0
          %2817 = vmatpush1.bf16.msra.mxu0 %v2799
          %2818 = vmatprep.subr.bf16.mxu0 0
          %2819 = vmatpush1.bf16.msra.mxu0 %v2800
          %2820 = vmatprep.subr.bf16.mxu0 0
          %2821 = vmatpush1.bf16.msra.mxu0 %v2801
          %2822 = vmatprep.subr.bf16.mxu0 0
          %2823 = vmatpush1.bf16.msra.mxu0 %v2802
          %2824 = vmatprep.subr.bf16.mxu0 0
          %2825 = vmatpush1.bf16.msra.mxu0 %v2803
          %2826 = vmatprep.subr.bf16.mxu0 0
          %2827 = vmatpush1.bf16.msra.mxu0 %v2804
          %2828 = vmatprep.subr.bf16.mxu0 0
          %2829 = vmatpush1.bf16.msra.mxu0 %v2805
          %2830 = vmatprep.subr.bf16.mxu0 0
          %2831 = vmatpush1.bf16.msra.mxu0 0
          %2832 = vmatprep.subr.bf16.mxu0 0
          %2833 = vmatpush1.bf16.msra.mxu0 0
          %2834 = vmatprep.subr.bf16.mxu0 0
          %2835 = vmatpush1.bf16.msra.mxu0 0
          %2836 = vmatprep.subr.bf16.mxu0 0
          %2837 = vmatpush1.bf16.msra.mxu0 0
          %2838 = vmatprep.subr.bf16.mxu0 0
          %2839 = vmatpush1.bf16.msra.mxu0 0
          %2840 = vmatprep.subr.bf16.mxu0 0
          %2841 = vmatpush1.bf16.msra.mxu0 0
          %2842 = vmatprep.subr.bf16.mxu0 0
          %2843 = vmatpush1.bf16.msra.mxu0 0
          %2844 = vmatprep.subr.bf16.mxu0 0
          %2845 = vmatpush1.bf16.msra.mxu0 0
          %2846 = vmatprep.mubr.bf16.mxu0 0
          %2847 = vmatmul.mubr.bf16.gmra.mrb[0].mxu0 %v2742
          %v2848 = vpop.f32.mrb[0].mxu0
          %v2849 = vadd.f32 %v2764, %v2848
          %v2850 = vpop.f32.mrb[0].mxu0
          %v2851 = vpop.f32.mrb[0].mxu0
          %v2852 = vpop.f32.mrb[0].mxu0
          %2853 = vdwg.mxu0
          %v2854 = vxor.u32 %v2849, 2147483648
          %v2855 = vmul.f32 %v2854, 1.442695
          %v2856 = vpow.pop %v2855
          %v2857 = vadd.f32 %v2856, 1.0
          %v2858 = vrcp.pop %v2857
          %v2859 = vmul.f32 1.0, %v2858
          %v2860 = vmul.f32 %v2849, %v2859
          %v2861 = vld [vmem:[#allocation19] sm:$0xf]
          %v2862 = vld [vmem:[#allocation19 + $0x4] sm:$0xf]
          %v2863 = vld [vmem:[#allocation19 + $0x8] sm:$0xf]
          %v2864 = vld [vmem:[#allocation19 + $0xc] sm:$0xf]
          %v2865 = vld [vmem:[#allocation19 + $0x10] sm:$0xf]
          %v2866 = vld [vmem:[#allocation19 + $0x14] sm:$0xf]
          %v2867 = vld [vmem:[#allocation19 + $0x18] sm:$0xf]
          %v2868 = vld [vmem:[#allocation19 + $0x1c] sm:$0xf]
          %v2869 = vld [vmem:[#allocation19 + $0x20] sm:$0xf]
          %v2870 = vld [vmem:[#allocation19 + $0x24] sm:$0xf]
          %v2871 = vld [vmem:[#allocation19 + $0x28] sm:$0xf]
          %v2872 = vld [vmem:[#allocation19 + $0x2c] sm:$0xf]
          %v2873 = vld [vmem:[#allocation19 + $0x30] sm:$0xf]
          %v2874 = vld [vmem:[#allocation19 + $0x34] sm:$0xf]
          %v2875 = vld [vmem:[#allocation19 + $0x38] sm:$0xf]
          %v2876 = vld [vmem:[#allocation19 + $0x3c] sm:$0xf]
          %v2877 = vld [vmem:[#allocation20] sm:$0x1]
          %v2878 = vpack.c.bf16 %v2860, %v2860
          %v2880 = vlaneseq
          %v2881 = vshrl.u32 %v2880, 7
          %v2882 = vsub.s32 0, %v2881
          %v2883 = vrot.slane %v2877, %v2882
          %v2901 = vunpack.c.l.b16 %v2861
          %v2902 = vunpack.c.l.b16 %v2862
          %v2903 = vunpack.c.l.b16 %v2863
          %v2904 = vunpack.c.l.b16 %v2864
          %v2905 = vunpack.c.l.b16 %v2865
          %v2906 = vunpack.c.l.b16 %v2866
          %v2907 = vunpack.c.l.b16 %v2867
          %v2908 = vunpack.c.l.b16 %v2868
          %v2909 = vunpack.c.l.b16 %v2869
          %v2910 = vunpack.c.l.b16 %v2870
          %v2911 = vunpack.c.l.b16 %v2871
          %v2912 = vunpack.c.l.b16 %v2872
          %v2913 = vunpack.c.l.b16 %v2873
          %v2914 = vunpack.c.l.b16 %v2874
          %v2915 = vunpack.c.l.b16 %v2875
          %v2916 = vunpack.c.l.b16 %v2876
          %v2917 = vpack.c.b16 %v2902, %v2901
          %v2918 = vpack.c.b16 %v2904, %v2903
          %v2919 = vpack.c.b16 %v2906, %v2905
          %v2920 = vpack.c.b16 %v2908, %v2907
          %v2921 = vpack.c.b16 %v2910, %v2909
          %v2922 = vpack.c.b16 %v2912, %v2911
          %v2923 = vpack.c.b16 %v2914, %v2913
          %v2924 = vpack.c.b16 %v2916, %v2915
          %2933 = vmatprep.subr.bf16.mxu0 0
          %2934 = vmatpush1.bf16.msra.mxu0 %v2917
          %2935 = vmatprep.subr.bf16.mxu0 0
          %2936 = vmatpush1.bf16.msra.mxu0 %v2918
          %2937 = vmatprep.subr.bf16.mxu0 0
          %2938 = vmatpush1.bf16.msra.mxu0 %v2919
          %2939 = vmatprep.subr.bf16.mxu0 0
          %2940 = vmatpush1.bf16.msra.mxu0 %v2920
          %2941 = vmatprep.subr.bf16.mxu0 0
          %2942 = vmatpush1.bf16.msra.mxu0 %v2921
          %2943 = vmatprep.subr.bf16.mxu0 0
          %2944 = vmatpush1.bf16.msra.mxu0 %v2922
          %2945 = vmatprep.subr.bf16.mxu0 0
          %2946 = vmatpush1.bf16.msra.mxu0 %v2923
          %2947 = vmatprep.subr.bf16.mxu0 0
          %2948 = vmatpush1.bf16.msra.mxu0 %v2924
          %2949 = vmatprep.subr.bf16.mxu0 0
          %2950 = vmatpush1.bf16.msra.mxu0 0
          %2951 = vmatprep.subr.bf16.mxu0 0
          %2952 = vmatpush1.bf16.msra.mxu0 0
          %2953 = vmatprep.subr.bf16.mxu0 0
          %2954 = vmatpush1.bf16.msra.mxu0 0
          %2955 = vmatprep.subr.bf16.mxu0 0
          %2956 = vmatpush1.bf16.msra.mxu0 0
          %2957 = vmatprep.subr.bf16.mxu0 0
          %2958 = vmatpush1.bf16.msra.mxu0 0
          %2959 = vmatprep.subr.bf16.mxu0 0
          %2960 = vmatpush1.bf16.msra.mxu0 0
          %2961 = vmatprep.subr.bf16.mxu0 0
          %2962 = vmatpush1.bf16.msra.mxu0 0
          %2963 = vmatprep.subr.bf16.mxu0 0
          %2964 = vmatpush1.bf16.msra.mxu0 0
          %2965 = vmatprep.mubr.bf16.mxu0 0
          %2966 = vmatmul.mubr.bf16.gmra.mrb[0].mxu0 %v2878
          %v2967 = vpop.f32.mrb[0].mxu0
          %v2968 = vadd.f32 %v2883, %v2967
          %v2969 = vpop.f32.mrb[0].mxu0
          %v2970 = vpop.f32.mrb[0].mxu0
          %v2971 = vpop.f32.mrb[0].mxu0
          %2972 = vdwg.mxu0
          %v2973 = vld [vmem:[%s1] sm:$0xf]
          %v2974 = vld [vmem:[%s1 + $0x4] sm:$0xf]
          %v2975 = vld [vmem:[#allocation3] sm:$0xf]
          %v2976 = vld [vmem:[#allocation3 + $0x4] sm:$0xf]
          %v2977 = vld [vmem:[#allocation3 + $0x8] sm:$0xf]
          %v2978 = vld [vmem:[#allocation3 + $0xc] sm:$0xf]
          %v2979 = vld [vmem:[#allocation3 + $0x10] sm:$0xf]
          %v2980 = vld [vmem:[#allocation3 + $0x14] sm:$0xf]
          %v2981 = vld [vmem:[#allocation3 + $0x18] sm:$0xf]
          %v2982 = vld [vmem:[#allocation3 + $0x1c] sm:$0xf]
          %v2983 = vld [vmem:[#allocation3 + $0x20] sm:$0xf]
          %v2984 = vld [vmem:[#allocation3 + $0x24] sm:$0xf]
          %v2985 = vld [vmem:[#allocation3 + $0x28] sm:$0xf]
          %v2986 = vld [vmem:[#allocation3 + $0x2c] sm:$0xf]
          %v2987 = vld [vmem:[#allocation3 + $0x30] sm:$0xf]
          %v2988 = vld [vmem:[#allocation3 + $0x34] sm:$0xf]
          %v2989 = vld [vmem:[#allocation3 + $0x38] sm:$0xf]
          %v2990 = vld [vmem:[#allocation3 + $0x3c] sm:$0xf]
          %v2991 = vld [vmem:[#allocation5] sm:$0x1]
          %v2993 = vlaneseq
          %v2994 = vshrl.u32 %v2993, 7
          %v2995 = vsub.s32 0, %v2994
          %v2996 = vrot.slane %v2991, %v2995
          %v3000 = vunpack.c.l.b16 %v2973
          %v3001 = vunpack.c.l.b16 %v2974
          %v3002 = vpack.c.b16 %v3001, %v3000
          %v3020 = vunpack.c.l.b16 %v2975
          %v3021 = vunpack.c.l.b16 %v2976
          %v3022 = vunpack.c.l.b16 %v2977
          %v3023 = vunpack.c.l.b16 %v2978
          %v3024 = vunpack.c.l.b16 %v2979
          %v3025 = vunpack.c.l.b16 %v2980
          %v3026 = vunpack.c.l.b16 %v2981
          %v3027 = vunpack.c.l.b16 %v2982
          %v3028 = vunpack.c.l.b16 %v2983
          %v3029 = vunpack.c.l.b16 %v2984
          %v3030 = vunpack.c.l.b16 %v2985
          %v3031 = vunpack.c.l.b16 %v2986
          %v3032 = vunpack.c.l.b16 %v2987
          %v3033 = vunpack.c.l.b16 %v2988
          %v3034 = vunpack.c.l.b16 %v2989
          %v3035 = vunpack.c.l.b16 %v2990
          %v3036 = vpack.c.b16 %v3021, %v3020
          %v3037 = vpack.c.b16 %v3023, %v3022
          %v3038 = vpack.c.b16 %v3025, %v3024
          %v3039 = vpack.c.b16 %v3027, %v3026
          %v3040 = vpack.c.b16 %v3029, %v3028
          %v3041 = vpack.c.b16 %v3031, %v3030
          %v3042 = vpack.c.b16 %v3033, %v3032
          %v3043 = vpack.c.b16 %v3035, %v3034
          %3052 = vmatprep.subr.bf16.mxu0 0
          %3053 = vmatpush1.bf16.msra.mxu0 %v3036
          %3054 = vmatprep.subr.bf16.mxu0 0
          %3055 = vmatpush1.bf16.msra.mxu0 %v3037
          %3056 = vmatprep.subr.bf16.mxu0 0
          %3057 = vmatpush1.bf16.msra.mxu0 %v3038
          %3058 = vmatprep.subr.bf16.mxu0 0
          %3059 = vmatpush1.bf16.msra.mxu0 %v3039
          %3060 = vmatprep.subr.bf16.mxu0 0
          %3061 = vmatpush1.bf16.msra.mxu0 %v3040
          %3062 = vmatprep.subr.bf16.mxu0 0
          %3063 = vmatpush1.bf16.msra.mxu0 %v3041
          %3064 = vmatprep.subr.bf16.mxu0 0
          %3065 = vmatpush1.bf16.msra.mxu0 %v3042
          %3066 = vmatprep.subr.bf16.mxu0 0
          %3067 = vmatpush1.bf16.msra.mxu0 %v3043
          %3068 = vmatprep.subr.bf16.mxu0 0
          %3069 = vmatpush1.bf16.msra.mxu0 0
          %3070 = vmatprep.subr.bf16.mxu0 0
          %3071 = vmatpush1.bf16.msra.mxu0 0
          %3072 = vmatprep.subr.bf16.mxu0 0
          %3073 = vmatpush1.bf16.msra.mxu0 0
          %3074 = vmatprep.subr.bf16.mxu0 0
          %3075 = vmatpush1.bf16.msra.mxu0 0
          %3076 = vmatprep.subr.bf16.mxu0 0
          %3077 = vmatpush1.bf16.msra.mxu0 0
          %3078 = vmatprep.subr.bf16.mxu0 0
          %3079 = vmatpush1.bf16.msra.mxu0 0
          %3080 = vmatprep.subr.bf16.mxu0 0
          %3081 = vmatpush1.bf16.msra.mxu0 0
          %3082 = vmatprep.subr.bf16.mxu0 0
          %3083 = vmatpush1.bf16.msra.mxu0 0
          %3084 = vmatprep.mubr.bf16.mxu0 0
          %3085 = vmatmul.mubr.bf16.gmra.mrb[0].mxu0 %v3002
          %v3086 = vpop.f32.mrb[0].mxu0
          %v3087 = vadd.f32 %v2996, %v3086
          %v3088 = vpop.f32.mrb[0].mxu0
          %v3089 = vpop.f32.mrb[0].mxu0
          %v3090 = vadd.f32 %v2996, %v3089
          %v3091 = vpop.f32.mrb[0].mxu0
          %3092 = vdwg.mxu0
          %v3093 = vld [vmem:[%s5] sm:$0xff]
          %v3094 = vadd.f32 %v3087, %v3093
          %v3095 = vadd.f32 %v3090, %v3093
          %v3096 = vadd.f32 %v3094, %v2740
          %v3097 = vadd.f32 %v3095, %v2741
          %3098 = vst [vmem:[#allocation2] sm:$0xff] %v3096
          %3099 = vst [vmem:[#allocation2 + $0x8] sm:$0xf] %v2480
          %3100 = vst [vmem:[#allocation2 + $0xc] sm:$0x1] %v2968
          %3101 = vst [vmem:[#allocation2 + $0x10] sm:$0xff] %v3097
          %3102 = vst [vmem:[#allocation2 + $0x14] sm:$0xf0] %v2480
          %3103 = vst [vmem:[#allocation2 + $0x1b] sm:$0x2] %v2968
        $region360: #{srm_forward.1} parent=219 // pred_fallthru
          _
        %v3104 = vld [vmem:[#allocation2] sm:$0xff]
        %v3105 = vld [vmem:[#allocation2 + $0x8] sm:$0xff]
        %v3106 = vld [vmem:[#allocation2 + $0x10] sm:$0xff]
        %v3107 = vld [vmem:[#allocation2 + $0x18] sm:$0xff]
        %v3108 = vld [vmem:[%s1886] sm:$0x1]
        %v3109 = vld [vmem:[%s1894] sm:$0x1]
        %3110 = vadd.xlane.f32.xlu0 %v3104
        %v3111 = vpop.xlane.xlu0 %3110
        %3112 = vadd.xlane.f32.xlu0 %v3105
        %v3113 = vpop.xlane.xlu0 %3112
        %3114 = vadd.xlane.f32.xlu0 %v3106
        %v3115 = vpop.xlane.xlu0 %3114
        %3116 = vadd.xlane.f32.xlu0 %v3107
        %v3117 = vpop.xlane.xlu0 %3116
        %v3118 = vmul.f32 %v3111, 0.03125
        %v3119 = vmul.f32 %v3113, 0.03125
        %v3120 = vmul.f32 %v3115, 0.03125
        %v3121 = vmul.f32 %v3117, 0.03125
        %v3122 = vmul.f32 %v3104, %v3104
        %v3123 = vmul.f32 %v3105, %v3105
        %v3124 = vmul.f32 %v3106, %v3106
        %v3125 = vmul.f32 %v3107, %v3107
        %3126 = vadd.xlane.f32.xlu0 %v3122
        %v3127 = vpop.xlane.xlu0 %3126
        %3128 = vadd.xlane.f32.xlu0 %v3123
        %v3129 = vpop.xlane.xlu0 %3128
        %3130 = vadd.xlane.f32.xlu0 %v3124
        %v3131 = vpop.xlane.xlu0 %3130
        %3132 = vadd.xlane.f32.xlu0 %v3125
        %v3133 = vpop.xlane.xlu0 %3132
        %v3134 = vmul.f32 %v3127, 0.03125
        %v3135 = vmul.f32 %v3129, 0.03125
        %v3136 = vmul.f32 %v3131, 0.03125
        %v3137 = vmul.f32 %v3133, 0.03125
        %v3138 = vmul.f32 %v3118, %v3118
        %v3139 = vmul.f32 %v3119, %v3119
        %v3140 = vmul.f32 %v3120, %v3120
        %v3141 = vmul.f32 %v3121, %v3121
        %v3142 = vsub.f32 %v3134, %v3138
        %v3143 = vsub.f32 %v3135, %v3139
        %v3144 = vsub.f32 %v3136, %v3140
        %v3145 = vsub.f32 %v3137, %v3141
        %v3146 = vmax.f32 %v3142, 0.0
        %v3147 = vmax.f32 %v3143, 0.0
        %v3148 = vmax.f32 %v3144, 0.0
        %v3149 = vmax.f32 %v3145, 0.0
        %v3150 = vsub.f32 %v3104, %v3118
        %v3151 = vsub.f32 %v3105, %v3119
        %v3152 = vsub.f32 %v3106, %v3120
        %v3153 = vsub.f32 %v3107, %v3121
        %v3154 = vadd.f32 %v3146, 1e-05
        %v3155 = vadd.f32 %v3147, 1e-05
        %v3156 = vadd.f32 %v3148, 1e-05
        %v3157 = vadd.f32 %v3149, 1e-05
        %v3158 = vrsqrt.pop %v3154
        %v3159 = vrsqrt.pop %v3155
        %v3160 = vrsqrt.pop %v3156
        %v3161 = vrsqrt.pop %v3157
        %v3162 = vmul.f32 %v3150, %v3158
        %v3163 = vmul.f32 %v3151, %v3159
        %v3164 = vmul.f32 %v3152, %v3160
        %v3165 = vmul.f32 %v3153, %v3161
        %v3167 = vlaneseq
        %v3168 = vshrl.u32 %v3167, 7
        %v3169 = vsub.s32 0, %v3168
        %v3170 = vrot.slane %v3108, %v3169
        %v3172 = vmul.f32 %v3162, %v3170
        %v3173 = vmul.f32 %v3163, %v3170
        %v3174 = vmul.f32 %v3164, %v3170
        %v3175 = vmul.f32 %v3165, %v3170
        %v3177 = vlaneseq
        %v3178 = vshrl.u32 %v3177, 7
        %v3179 = vsub.s32 0, %v3178
        %v3180 = vrot.slane %v3109, %v3179
        %v3182 = vadd.f32 %v3172, %v3180
        %v3183 = vadd.f32 %v3173, %v3180
        %v3184 = vadd.f32 %v3174, %v3180
        %v3185 = vadd.f32 %v3175, %v3180
        %v3186 = vld [vmem:[%s2197] sm:$0xf]
        %v3187 = vld [vmem:[%s2197 + $0x4] sm:$0xf]
        %v3188 = vld [vmem:[%s2197 + $0x8] sm:$0xf]
        %v3189 = vld [vmem:[%s2197 + $0xc] sm:$0xf]
        %v3190 = vld [vmem:[%s2197 + $0x10] sm:$0xf]
        %v3191 = vld [vmem:[%s2197 + $0x14] sm:$0xf]
        %v3192 = vld [vmem:[%s2197 + $0x18] sm:$0xf]
        %v3193 = vld [vmem:[%s2197 + $0x1c] sm:$0xf]
        %v3194 = vld [vmem:[%s2197 + $0x20] sm:$0xf]
        %v3195 = vld [vmem:[%s2197 + $0x24] sm:$0xf]
        %v3196 = vld [vmem:[%s2197 + $0x28] sm:$0xf]
        %v3197 = vld [vmem:[%s2197 + $0x2c] sm:$0xf]
        %v3198 = vld [vmem:[%s2197 + $0x30] sm:$0xf]
        %v3199 = vld [vmem:[%s2197 + $0x34] sm:$0xf]
        %v3200 = vld [vmem:[%s2197 + $0x38] sm:$0xf]
        %v3201 = vld [vmem:[%s2197 + $0x3c] sm:$0xf]
        %v3202 = vld [vmem:[%s1902] sm:$0x1]
        %v3203 = vpack.c.bf16 %v3183, %v3182
        %v3204 = vpack.c.bf16 %v3185, %v3184
        %v3206 = vlaneseq
        %v3207 = vshrl.u32 %v3206, 7
        %v3208 = vsub.s32 0, %v3207
        %v3209 = vrot.slane %v3202, %v3208
        %v3227 = vunpack.c.l.b16 %v3186
        %v3228 = vunpack.c.l.b16 %v3187
        %v3229 = vunpack.c.l.b16 %v3188
        %v3230 = vunpack.c.l.b16 %v3189
        %v3231 = vunpack.c.l.b16 %v3190
        %v3232 = vunpack.c.l.b16 %v3191
        %v3233 = vunpack.c.l.b16 %v3192
        %v3234 = vunpack.c.l.b16 %v3193
        %v3235 = vunpack.c.l.b16 %v3194
        %v3236 = vunpack.c.l.b16 %v3195
        %v3237 = vunpack.c.l.b16 %v3196
        %v3238 = vunpack.c.l.b16 %v3197
        %v3239 = vunpack.c.l.b16 %v3198
        %v3240 = vunpack.c.l.b16 %v3199
        %v3241 = vunpack.c.l.b16 %v3200
        %v3242 = vunpack.c.l.b16 %v3201
        %v3243 = vpack.c.b16 %v3228, %v3227
        %v3244 = vpack.c.b16 %v3230, %v3229
        %v3245 = vpack.c.b16 %v3232, %v3231
        %v3246 = vpack.c.b16 %v3234, %v3233
        %v3247 = vpack.c.b16 %v3236, %v3235
        %v3248 = vpack.c.b16 %v3238, %v3237
        %v3249 = vpack.c.b16 %v3240, %v3239
        %v3250 = vpack.c.b16 %v3242, %v3241
        %3259 = vmatprep.subr.bf16.mxu0 0
        %3260 = vmatpush1.bf16.msra.mxu0 %v3243
        %3261 = vmatprep.subr.bf16.mxu0 0
        %3262 = vmatpush1.bf16.msra.mxu0 %v3244
        %3263 = vmatprep.subr.bf16.mxu0 0
        %3264 = vmatpush1.bf16.msra.mxu0 %v3245
        %3265 = vmatprep.subr.bf16.mxu0 0
        %3266 = vmatpush1.bf16.msra.mxu0 %v3246
        %3267 = vmatprep.subr.bf16.mxu0 0
        %3268 = vmatpush1.bf16.msra.mxu0 %v3247
        %3269 = vmatprep.subr.bf16.mxu0 0
        %3270 = vmatpush1.bf16.msra.mxu0 %v3248
        %3271 = vmatprep.subr.bf16.mxu0 0
        %3272 = vmatpush1.bf16.msra.mxu0 %v3249
        %3273 = vmatprep.subr.bf16.mxu0 0
        %3274 = vmatpush1.bf16.msra.mxu0 %v3250
        %3275 = vmatprep.subr.bf16.mxu0 0
        %3276 = vmatpush1.bf16.msra.mxu0 0
        %3277 = vmatprep.subr.bf16.mxu0 0
        %3278 = vmatpush1.bf16.msra.mxu0 0
        %3279 = vmatprep.subr.bf16.mxu0 0
        %3280 = vmatpush1.bf16.msra.mxu0 0
        %3281 = vmatprep.subr.bf16.mxu0 0
        %3282 = vmatpush1.bf16.msra.mxu0 0
        %3283 = vmatprep.subr.bf16.mxu0 0
        %3284 = vmatpush1.bf16.msra.mxu0 0
        %3285 = vmatprep.subr.bf16.mxu0 0
        %3286 = vmatpush1.bf16.msra.mxu0 0
        %3287 = vmatprep.subr.bf16.mxu0 0
        %3288 = vmatpush1.bf16.msra.mxu0 0
        %3289 = vmatprep.subr.bf16.mxu0 0
        %3290 = vmatpush1.bf16.msra.mxu0 0
        %3291 = vmatprep.mubr.bf16.mxu0 0
        %3292 = vmatmul.mubr.bf16.gmra.mrb[0].mxu0 %v3203
        %v3293 = vpop.f32.mrb[0].mxu0
        %v3294 = vadd.f32 %v3209, %v3293
        %v3295 = vpop.f32.mrb[0].mxu0
        %v3296 = vpop.f32.mrb[0].mxu0
        %v3297 = vadd.f32 %v3209, %v3296
        %v3298 = vpop.f32.mrb[0].mxu0
        %3299 = vmatprep.mubr.bf16.mxu0 0
        %3300 = vmatmul.mubr.bf16.gmra.mrb[0].mxu0 %v3204
        %v3301 = vpop.f32.mrb[0].mxu0
        %v3302 = vadd.f32 %v3209, %v3301
        %v3303 = vpop.f32.mrb[0].mxu0
        %v3304 = vpop.f32.mrb[0].mxu0
        %v3305 = vadd.f32 %v3209, %v3304
        %v3306 = vpop.f32.mrb[0].mxu0
        %3307 = vdwg.mxu0
        %v3308 = vld [vmem:[%s2202] sm:$0xf]
        %v3309 = vld [vmem:[%s2202 + $0x4] sm:$0xf]
        %v3310 = vld [vmem:[%s2202 + $0x8] sm:$0xf]
        %v3311 = vld [vmem:[%s2202 + $0xc] sm:$0xf]
        %v3312 = vld [vmem:[%s2202 + $0x10] sm:$0xf]
        %v3313 = vld [vmem:[%s2202 + $0x14] sm:$0xf]
        %v3314 = vld [vmem:[%s2202 + $0x18] sm:$0xf]
        %v3315 = vld [vmem:[%s2202 + $0x1c] sm:$0xf]
        %v3316 = vld [vmem:[%s2202 + $0x20] sm:$0xf]
        %v3317 = vld [vmem:[%s2202 + $0x24] sm:$0xf]
        %v3318 = vld [vmem:[%s2202 + $0x28] sm:$0xf]
        %v3319 = vld [vmem:[%s2202 + $0x2c] sm:$0xf]
        %v3320 = vld [vmem:[%s2202 + $0x30] sm:$0xf]
        %v3321 = vld [vmem:[%s2202 + $0x34] sm:$0xf]
        %v3322 = vld [vmem:[%s2202 + $0x38] sm:$0xf]
        %v3323 = vld [vmem:[%s2202 + $0x3c] sm:$0xf]
        %v3324 = vld [vmem:[%s1910] sm:$0x1]
        %v3326 = vlaneseq
        %v3327 = vshrl.u32 %v3326, 7
        %v3328 = vsub.s32 0, %v3327
        %v3329 = vrot.slane %v3324, %v3328
        %v3347 = vunpack.c.l.b16 %v3308
        %v3348 = vunpack.c.l.b16 %v3309
        %v3349 = vunpack.c.l.b16 %v3310
        %v3350 = vunpack.c.l.b16 %v3311
        %v3351 = vunpack.c.l.b16 %v3312
        %v3352 = vunpack.c.l.b16 %v3313
        %v3353 = vunpack.c.l.b16 %v3314
        %v3354 = vunpack.c.l.b16 %v3315
        %v3355 = vunpack.c.l.b16 %v3316
        %v3356 = vunpack.c.l.b16 %v3317
        %v3357 = vunpack.c.l.b16 %v3318
        %v3358 = vunpack.c.l.b16 %v3319
        %v3359 = vunpack.c.l.b16 %v3320
        %v3360 = vunpack.c.l.b16 %v3321
        %v3361 = vunpack.c.l.b16 %v3322
        %v3362 = vunpack.c.l.b16 %v3323
        %v3363 = vpack.c.b16 %v3348, %v3347
        %v3364 = vpack.c.b16 %v3350, %v3349
        %v3365 = vpack.c.b16 %v3352, %v3351
        %v3366 = vpack.c.b16 %v3354, %v3353
        %v3367 = vpack.c.b16 %v3356, %v3355
        %v3368 = vpack.c.b16 %v3358, %v3357
        %v3369 = vpack.c.b16 %v3360, %v3359
        %v3370 = vpack.c.b16 %v3362, %v3361
        %3379 = vmatprep.subr.bf16.mxu0 0
        %3380 = vmatpush1.bf16.msra.mxu0 %v3363
        %3381 = vmatprep.subr.bf16.mxu0 0
        %3382 = vmatpush1.bf16.msra.mxu0 %v3364
        %3383 = vmatprep.subr.bf16.mxu0 0
        %3384 = vmatpush1.bf16.msra.mxu0 %v3365
        %3385 = vmatprep.subr.bf16.mxu0 0
        %3386 = vmatpush1.bf16.msra.mxu0 %v3366
        %3387 = vmatprep.subr.bf16.mxu0 0
        %3388 = vmatpush1.bf16.msra.mxu0 %v3367
        %3389 = vmatprep.subr.bf16.mxu0 0
        %3390 = vmatpush1.bf16.msra.mxu0 %v3368
        %3391 = vmatprep.subr.bf16.mxu0 0
        %3392 = vmatpush1.bf16.msra.mxu0 %v3369
        %3393 = vmatprep.subr.bf16.mxu0 0
        %3394 = vmatpush1.bf16.msra.mxu0 %v3370
        %3395 = vmatprep.subr.bf16.mxu0 0
        %3396 = vmatpush1.bf16.msra.mxu0 0
        %3397 = vmatprep.subr.bf16.mxu0 0
        %3398 = vmatpush1.bf16.msra.mxu0 0
        %3399 = vmatprep.subr.bf16.mxu0 0
        %3400 = vmatpush1.bf16.msra.mxu0 0
        %3401 = vmatprep.subr.bf16.mxu0 0
        %3402 = vmatpush1.bf16.msra.mxu0 0
        %3403 = vmatprep.subr.bf16.mxu0 0
        %3404 = vmatpush1.bf16.msra.mxu0 0
        %3405 = vmatprep.subr.bf16.mxu0 0
        %3406 = vmatpush1.bf16.msra.mxu0 0
        %3407 = vmatprep.subr.bf16.mxu0 0
        %3408 = vmatpush1.bf16.msra.mxu0 0
        %3409 = vmatprep.subr.bf16.mxu0 0
        %3410 = vmatpush1.bf16.msra.mxu0 0
        %3411 = vmatprep.mubr.bf16.mxu0 0
        %3412 = vmatmul.mubr.bf16.gmra.mrb[0].mxu0 %v3203
        %v3413 = vpop.f32.mrb[0].mxu0
        %v3414 = vadd.f32 %v3329, %v3413
        %v3415 = vpop.f32.mrb[0].mxu0
        %v3416 = vpop.f32.mrb[0].mxu0
        %v3417 = vadd.f32 %v3329, %v3416
        %v3418 = vpop.f32.mrb[0].mxu0
        %3419 = vmatprep.mubr.bf16.mxu0 0
        %3420 = vmatmul.mubr.bf16.gmra.mrb[0].mxu0 %v3204
        %v3421 = vpop.f32.mrb[0].mxu0
        %v3422 = vadd.f32 %v3329, %v3421
        %v3423 = vpop.f32.mrb[0].mxu0
        %v3424 = vpop.f32.mrb[0].mxu0
        %v3425 = vadd.f32 %v3329, %v3424
        %v3426 = vpop.f32.mrb[0].mxu0
        %3427 = vdwg.mxu0
        %v3428 = vld [vmem:[%s2207] sm:$0xf]
        %v3429 = vld [vmem:[%s2207 + $0x4] sm:$0xf]
        %v3430 = vld [vmem:[%s2207 + $0x8] sm:$0xf]
        %v3431 = vld [vmem:[%s2207 + $0xc] sm:$0xf]
        %v3432 = vld [vmem:[%s2207 + $0x10] sm:$0xf]
        %v3433 = vld [vmem:[%s2207 + $0x14] sm:$0xf]
        %v3434 = vld [vmem:[%s2207 + $0x18] sm:$0xf]
        %v3435 = vld [vmem:[%s2207 + $0x1c] sm:$0xf]
        %v3436 = vld [vmem:[%s2207 + $0x20] sm:$0xf]
        %v3437 = vld [vmem:[%s2207 + $0x24] sm:$0xf]
        %v3438 = vld [vmem:[%s2207 + $0x28] sm:$0xf]
        %v3439 = vld [vmem:[%s2207 + $0x2c] sm:$0xf]
        %v3440 = vld [vmem:[%s2207 + $0x30] sm:$0xf]
        %v3441 = vld [vmem:[%s2207 + $0x34] sm:$0xf]
        %v3442 = vld [vmem:[%s2207 + $0x38] sm:$0xf]
        %v3443 = vld [vmem:[%s2207 + $0x3c] sm:$0xf]
        %v3444 = vld [vmem:[%s1918] sm:$0x1]
        %v3446 = vlaneseq
        %v3447 = vshrl.u32 %v3446, 7
        %v3448 = vsub.s32 0, %v3447
        %v3449 = vrot.slane %v3444, %v3448
        %v3467 = vunpack.c.l.b16 %v3428
        %v3468 = vunpack.c.l.b16 %v3429
        %v3469 = vunpack.c.l.b16 %v3430
        %v3470 = vunpack.c.l.b16 %v3431
        %v3471 = vunpack.c.l.b16 %v3432
        %v3472 = vunpack.c.l.b16 %v3433
        %v3473 = vunpack.c.l.b16 %v3434
        %v3474 = vunpack.c.l.b16 %v3435
        %v3475 = vunpack.c.l.b16 %v3436
        %v3476 = vunpack.c.l.b16 %v3437
        %v3477 = vunpack.c.l.b16 %v3438
        %v3478 = vunpack.c.l.b16 %v3439
        %v3479 = vunpack.c.l.b16 %v3440
        %v3480 = vunpack.c.l.b16 %v3441
        %v3481 = vunpack.c.l.b16 %v3442
        %v3482 = vunpack.c.l.b16 %v3443
        %v3483 = vpack.c.b16 %v3468, %v3467
        %v3484 = vpack.c.b16 %v3470, %v3469
        %v3485 = vpack.c.b16 %v3472, %v3471
        %v3486 = vpack.c.b16 %v3474, %v3473
        %v3487 = vpack.c.b16 %v3476, %v3475
        %v3488 = vpack.c.b16 %v3478, %v3477
        %v3489 = vpack.c.b16 %v3480, %v3479
        %v3490 = vpack.c.b16 %v3482, %v3481
        %3499 = vmatprep.subr.bf16.mxu0 0
        %3500 = vmatpush1.bf16.msra.mxu0 %v3483
        %3501 = vmatprep.subr.bf16.mxu0 0
        %3502 = vmatpush1.bf16.msra.mxu0 %v3484
        %3503 = vmatprep.subr.bf16.mxu0 0
        %3504 = vmatpush1.bf16.msra.mxu0 %v3485
        %3505 = vmatprep.subr.bf16.mxu0 0
        %3506 = vmatpush1.bf16.msra.mxu0 %v3486
        %3507 = vmatprep.subr.bf16.mxu0 0
        %3508 = vmatpush1.bf16.msra.mxu0 %v3487
        %3509 = vmatprep.subr.bf16.mxu0 0
        %3510 = vmatpush1.bf16.msra.mxu0 %v3488
        %3511 = vmatprep.subr.bf16.mxu0 0
        %3512 = vmatpush1.bf16.msra.mxu0 %v3489
        %3513 = vmatprep.subr.bf16.mxu0 0
        %3514 = vmatpush1.bf16.msra.mxu0 %v3490
        %3515 = vmatprep.subr.bf16.mxu0 0
        %3516 = vmatpush1.bf16.msra.mxu0 0
        %3517 = vmatprep.subr.bf16.mxu0 0
        %3518 = vmatpush1.bf16.msra.mxu0 0
        %3519 = vmatprep.subr.bf16.mxu0 0
        %3520 = vmatpush1.bf16.msra.mxu0 0
        %3521 = vmatprep.subr.bf16.mxu0 0
        %3522 = vmatpush1.bf16.msra.mxu0 0
        %3523 = vmatprep.subr.bf16.mxu0 0
        %3524 = vmatpush1.bf16.msra.mxu0 0
        %3525 = vmatprep.subr.bf16.mxu0 0
        %3526 = vmatpush1.bf16.msra.mxu0 0
        %3527 = vmatprep.subr.bf16.mxu0 0
        %3528 = vmatpush1.bf16.msra.mxu0 0
        %3529 = vmatprep.subr.bf16.mxu0 0
        %3530 = vmatpush1.bf16.msra.mxu0 0
        %3531 = vmatprep.mubr.bf16.mxu0 0
        %3532 = vmatmul.mubr.bf16.gmra.mrb[0].mxu0 %v3203
        %v3533 = vpop.f32.mrb[0].mxu0
        %v3534 = vadd.f32 %v3449, %v3533
        %v3535 = vpop.f32.mrb[0].mxu0
        %v3536 = vpop.f32.mrb[0].mxu0
        %v3537 = vadd.f32 %v3449, %v3536
        %v3538 = vpop.f32.mrb[0].mxu0
        %3539 = vmatprep.mubr.bf16.mxu0 0
        %3540 = vmatmul.mubr.bf16.gmra.mrb[0].mxu0 %v3204
        %v3541 = vpop.f32.mrb[0].mxu0
        %v3542 = vadd.f32 %v3449, %v3541
        %v3543 = vpop.f32.mrb[0].mxu0
        %v3544 = vpop.f32.mrb[0].mxu0
        %v3545 = vadd.f32 %v3449, %v3544
        %v3546 = vpop.f32.mrb[0].mxu0
        %3547 = vdwg.mxu0
        %v3548 = vld [vmem:[%s15] sm:$0xf]
        %v3551 = vunpack.c.l.s4 1966171168
        %v3552 = vunpack.c.0.s8 %v3551
        %v3553 = vlaneseq
        %v3554 = vshrl.u32 %v3553, 7
        %v3555 = vsub.s32 %v3552, %v3554
        %v3556 = vrot.slane %v3548, %v3555
        %v3557 = vcombine.high %v3556, %v3556
        %v3559 = vunpack.c.l.s4 1966171168
        %v3560 = vunpack.c.0.s8 %v3559
        %v3561 = vlaneseq
        %v3562 = vshrl.u32 %v3561, 7
        %v3563 = vsub.s32 %v3560, %v3562
        %v3564 = vrot.slane %v3556, %v3563
        %v3566 = vunpack.c.l.s4 1966171168
        %v3567 = vunpack.c.0.s8 %v3566
        %v3568 = vlaneseq
        %v3569 = vshrl.u32 %v3568, 7
        %v3570 = vsub.s32 %v3567, %v3569
        %v3571 = vrot.slane %v3557, %v3570
        %v3572 = vcombine.high %v3564, %v3564
        %v3573 = vcombine.high %v3571, %v3571
        %v3574 = vlaneseq
        %v3575 = vshrl.u32 %v3574, 7
        %v3576 = vsub.s32 0, %v3575
        %v3577 = vrot.slane %v3564, %v3576
        %v3578 = vlaneseq
        %v3579 = vshrl.u32 %v3578, 7
        %v3580 = vsub.s32 0, %v3579
        %v3581 = vrot.slane %v3571, %v3580
        %v3582 = vlaneseq
        %v3583 = vshrl.u32 %v3582, 7
        %v3584 = vsub.s32 0, %v3583
        %v3585 = vrot.slane %v3572, %v3584
        %v3586 = vlaneseq
        %v3587 = vshrl.u32 %v3586, 7
        %v3588 = vsub.s32 0, %v3587
        %v3589 = vrot.slane %v3573, %v3588
        %v3594 = vmul.f32 %v3294, %v3577
        %v3595 = vmul.f32 %v3297, %v3577
        %v3596 = vmul.f32 %v3302, %v3577
        %v3597 = vmul.f32 %v3305, %v3577
        %v3598 = vmul.f32 %v3294, %v3581
        %v3599 = vmul.f32 %v3297, %v3581
        %v3600 = vmul.f32 %v3302, %v3581
        %v3601 = vmul.f32 %v3305, %v3581
        %v3602 = vmul.f32 %v3294, %v3585
        %v3603 = vmul.f32 %v3297, %v3585
        %v3604 = vmul.f32 %v3302, %v3585
        %v3605 = vmul.f32 %v3305, %v3585
        %v3606 = vmul.f32 %v3294, %v3589
        %v3607 = vmul.f32 %v3297, %v3589
        %v3608 = vmul.f32 %v3302, %v3589
        %v3609 = vmul.f32 %v3305, %v3589
        %v3610 = vpack.c.bf16 %v3595, %v3594
        %v3611 = vpack.c.bf16 %v3597, %v3596
        %v3612 = vpack.c.bf16 %v3599, %v3598
        %v3613 = vpack.c.bf16 %v3601, %v3600
        %v3614 = vpack.c.bf16 %v3603, %v3602
        %v3615 = vpack.c.bf16 %v3605, %v3604
        %v3616 = vpack.c.bf16 %v3607, %v3606
        %v3617 = vpack.c.bf16 %v3609, %v3608
        %v3618 = vpack.c.bf16 %v3417, %v3414
        %v3619 = vpack.c.bf16 %v3425, %v3422
        %v3620 = vld [vmem:[%s13] sm:$0xff]
        %v3621 = vld [vmem:[%s13 + $0x8] sm:$0xff]
        %v3622 = vld [vmem:[%s13 + $0x10] sm:$0xff]
        %v3623 = vld [vmem:[%s13 + $0x18] sm:$0xff]
        %v3624 = vld [vmem:[%s13 + $0x20] sm:$0xff]
        %v3625 = vld [vmem:[%s13 + $0x28] sm:$0xff]
        %v3626 = vld [vmem:[%s13 + $0x30] sm:$0xff]
        %v3627 = vld [vmem:[%s13 + $0x38] sm:$0xff]
        %v3628 = vld [vmem:[%s13 + $0x40] sm:$0xff]
        %v3629 = vld [vmem:[%s13 + $0x48] sm:$0xff]
        %v3630 = vld [vmem:[%s13 + $0x50] sm:$0xff]
        %v3631 = vld [vmem:[%s13 + $0x58] sm:$0xff]
        %v3632 = vld [vmem:[%s13 + $0x60] sm:$0xff]
        %v3633 = vld [vmem:[%s13 + $0x68] sm:$0xff]
        %v3634 = vld [vmem:[%s13 + $0x70] sm:$0xff]
        %v3635 = vld [vmem:[%s13 + $0x78] sm:$0xff]
        %3636 = vmatprep.subr.bf16.mxu0 0
        %3637 = vmatpush1.bf16.xpose.msra.mxu0 %v3618
        %3638 = vmatprep.subr.bf16.mxu0 0
        %3639 = vmatpush1.bf16.xpose.msra.mxu0 %v3619
        %3640 = vmatprep.subr.bf16.mxu0 0
        %3641 = vmatpush1.bf16.xpose.msra.mxu0 0
        %3642 = vmatprep.subr.bf16.mxu0 0
        %3643 = vmatpush1.bf16.xpose.msra.mxu0 0
        %3644 = vmatprep.subr.bf16.mxu0 0
        %3645 = vmatpush1.bf16.xpose.msra.mxu0 0
        %3646 = vmatprep.subr.bf16.mxu0 0
        %3647 = vmatpush1.bf16.xpose.msra.mxu0 0
        %3648 = vmatprep.subr.bf16.mxu0 0
        %3649 = vmatpush1.bf16.xpose.msra.mxu0 0
        %3650 = vmatprep.subr.bf16.mxu0 0
        %3651 = vmatpush1.bf16.xpose.msra.mxu0 0
        %3652 = vmatprep.subr.bf16.mxu0 0
        %3653 = vmatpush1.bf16.xpose.msra.mxu0 0
        %3654 = vmatprep.subr.bf16.mxu0 0
        %3655 = vmatpush1.bf16.xpose.msra.mxu0 0
        %3656 = vmatprep.subr.bf16.mxu0 0
        %3657 = vmatpush1.bf16.xpose.msra.mxu0 0
        %3658 = vmatprep.subr.bf16.mxu0 0
        %3659 = vmatpush1.bf16.xpose.msra.mxu0 0
        %3660 = vmatprep.subr.bf16.mxu0 0
        %3661 = vmatpush1.bf16.xpose.msra.mxu0 0
        %3662 = vmatprep.subr.bf16.mxu0 0
        %3663 = vmatpush1.bf16.xpose.msra.mxu0 0
        %3664 = vmatprep.subr.bf16.mxu0 0
        %3665 = vmatpush1.bf16.xpose.msra.mxu0 0
        %3666 = vmatprep.subr.bf16.mxu0 0
        %3667 = vmatpush1.bf16.xpose.msra.mxu0 0
        %3668 = vmatprep.mubr.bf16.mxu0 0
        %3669 = vmatmul.mubr.bf16.gmra.mrb[0].mxu0 %v3610
        %v3670 = vpop.f32.mrb[0].mxu0
        %v3671 = vadd.f32 %v3620, %v3670
        %v3672 = vpop.f32.mrb[0].mxu0
        %v3673 = vpop.f32.mrb[0].mxu0
        %v3674 = vadd.f32 %v3621, %v3673
        %v3675 = vpop.f32.mrb[0].mxu0
        %3676 = vmatprep.mubr.bf16.mxu0 0
        %3677 = vmatmul.mubr.bf16.gmra.mrb[0].mxu0 %v3611
        %v3678 = vpop.f32.mrb[0].mxu0
        %v3679 = vadd.f32 %v3622, %v3678
        %v3680 = vpop.f32.mrb[0].mxu0
        %v3681 = vpop.f32.mrb[0].mxu0
        %v3682 = vadd.f32 %v3623, %v3681
        %v3683 = vpop.f32.mrb[0].mxu0
        %3684 = vmatprep.mubr.bf16.mxu0 0
        %3685 = vmatmul.mubr.bf16.gmra.mrb[0].mxu0 %v3612
        %v3686 = vpop.f32.mrb[0].mxu0
        %v3687 = vadd.f32 %v3624, %v3686
        %v3688 = vpop.f32.mrb[0].mxu0
        %v3689 = vpop.f32.mrb[0].mxu0
        %v3690 = vadd.f32 %v3625, %v3689
        %v3691 = vpop.f32.mrb[0].mxu0
        %3692 = vmatprep.mubr.bf16.mxu0 0
        %3693 = vmatmul.mubr.bf16.gmra.mrb[0].mxu0 %v3613
        %v3694 = vpop.f32.mrb[0].mxu0
        %v3695 = vadd.f32 %v3626, %v3694
        %v3696 = vpop.f32.mrb[0].mxu0
        %v3697 = vpop.f32.mrb[0].mxu0
        %v3698 = vadd.f32 %v3627, %v3697
        %v3699 = vpop.f32.mrb[0].mxu0
        %3700 = vmatprep.mubr.bf16.mxu0 0
        %3701 = vmatmul.mubr.bf16.gmra.mrb[0].mxu0 %v3614
        %v3702 = vpop.f32.mrb[0].mxu0
        %v3703 = vadd.f32 %v3628, %v3702
        %v3704 = vpop.f32.mrb[0].mxu0
        %v3705 = vpop.f32.mrb[0].mxu0
        %v3706 = vadd.f32 %v3629, %v3705
        %v3707 = vpop.f32.mrb[0].mxu0
        %3708 = vmatprep.mubr.bf16.mxu0 0
        %3709 = vmatmul.mubr.bf16.gmra.mrb[0].mxu0 %v3615
        %v3710 = vpop.f32.mrb[0].mxu0
        %v3711 = vadd.f32 %v3630, %v3710
        %v3712 = vpop.f32.mrb[0].mxu0
        %v3713 = vpop.f32.mrb[0].mxu0
        %v3714 = vadd.f32 %v3631, %v3713
        %v3715 = vpop.f32.mrb[0].mxu0
        %3716 = vmatprep.mubr.bf16.mxu0 0
        %3717 = vmatmul.mubr.bf16.gmra.mrb[0].mxu0 %v3616
        %v3718 = vpop.f32.mrb[0].mxu0
        %v3719 = vadd.f32 %v3632, %v3718
        %v3720 = vpop.f32.mrb[0].mxu0
        %v3721 = vpop.f32.mrb[0].mxu0
        %v3722 = vadd.f32 %v3633, %v3721
        %v3723 = vpop.f32.mrb[0].mxu0
        %3724 = vmatprep.mubr.bf16.mxu0 0
        %3725 = vmatmul.mubr.bf16.gmra.mrb[0].mxu0 %v3617
        %v3726 = vpop.f32.mrb[0].mxu0
        %v3727 = vadd.f32 %v3634, %v3726
        %v3728 = vpop.f32.mrb[0].mxu0
        %v3729 = vpop.f32.mrb[0].mxu0
        %v3730 = vadd.f32 %v3635, %v3729
        %v3731 = vpop.f32.mrb[0].mxu0
        %3732 = vdwg.mxu0
        %vm3733 = vcmask 261120
        %v3734 = vsel %vm3733, %v3671, -inf
        %3735 = vmax.xlane.f32.xlu0 %v3734
        %v3736 = vpop.xlane.xlu0 %3735
        %v3737 = vsel %vm3733, %v3674, -inf
        %3738 = vmax.xlane.f32.xlu0 %v3737
        %v3739 = vpop.xlane.xlu0 %3738
        %v3740 = vsel %vm3733, %v3679, -inf
        %3741 = vmax.xlane.f32.xlu0 %v3740
        %v3742 = vpop.xlane.xlu0 %3741
        %v3743 = vsel %vm3733, %v3682, -inf
        %3744 = vmax.xlane.f32.xlu0 %v3743
        %v3745 = vpop.xlane.xlu0 %3744
        %v3746 = vsel %vm3733, %v3687, -inf
        %3747 = vmax.xlane.f32.xlu0 %v3746
        %v3748 = vpop.xlane.xlu0 %3747
        %v3749 = vsel %vm3733, %v3690, -inf
        %3750 = vmax.xlane.f32.xlu0 %v3749
        %v3751 = vpop.xlane.xlu0 %3750
        %v3752 = vsel %vm3733, %v3695, -inf
        %3753 = vmax.xlane.f32.xlu0 %v3752
        %v3754 = vpop.xlane.xlu0 %3753
        %v3755 = vsel %vm3733, %v3698, -inf
        %3756 = vmax.xlane.f32.xlu0 %v3755
        %v3757 = vpop.xlane.xlu0 %3756
        %v3758 = vsel %vm3733, %v3703, -inf
        %3759 = vmax.xlane.f32.xlu0 %v3758
        %v3760 = vpop.xlane.xlu0 %3759
        %v3761 = vsel %vm3733, %v3706, -inf
        %3762 = vmax.xlane.f32.xlu0 %v3761
        %v3763 = vpop.xlane.xlu0 %3762
        %v3764 = vsel %vm3733, %v3711, -inf
        %3765 = vmax.xlane.f32.xlu0 %v3764
        %v3766 = vpop.xlane.xlu0 %3765
        %v3767 = vsel %vm3733, %v3714, -inf
        %3768 = vmax.xlane.f32.xlu0 %v3767
        %v3769 = vpop.xlane.xlu0 %3768
        %v3770 = vsel %vm3733, %v3719, -inf
        %3771 = vmax.xlane.f32.xlu0 %v3770
        %v3772 = vpop.xlane.xlu0 %3771
        %v3773 = vsel %vm3733, %v3722, -inf
        %3774 = vmax.xlane.f32.xlu0 %v3773
        %v3775 = vpop.xlane.xlu0 %3774
        %v3776 = vsel %vm3733, %v3727, -inf
        %3777 = vmax.xlane.f32.xlu0 %v3776
        %v3778 = vpop.xlane.xlu0 %3777
        %v3779 = vsel %vm3733, %v3730, -inf
        %3780 = vmax.xlane.f32.xlu0 %v3779
        %v3781 = vpop.xlane.xlu0 %3780
        %v3782 = vsub.f32 %v3671, %v3736
        %v3783 = vsub.f32 %v3674, %v3739
        %v3784 = vsub.f32 %v3679, %v3742
        %v3785 = vsub.f32 %v3682, %v3745
        %v3786 = vsub.f32 %v3687, %v3748
        %v3787 = vsub.f32 %v3690, %v3751
        %v3788 = vsub.f32 %v3695, %v3754
        %v3789 = vsub.f32 %v3698, %v3757
        %v3790 = vsub.f32 %v3703, %v3760
        %v3791 = vsub.f32 %v3706, %v3763
        %v3792 = vsub.f32 %v3711, %v3766
        %v3793 = vsub.f32 %v3714, %v3769
        %v3794 = vsub.f32 %v3719, %v3772
        %v3795 = vsub.f32 %v3722, %v3775
        %v3796 = vsub.f32 %v3727, %v3778
        %v3797 = vsub.f32 %v3730, %v3781
        %v3798 = vmul.f32 %v3782, 1.442695
        %v3799 = vpow.pop %v3798
        %v3800 = vmul.f32 %v3783, 1.442695
        %v3801 = vpow.pop %v3800
        %v3802 = vmul.f32 %v3784, 1.442695
        %v3803 = vpow.pop %v3802
        %v3804 = vmul.f32 %v3785, 1.442695
        %v3805 = vpow.pop %v3804
        %v3806 = vmul.f32 %v3786, 1.442695
        %v3807 = vpow.pop %v3806
        %v3808 = vmul.f32 %v3787, 1.442695
        %v3809 = vpow.pop %v3808
        %v3810 = vmul.f32 %v3788, 1.442695
        %v3811 = vpow.pop %v3810
        %v3812 = vmul.f32 %v3789, 1.442695
        %v3813 = vpow.pop %v3812
        %v3814 = vmul.f32 %v3790, 1.442695
        %v3815 = vpow.pop %v3814
        %v3816 = vmul.f32 %v3791, 1.442695
        %v3817 = vpow.pop %v3816
        %v3818 = vmul.f32 %v3792, 1.442695
        %v3819 = vpow.pop %v3818
        %v3820 = vmul.f32 %v3793, 1.442695
        %v3821 = vpow.pop %v3820
        %v3822 = vmul.f32 %v3794, 1.442695
        %v3823 = vpow.pop %v3822
        %v3824 = vmul.f32 %v3795, 1.442695
        %v3825 = vpow.pop %v3824
        %v3826 = vmul.f32 %v3796, 1.442695
        %v3827 = vpow.pop %v3826
        %v3828 = vmul.f32 %v3797, 1.442695
        %v3829 = vpow.pop %v3828
        %v3830 = vsel %vm3733, %v3799, 0.0
        %3831 = vadd.xlane.f32.xlu0 %v3830
        %v3832 = vpop.xlane.xlu0 %3831
        %v3833 = vsel %vm3733, %v3801, 0.0
        %3834 = vadd.xlane.f32.xlu0 %v3833
        %v3835 = vpop.xlane.xlu0 %3834
        %v3836 = vsel %vm3733, %v3803, 0.0
        %3837 = vadd.xlane.f32.xlu0 %v3836
        %v3838 = vpop.xlane.xlu0 %3837
        %v3839 = vsel %vm3733, %v3805, 0.0
        %3840 = vadd.xlane.f32.xlu0 %v3839
        %v3841 = vpop.xlane.xlu0 %3840
        %v3842 = vsel %vm3733, %v3807, 0.0
        %3843 = vadd.xlane.f32.xlu0 %v3842
        %v3844 = vpop.xlane.xlu0 %3843
        %v3845 = vsel %vm3733, %v3809, 0.0
        %3846 = vadd.xlane.f32.xlu0 %v3845
        %v3847 = vpop.xlane.xlu0 %3846
        %v3848 = vsel %vm3733, %v3811, 0.0
        %3849 = vadd.xlane.f32.xlu0 %v3848
        %v3850 = vpop.xlane.xlu0 %3849
        %v3851 = vsel %vm3733, %v3813, 0.0
        %3852 = vadd.xlane.f32.xlu0 %v3851
        %v3853 = vpop.xlane.xlu0 %3852
        %v3854 = vsel %vm3733, %v3815, 0.0
        %3855 = vadd.xlane.f32.xlu0 %v3854
        %v3856 = vpop.xlane.xlu0 %3855
        %v3857 = vsel %vm3733, %v3817, 0.0
        %3858 = vadd.xlane.f32.xlu0 %v3857
        %v3859 = vpop.xlane.xlu0 %3858
        %v3860 = vsel %vm3733, %v3819, 0.0
        %3861 = vadd.xlane.f32.xlu0 %v3860
        %v3862 = vpop.xlane.xlu0 %3861
        %v3863 = vsel %vm3733, %v3821, 0.0
        %3864 = vadd.xlane.f32.xlu0 %v3863
        %v3865 = vpop.xlane.xlu0 %3864
        %v3866 = vsel %vm3733, %v3823, 0.0
        %3867 = vadd.xlane.f32.xlu0 %v3866
        %v3868 = vpop.xlane.xlu0 %3867
        %v3869 = vsel %vm3733, %v3825, 0.0
        %3870 = vadd.xlane.f32.xlu0 %v3869
        %v3871 = vpop.xlane.xlu0 %3870
        %v3872 = vsel %vm3733, %v3827, 0.0
        %3873 = vadd.xlane.f32.xlu0 %v3872
        %v3874 = vpop.xlane.xlu0 %3873
        %v3875 = vsel %vm3733, %v3829, 0.0
        %3876 = vadd.xlane.f32.xlu0 %v3875
        %v3877 = vpop.xlane.xlu0 %3876
        %v3878 = vrcp.pop %v3832
        %v3879 = vrcp.pop %v3835
        %v3880 = vrcp.pop %v3838
        %v3881 = vrcp.pop %v3841
        %v3882 = vrcp.pop %v3844
        %v3883 = vrcp.pop %v3847
        %v3884 = vrcp.pop %v3850
        %v3885 = vrcp.pop %v3853
        %v3886 = vrcp.pop %v3856
        %v3887 = vrcp.pop %v3859
        %v3888 = vrcp.pop %v3862
        %v3889 = vrcp.pop %v3865
        %v3890 = vrcp.pop %v3868
        %v3891 = vrcp.pop %v3871
        %v3892 = vrcp.pop %v3874
        %v3893 = vrcp.pop %v3877
        %v3894 = vmul.f32 %v3799, %v3878
        %v3895 = vmul.f32 %v3801, %v3879
        %v3896 = vmul.f32 %v3803, %v3880
        %v3897 = vmul.f32 %v3805, %v3881
        %v3898 = vmul.f32 %v3807, %v3882
        %v3899 = vmul.f32 %v3809, %v3883
        %v3900 = vmul.f32 %v3811, %v3884
        %v3901 = vmul.f32 %v3813, %v3885
        %v3902 = vmul.f32 %v3815, %v3886
        %v3903 = vmul.f32 %v3817, %v3887
        %v3904 = vmul.f32 %v3819, %v3888
        %v3905 = vmul.f32 %v3821, %v3889
        %v3906 = vmul.f32 %v3823, %v3890
        %v3907 = vmul.f32 %v3825, %v3891
        %v3908 = vmul.f32 %v3827, %v3892
        %v3909 = vmul.f32 %v3829, %v3893
        %v3910 = vpack.c.bf16 %v3895, %v3894
        %v3911 = vpack.c.bf16 %v3897, %v3896
        %v3912 = vpack.c.bf16 %v3899, %v3898
        %v3913 = vpack.c.bf16 %v3901, %v3900
        %v3914 = vpack.c.bf16 %v3903, %v3902
        %v3915 = vpack.c.bf16 %v3905, %v3904
        %v3916 = vpack.c.bf16 %v3907, %v3906
        %v3917 = vpack.c.bf16 %v3909, %v3908
        %v3918 = vpack.c.bf16 %v3537, %v3534
        %v3919 = vpack.c.bf16 %v3545, %v3542
        %v3921 = vsel %vm3733, %v3910, 0
        %v3924 = vsel %vm3733, %v3911, 0
        %v3927 = vsel %vm3733, %v3912, 0
        %v3930 = vsel %vm3733, %v3913, 0
        %v3933 = vsel %vm3733, %v3914, 0
        %v3936 = vsel %vm3733, %v3915, 0
        %v3939 = vsel %vm3733, %v3916, 0
        %v3942 = vsel %vm3733, %v3917, 0
        %3944 = vmatprep.subr.bf16.mxu0 0
        %3945 = vmatpush1.bf16.msra.mxu0 %v3918
        %3946 = vmatprep.subr.bf16.mxu0 0
        %3947 = vmatpush1.bf16.msra.mxu0 %v3919
        %3948 = vmatprep.subr.bf16.mxu0 0
        %3949 = vmatpush1.bf16.msra.mxu0 0
        %3950 = vmatprep.subr.bf16.mxu0 0
        %3951 = vmatpush1.bf16.msra.mxu0 0
        %3952 = vmatprep.subr.bf16.mxu0 0
        %3953 = vmatpush1.bf16.msra.mxu0 0
        %3954 = vmatprep.subr.bf16.mxu0 0
        %3955 = vmatpush1.bf16.msra.mxu0 0
        %3956 = vmatprep.subr.bf16.mxu0 0
        %3957 = vmatpush1.bf16.msra.mxu0 0
        %3958 = vmatprep.subr.bf16.mxu0 0
        %3959 = vmatpush1.bf16.msra.mxu0 0
        %3960 = vmatprep.subr.bf16.mxu0 0
        %3961 = vmatpush1.bf16.msra.mxu0 0
        %3962 = vmatprep.subr.bf16.mxu0 0
        %3963 = vmatpush1.bf16.msra.mxu0 0
        %3964 = vmatprep.subr.bf16.mxu0 0
        %3965 = vmatpush1.bf16.msra.mxu0 0
        %3966 = vmatprep.subr.bf16.mxu0 0
        %3967 = vmatpush1.bf16.msra.mxu0 0
        %3968 = vmatprep.subr.bf16.mxu0 0
        %3969 = vmatpush1.bf16.msra.mxu0 0
        %3970 = vmatprep.subr.bf16.mxu0 0
        %3971 = vmatpush1.bf16.msra.mxu0 0
        %3972 = vmatprep.subr.bf16.mxu0 0
        %3973 = vmatpush1.bf16.msra.mxu0 0
        %3974 = vmatprep.subr.bf16.mxu0 0
        %3975 = vmatpush1.bf16.msra.mxu0 0
        %3976 = vmatprep.mubr.bf16.mxu0 0
        %3977 = vmatmul.mubr.bf16.gmra.mrb[0].mxu0 %v3921
        %v3978 = vpop.f32.mrb[0].mxu0
        %v3979 = vadd.f32 0.0, %v3978
        %v3980 = vpop.f32.mrb[0].mxu0
        %v3981 = vpop.f32.mrb[0].mxu0
        %v3982 = vadd.f32 0.0, %v3981
        %v3983 = vpop.f32.mrb[0].mxu0
        %3984 = vmatprep.mubr.bf16.mxu0 0
        %3985 = vmatmul.mubr.bf16.gmra.mrb[0].mxu0 %v3924
        %v3986 = vpop.f32.mrb[0].mxu0
        %v3987 = vadd.f32 0.0, %v3986
        %v3988 = vpop.f32.mrb[0].mxu0
        %v3989 = vpop.f32.mrb[0].mxu0
        %v3990 = vadd.f32 0.0, %v3989
        %v3991 = vpop.f32.mrb[0].mxu0
        %3992 = vmatprep.mubr.bf16.mxu0 0
        %3993 = vmatmul.mubr.bf16.gmra.mrb[0].mxu0 %v3927
        %v3994 = vpop.f32.mrb[0].mxu0
        %v3995 = vadd.f32 0.0, %v3994
        %v3996 = vpop.f32.mrb[0].mxu0
        %v3997 = vpop.f32.mrb[0].mxu0
        %v3998 = vadd.f32 0.0, %v3997
        %v3999 = vpop.f32.mrb[0].mxu0
        %4000 = vmatprep.mubr.bf16.mxu0 0
        %4001 = vmatmul.mubr.bf16.gmra.mrb[0].mxu0 %v3930
        %v4002 = vpop.f32.mrb[0].mxu0
        %v4003 = vadd.f32 0.0, %v4002
        %v4004 = vpop.f32.mrb[0].mxu0
        %v4005 = vpop.f32.mrb[0].mxu0
        %v4006 = vadd.f32 0.0, %v4005
        %v4007 = vpop.f32.mrb[0].mxu0
        %4008 = vmatprep.mubr.bf16.mxu0 0
        %4009 = vmatmul.mubr.bf16.gmra.mrb[0].mxu0 %v3933
        %v4010 = vpop.f32.mrb[0].mxu0
        %v4011 = vadd.f32 0.0, %v4010
        %v4012 = vpop.f32.mrb[0].mxu0
        %v4013 = vpop.f32.mrb[0].mxu0
        %v4014 = vadd.f32 0.0, %v4013
        %v4015 = vpop.f32.mrb[0].mxu0
        %4016 = vmatprep.mubr.bf16.mxu0 0
        %4017 = vmatmul.mubr.bf16.gmra.mrb[0].mxu0 %v3936
        %v4018 = vpop.f32.mrb[0].mxu0
        %v4019 = vadd.f32 0.0, %v4018
        %v4020 = vpop.f32.mrb[0].mxu0
        %v4021 = vpop.f32.mrb[0].mxu0
        %v4022 = vadd.f32 0.0, %v4021
        %v4023 = vpop.f32.mrb[0].mxu0
        %4024 = vmatprep.mubr.bf16.mxu0 0
        %4025 = vmatmul.mubr.bf16.gmra.mrb[0].mxu0 %v3939
        %v4026 = vpop.f32.mrb[0].mxu0
        %v4027 = vadd.f32 0.0, %v4026
        %v4028 = vpop.f32.mrb[0].mxu0
        %v4029 = vpop.f32.mrb[0].mxu0
        %v4030 = vadd.f32 0.0, %v4029
        %v4031 = vpop.f32.mrb[0].mxu0
        %4032 = vmatprep.mubr.bf16.mxu0 0
        %4033 = vmatmul.mubr.bf16.gmra.mrb[0].mxu0 %v3942
        %v4034 = vpop.f32.mrb[0].mxu0
        %v4035 = vadd.f32 0.0, %v4034
        %v4036 = vpop.f32.mrb[0].mxu0
        %v4037 = vpop.f32.mrb[0].mxu0
        %v4038 = vadd.f32 0.0, %v4037
        %v4039 = vpop.f32.mrb[0].mxu0
        %4040 = vdwg.mxu0
        %v4041 = vmul.f32 %v3979, %v3577
        %v4042 = vmul.f32 %v3982, %v3577
        %v4043 = vmul.f32 %v3987, %v3577
        %v4044 = vmul.f32 %v3990, %v3577
        %v4045 = vmul.f32 %v3995, %v3581
        %v4046 = vmul.f32 %v3998, %v3581
        %v4047 = vmul.f32 %v4003, %v3581
        %v4048 = vmul.f32 %v4006, %v3581
        %v4049 = vmul.f32 %v4011, %v3585
        %v4050 = vmul.f32 %v4014, %v3585
        %v4051 = vmul.f32 %v4019, %v3585
        %v4052 = vmul.f32 %v4022, %v3585
        %v4053 = vmul.f32 %v4027, %v3589
        %v4054 = vmul.f32 %v4030, %v3589
        %v4055 = vmul.f32 %v4035, %v3589
        %v4056 = vmul.f32 %v4038, %v3589
        %v4057 = vadd.f32 %v4041, %v4045
        %v4058 = vadd.f32 %v4057, %v4049
        %v4059 = vadd.f32 %v4058, %v4053
        %v4060 = vadd.f32 %v4042, %v4046
        %v4061 = vadd.f32 %v4060, %v4050
        %v4062 = vadd.f32 %v4061, %v4054
        %v4063 = vadd.f32 %v4043, %v4047
        %v4064 = vadd.f32 %v4063, %v4051
        %v4065 = vadd.f32 %v4064, %v4055
        %v4066 = vadd.f32 %v4044, %v4048
        %v4067 = vadd.f32 %v4066, %v4052
        %v4068 = vadd.f32 %v4067, %v4056
        %v4069 = vld [vmem:[%s2212] sm:$0xf]
        %v4070 = vld [vmem:[%s2212 + $0x4] sm:$0xf]
        %v4071 = vld [vmem:[%s2212 + $0x8] sm:$0xf]
        %v4072 = vld [vmem:[%s2212 + $0xc] sm:$0xf]
        %v4073 = vld [vmem:[%s2212 + $0x10] sm:$0xf]
        %v4074 = vld [vmem:[%s2212 + $0x14] sm:$0xf]
        %v4075 = vld [vmem:[%s2212 + $0x18] sm:$0xf]
        %v4076 = vld [vmem:[%s2212 + $0x1c] sm:$0xf]
        %v4077 = vld [vmem:[%s2212 + $0x20] sm:$0xf]
        %v4078 = vld [vmem:[%s2212 + $0x24] sm:$0xf]
        %v4079 = vld [vmem:[%s2212 + $0x28] sm:$0xf]
        %v4080 = vld [vmem:[%s2212 + $0x2c] sm:$0xf]
        %v4081 = vld [vmem:[%s2212 + $0x30] sm:$0xf]
        %v4082 = vld [vmem:[%s2212 + $0x34] sm:$0xf]
        %v4083 = vld [vmem:[%s2212 + $0x38] sm:$0xf]
        %v4084 = vld [vmem:[%s2212 + $0x3c] sm:$0xf]
        %v4085 = vld [vmem:[%s1926] sm:$0x1]
        %v4086 = vpack.c.bf16 %v4062, %v4059
        %v4087 = vpack.c.bf16 %v4068, %v4065
        %v4089 = vlaneseq
        %v4090 = vshrl.u32 %v4089, 7
        %v4091 = vsub.s32 0, %v4090
        %v4092 = vrot.slane %v4085, %v4091
        %v4110 = vunpack.c.l.b16 %v4069
        %v4111 = vunpack.c.l.b16 %v4070
        %v4112 = vunpack.c.l.b16 %v4071
        %v4113 = vunpack.c.l.b16 %v4072
        %v4114 = vunpack.c.l.b16 %v4073
        %v4115 = vunpack.c.l.b16 %v4074
        %v4116 = vunpack.c.l.b16 %v4075
        %v4117 = vunpack.c.l.b16 %v4076
        %v4118 = vunpack.c.l.b16 %v4077
        %v4119 = vunpack.c.l.b16 %v4078
        %v4120 = vunpack.c.l.b16 %v4079
        %v4121 = vunpack.c.l.b16 %v4080
        %v4122 = vunpack.c.l.b16 %v4081
        %v4123 = vunpack.c.l.b16 %v4082
        %v4124 = vunpack.c.l.b16 %v4083
        %v4125 = vunpack.c.l.b16 %v4084
        %v4126 = vpack.c.b16 %v4111, %v4110
        %v4127 = vpack.c.b16 %v4113, %v4112
        %v4128 = vpack.c.b16 %v4115, %v4114
        %v4129 = vpack.c.b16 %v4117, %v4116
        %v4130 = vpack.c.b16 %v4119, %v4118
        %v4131 = vpack.c.b16 %v4121, %v4120
        %v4132 = vpack.c.b16 %v4123, %v4122
        %v4133 = vpack.c.b16 %v4125, %v4124
        %4142 = vmatprep.subr.bf16.mxu0 0
        %4143 = vmatpush1.bf16.msra.mxu0 %v4126
        %4144 = vmatprep.subr.bf16.mxu0 0
        %4145 = vmatpush1.bf16.msra.mxu0 %v4127
        %4146 = vmatprep.subr.bf16.mxu0 0
        %4147 = vmatpush1.bf16.msra.mxu0 %v4128
        %4148 = vmatprep.subr.bf16.mxu0 0
        %4149 = vmatpush1.bf16.msra.mxu0 %v4129
        %4150 = vmatprep.subr.bf16.mxu0 0
        %4151 = vmatpush1.bf16.msra.mxu0 %v4130
        %4152 = vmatprep.subr.bf16.mxu0 0
        %4153 = vmatpush1.bf16.msra.mxu0 %v4131
        %4154 = vmatprep.subr.bf16.mxu0 0
        %4155 = vmatpush1.bf16.msra.mxu0 %v4132
        %4156 = vmatprep.subr.bf16.mxu0 0
        %4157 = vmatpush1.bf16.msra.mxu0 %v4133
        %4158 = vmatprep.subr.bf16.mxu0 0
        %4159 = vmatpush1.bf16.msra.mxu0 0
        %4160 = vmatprep.subr.bf16.mxu0 0
        %4161 = vmatpush1.bf16.msra.mxu0 0
        %4162 = vmatprep.subr.bf16.mxu0 0
        %4163 = vmatpush1.bf16.msra.mxu0 0
        %4164 = vmatprep.subr.bf16.mxu0 0
        %4165 = vmatpush1.bf16.msra.mxu0 0
        %4166 = vmatprep.subr.bf16.mxu0 0
        %4167 = vmatpush1.bf16.msra.mxu0 0
        %4168 = vmatprep.subr.bf16.mxu0 0
        %4169 = vmatpush1.bf16.msra.mxu0 0
        %4170 = vmatprep.subr.bf16.mxu0 0
        %4171 = vmatpush1.bf16.msra.mxu0 0
        %4172 = vmatprep.subr.bf16.mxu0 0
        %4173 = vmatpush1.bf16.msra.mxu0 0
        %4174 = vmatprep.mubr.bf16.mxu0 0
        %4175 = vmatmul.mubr.bf16.gmra.mrb[0].mxu0 %v4086
        %v4176 = vpop.f32.mrb[0].mxu0
        %v4177 = vadd.f32 %v4092, %v4176
        %v4178 = vpop.f32.mrb[0].mxu0
        %v4179 = vpop.f32.mrb[0].mxu0
        %v4180 = vadd.f32 %v4092, %v4179
        %v4181 = vpop.f32.mrb[0].mxu0
        %4182 = vmatprep.mubr.bf16.mxu0 0
        %4183 = vmatmul.mubr.bf16.gmra.mrb[0].mxu0 %v4087
        %v4184 = vpop.f32.mrb[0].mxu0
        %v4185 = vadd.f32 %v4092, %v4184
        %v4186 = vpop.f32.mrb[0].mxu0
        %v4187 = vpop.f32.mrb[0].mxu0
        %v4188 = vadd.f32 %v4092, %v4187
        %v4189 = vpop.f32.mrb[0].mxu0
        %4190 = vdwg.mxu0
        %v4191 = vadd.f32 %v3104, %v4177
        %v4192 = vadd.f32 %v3105, %v4180
        %v4193 = vadd.f32 %v3106, %v4185
        %v4194 = vadd.f32 %v3107, %v4188
        %v4195 = vld [vmem:[%s1934] sm:$0x1]
        %v4196 = vld [vmem:[%s1942] sm:$0x1]
        %4197 = vadd.xlane.f32.xlu0 %v4191
        %v4198 = vpop.xlane.xlu0 %4197
        %4199 = vadd.xlane.f32.xlu0 %v4192
        %v4200 = vpop.xlane.xlu0 %4199
        %4201 = vadd.xlane.f32.xlu0 %v4193
        %v4202 = vpop.xlane.xlu0 %4201
        %4203 = vadd.xlane.f32.xlu0 %v4194
        %v4204 = vpop.xlane.xlu0 %4203
        %v4205 = vmul.f32 %v4198, 0.03125
        %v4206 = vmul.f32 %v4200, 0.03125
        %v4207 = vmul.f32 %v4202, 0.03125
        %v4208 = vmul.f32 %v4204, 0.03125
        %v4209 = vmul.f32 %v4191, %v4191
        %v4210 = vmul.f32 %v4192, %v4192
        %v4211 = vmul.f32 %v4193, %v4193
        %v4212 = vmul.f32 %v4194, %v4194
        %4213 = vadd.xlane.f32.xlu0 %v4209
        %v4214 = vpop.xlane.xlu0 %4213
        %4215 = vadd.xlane.f32.xlu0 %v4210
        %v4216 = vpop.xlane.xlu0 %4215
        %4217 = vadd.xlane.f32.xlu0 %v4211
        %v4218 = vpop.xlane.xlu0 %4217
        %4219 = vadd.xlane.f32.xlu0 %v4212
        %v4220 = vpop.xlane.xlu0 %4219
        %v4221 = vmul.f32 %v4214, 0.03125
        %v4222 = vmul.f32 %v4216, 0.03125
        %v4223 = vmul.f32 %v4218, 0.03125
        %v4224 = vmul.f32 %v4220, 0.03125
        %v4225 = vmul.f32 %v4205, %v4205
        %v4226 = vmul.f32 %v4206, %v4206
        %v4227 = vmul.f32 %v4207, %v4207
        %v4228 = vmul.f32 %v4208, %v4208
        %v4229 = vsub.f32 %v4221, %v4225
        %v4230 = vsub.f32 %v4222, %v4226
        %v4231 = vsub.f32 %v4223, %v4227
        %v4232 = vsub.f32 %v4224, %v4228
        %v4233 = vmax.f32 %v4229, 0.0
        %v4234 = vmax.f32 %v4230, 0.0
        %v4235 = vmax.f32 %v4231, 0.0
        %v4236 = vmax.f32 %v4232, 0.0
        %v4237 = vsub.f32 %v4191, %v4205
        %v4238 = vsub.f32 %v4192, %v4206
        %v4239 = vsub.f32 %v4193, %v4207
        %v4240 = vsub.f32 %v4194, %v4208
        %v4241 = vadd.f32 %v4233, 1e-05
        %v4242 = vadd.f32 %v4234, 1e-05
        %v4243 = vadd.f32 %v4235, 1e-05
        %v4244 = vadd.f32 %v4236, 1e-05
        %v4245 = vrsqrt.pop %v4241
        %v4246 = vrsqrt.pop %v4242
        %v4247 = vrsqrt.pop %v4243
        %v4248 = vrsqrt.pop %v4244
        %v4249 = vmul.f32 %v4237, %v4245
        %v4250 = vmul.f32 %v4238, %v4246
        %v4251 = vmul.f32 %v4239, %v4247
        %v4252 = vmul.f32 %v4240, %v4248
        %v4254 = vlaneseq
        %v4255 = vshrl.u32 %v4254, 7
        %v4256 = vsub.s32 0, %v4255
        %v4257 = vrot.slane %v4195, %v4256
        %v4259 = vmul.f32 %v4249, %v4257
        %v4260 = vmul.f32 %v4250, %v4257
        %v4261 = vmul.f32 %v4251, %v4257
        %v4262 = vmul.f32 %v4252, %v4257
        %v4264 = vlaneseq
        %v4265 = vshrl.u32 %v4264, 7
        %v4266 = vsub.s32 0, %v4265
        %v4267 = vrot.slane %v4196, %v4266
        %v4269 = vadd.f32 %v4259, %v4267
        %v4270 = vadd.f32 %v4260, %v4267
        %v4271 = vadd.f32 %v4261, %v4267
        %v4272 = vadd.f32 %v4262, %v4267
        %v4273 = vld [vmem:[%s1951] sm:$0xf]
        %v4274 = vld [vmem:[%s1951 + $0x4] sm:$0xf]
        %v4275 = vld [vmem:[%s1951 + $0x8] sm:$0xf]
        %v4276 = vld [vmem:[%s1951 + $0xc] sm:$0xf]
        %v4277 = vld [vmem:[%s1951 + $0x10] sm:$0xf]
        %v4278 = vld [vmem:[%s1951 + $0x14] sm:$0xf]
        %v4279 = vld [vmem:[%s1951 + $0x18] sm:$0xf]
        %v4280 = vld [vmem:[%s1951 + $0x1c] sm:$0xf]
        %v4281 = vld [vmem:[%s1951 + $0x20] sm:$0xf]
        %v4282 = vld [vmem:[%s1951 + $0x24] sm:$0xf]
        %v4283 = vld [vmem:[%s1951 + $0x28] sm:$0xf]
        %v4284 = vld [vmem:[%s1951 + $0x2c] sm:$0xf]
        %v4285 = vld [vmem:[%s1951 + $0x30] sm:$0xf]
        %v4286 = vld [vmem:[%s1951 + $0x34] sm:$0xf]
        %v4287 = vld [vmem:[%s1951 + $0x38] sm:$0xf]
        %v4288 = vld [vmem:[%s1951 + $0x3c] sm:$0xf]
        %v4289 = vld [vmem:[%s1959] sm:$0x1]
        %v4290 = vpack.c.bf16 %v4270, %v4269
        %v4291 = vpack.c.bf16 %v4272, %v4271
        %v4293 = vlaneseq
        %v4294 = vshrl.u32 %v4293, 7
        %v4295 = vsub.s32 0, %v4294
        %v4296 = vrot.slane %v4289, %v4295
        %v4314 = vunpack.c.l.b16 %v4273
        %v4315 = vunpack.c.l.b16 %v4274
        %v4316 = vunpack.c.l.b16 %v4275
        %v4317 = vunpack.c.l.b16 %v4276
        %v4318 = vunpack.c.l.b16 %v4277
        %v4319 = vunpack.c.l.b16 %v4278
        %v4320 = vunpack.c.l.b16 %v4279
        %v4321 = vunpack.c.l.b16 %v4280
        %v4322 = vunpack.c.l.b16 %v4281
        %v4323 = vunpack.c.l.b16 %v4282
        %v4324 = vunpack.c.l.b16 %v4283
        %v4325 = vunpack.c.l.b16 %v4284
        %v4326 = vunpack.c.l.b16 %v4285
        %v4327 = vunpack.c.l.b16 %v4286
        %v4328 = vunpack.c.l.b16 %v4287
        %v4329 = vunpack.c.l.b16 %v4288
        %v4330 = vpack.c.b16 %v4315, %v4314
        %v4331 = vpack.c.b16 %v4317, %v4316
        %v4332 = vpack.c.b16 %v4319, %v4318
        %v4333 = vpack.c.b16 %v4321, %v4320
        %v4334 = vpack.c.b16 %v4323, %v4322
        %v4335 = vpack.c.b16 %v4325, %v4324
        %v4336 = vpack.c.b16 %v4327, %v4326
        %v4337 = vpack.c.b16 %v4329, %v4328
        %4346 = vmatprep.subr.bf16.mxu0 0
        %4347 = vmatpush1.bf16.msra.mxu0 %v4330
        %4348 = vmatprep.subr.bf16.mxu0 0
        %4349 = vmatpush1.bf16.msra.mxu0 %v4331
        %4350 = vmatprep.subr.bf16.mxu0 0
        %4351 = vmatpush1.bf16.msra.mxu0 %v4332
        %4352 = vmatprep.subr.bf16.mxu0 0
        %4353 = vmatpush1.bf16.msra.mxu0 %v4333
        %4354 = vmatprep.subr.bf16.mxu0 0
        %4355 = vmatpush1.bf16.msra.mxu0 %v4334
        %4356 = vmatprep.subr.bf16.mxu0 0
        %4357 = vmatpush1.bf16.msra.mxu0 %v4335
        %4358 = vmatprep.subr.bf16.mxu0 0
        %4359 = vmatpush1.bf16.msra.mxu0 %v4336
        %4360 = vmatprep.subr.bf16.mxu0 0
        %4361 = vmatpush1.bf16.msra.mxu0 %v4337
        %4362 = vmatprep.subr.bf16.mxu0 0
        %4363 = vmatpush1.bf16.msra.mxu0 0
        %4364 = vmatprep.subr.bf16.mxu0 0
        %4365 = vmatpush1.bf16.msra.mxu0 0
        %4366 = vmatprep.subr.bf16.mxu0 0
        %4367 = vmatpush1.bf16.msra.mxu0 0
        %4368 = vmatprep.subr.bf16.mxu0 0
        %4369 = vmatpush1.bf16.msra.mxu0 0
        %4370 = vmatprep.subr.bf16.mxu0 0
        %4371 = vmatpush1.bf16.msra.mxu0 0
        %4372 = vmatprep.subr.bf16.mxu0 0
        %4373 = vmatpush1.bf16.msra.mxu0 0
        %4374 = vmatprep.subr.bf16.mxu0 0
        %4375 = vmatpush1.bf16.msra.mxu0 0
        %4376 = vmatprep.subr.bf16.mxu0 0
        %4377 = vmatpush1.bf16.msra.mxu0 0
        %4378 = vmatprep.mubr.bf16.mxu0 0
        %4379 = vmatmul.mubr.bf16.gmra.mrb[0].mxu0 %v4290
        %v4380 = vpop.f32.mrb[0].mxu0
        %v4381 = vadd.f32 %v4296, %v4380
        %v4382 = vpop.f32.mrb[0].mxu0
        %v4383 = vpop.f32.mrb[0].mxu0
        %v4384 = vadd.f32 %v4296, %v4383
        %v4385 = vpop.f32.mrb[0].mxu0
        %4386 = vmatprep.mubr.bf16.mxu0 0
        %4387 = vmatmul.mubr.bf16.gmra.mrb[0].mxu0 %v4291
        %v4388 = vpop.f32.mrb[0].mxu0
        %v4389 = vadd.f32 %v4296, %v4388
        %v4390 = vpop.f32.mrb[0].mxu0
        %v4391 = vpop.f32.mrb[0].mxu0
        %v4392 = vadd.f32 %v4296, %v4391
        %v4393 = vpop.f32.mrb[0].mxu0
        %4394 = vdwg.mxu0
        %v4395 = vmul.f32 %v4381, 0.5
        %v4396 = vmul.f32 %v4384, 0.5
        %v4397 = vmul.f32 %v4389, 0.5
        %v4398 = vmul.f32 %v4392, 0.5
        %v4399 = vmul.f32 %v4381, 0.70710677
        %v4400 = vmul.f32 %v4384, 0.70710677
        %v4401 = vmul.f32 %v4389, 0.70710677
        %v4402 = vmul.f32 %v4392, 0.70710677
        %v4403 = verf.f32.pop %v4399
        %v4404 = verf.f32.pop %v4400
        %v4405 = verf.f32.pop %v4401
        %v4406 = verf.f32.pop %v4402
        %v4407 = vadd.f32 %v4403, 1.0
        %v4408 = vadd.f32 %v4404, 1.0
        %v4409 = vadd.f32 %v4405, 1.0
        %v4410 = vadd.f32 %v4406, 1.0
        %v4411 = vmul.f32 %v4395, %v4407
        %v4412 = vmul.f32 %v4396, %v4408
        %v4413 = vmul.f32 %v4397, %v4409
        %v4414 = vmul.f32 %v4398, %v4410
        %v4415 = vld [vmem:[%s1968] sm:$0xf]
        %v4416 = vld [vmem:[%s1968 + $0x4] sm:$0xf]
        %v4417 = vld [vmem:[%s1968 + $0x8] sm:$0xf]
        %v4418 = vld [vmem:[%s1968 + $0xc] sm:$0xf]
        %v4419 = vld [vmem:[%s1968 + $0x10] sm:$0xf]
        %v4420 = vld [vmem:[%s1968 + $0x14] sm:$0xf]
        %v4421 = vld [vmem:[%s1968 + $0x18] sm:$0xf]
        %v4422 = vld [vmem:[%s1968 + $0x1c] sm:$0xf]
        %v4423 = vld [vmem:[%s1968 + $0x20] sm:$0xf]
        %v4424 = vld [vmem:[%s1968 + $0x24] sm:$0xf]
        %v4425 = vld [vmem:[%s1968 + $0x28] sm:$0xf]
        %v4426 = vld [vmem:[%s1968 + $0x2c] sm:$0xf]
        %v4427 = vld [vmem:[%s1968 + $0x30] sm:$0xf]
        %v4428 = vld [vmem:[%s1968 + $0x34] sm:$0xf]
        %v4429 = vld [vmem:[%s1968 + $0x38] sm:$0xf]
        %v4430 = vld [vmem:[%s1968 + $0x3c] sm:$0xf]
        %v4431 = vld [vmem:[%s1976] sm:$0x1]
        %v4432 = vpack.c.bf16 %v4412, %v4411
        %v4433 = vpack.c.bf16 %v4414, %v4413
        %v4435 = vlaneseq
        %v4436 = vshrl.u32 %v4435, 7
        %v4437 = vsub.s32 0, %v4436
        %v4438 = vrot.slane %v4431, %v4437
        %v4456 = vunpack.c.l.b16 %v4415
        %v4457 = vunpack.c.l.b16 %v4416
        %v4458 = vunpack.c.l.b16 %v4417
        %v4459 = vunpack.c.l.b16 %v4418
        %v4460 = vunpack.c.l.b16 %v4419
        %v4461 = vunpack.c.l.b16 %v4420
        %v4462 = vunpack.c.l.b16 %v4421
        %v4463 = vunpack.c.l.b16 %v4422
        %v4464 = vunpack.c.l.b16 %v4423
        %v4465 = vunpack.c.l.b16 %v4424
        %v4466 = vunpack.c.l.b16 %v4425
        %v4467 = vunpack.c.l.b16 %v4426
        %v4468 = vunpack.c.l.b16 %v4427
        %v4469 = vunpack.c.l.b16 %v4428
        %v4470 = vunpack.c.l.b16 %v4429
        %v4471 = vunpack.c.l.b16 %v4430
        %v4472 = vpack.c.b16 %v4457, %v4456
        %v4473 = vpack.c.b16 %v4459, %v4458
        %v4474 = vpack.c.b16 %v4461, %v4460
        %v4475 = vpack.c.b16 %v4463, %v4462
        %v4476 = vpack.c.b16 %v4465, %v4464
        %v4477 = vpack.c.b16 %v4467, %v4466
        %v4478 = vpack.c.b16 %v4469, %v4468
        %v4479 = vpack.c.b16 %v4471, %v4470
        %4488 = vmatprep.subr.bf16.mxu0 0
        %4489 = vmatpush1.bf16.msra.mxu0 %v4472
        %4490 = vmatprep.subr.bf16.mxu0 0
        %4491 = vmatpush1.bf16.msra.mxu0 %v4473
        %4492 = vmatprep.subr.bf16.mxu0 0
        %4493 = vmatpush1.bf16.msra.mxu0 %v4474
        %4494 = vmatprep.subr.bf16.mxu0 0
        %4495 = vmatpush1.bf16.msra.mxu0 %v4475
        %4496 = vmatprep.subr.bf16.mxu0 0
        %4497 = vmatpush1.bf16.msra.mxu0 %v4476
        %4498 = vmatprep.subr.bf16.mxu0 0
        %4499 = vmatpush1.bf16.msra.mxu0 %v4477
        %4500 = vmatprep.subr.bf16.mxu0 0
        %4501 = vmatpush1.bf16.msra.mxu0 %v4478
        %4502 = vmatprep.subr.bf16.mxu0 0
        %4503 = vmatpush1.bf16.msra.mxu0 %v4479
        %4504 = vmatprep.subr.bf16.mxu0 0
        %4505 = vmatpush1.bf16.msra.mxu0 0
        %4506 = vmatprep.subr.bf16.mxu0 0
        %4507 = vmatpush1.bf16.msra.mxu0 0
        %4508 = vmatprep.subr.bf16.mxu0 0
        %4509 = vmatpush1.bf16.msra.mxu0 0
        %4510 = vmatprep.subr.bf16.mxu0 0
        %4511 = vmatpush1.bf16.msra.mxu0 0
        %4512 = vmatprep.subr.bf16.mxu0 0
        %4513 = vmatpush1.bf16.msra.mxu0 0
        %4514 = vmatprep.subr.bf16.mxu0 0
        %4515 = vmatpush1.bf16.msra.mxu0 0
        %4516 = vmatprep.subr.bf16.mxu0 0
        %4517 = vmatpush1.bf16.msra.mxu0 0
        %4518 = vmatprep.subr.bf16.mxu0 0
        %4519 = vmatpush1.bf16.msra.mxu0 0
        %4520 = vmatprep.mubr.bf16.mxu0 0
        %4521 = vmatmul.mubr.bf16.gmra.mrb[0].mxu0 %v4432
        %v4522 = vpop.f32.mrb[0].mxu0
        %v4523 = vadd.f32 %v4438, %v4522
        %v4524 = vpop.f32.mrb[0].mxu0
        %v4525 = vpop.f32.mrb[0].mxu0
        %v4526 = vadd.f32 %v4438, %v4525
        %v4527 = vpop.f32.mrb[0].mxu0
        %4528 = vmatprep.mubr.bf16.mxu0 0
        %4529 = vmatmul.mubr.bf16.gmra.mrb[0].mxu0 %v4433
        %v4530 = vpop.f32.mrb[0].mxu0
        %v4531 = vadd.f32 %v4438, %v4530
        %v4532 = vpop.f32.mrb[0].mxu0
        %v4533 = vpop.f32.mrb[0].mxu0
        %v4534 = vadd.f32 %v4438, %v4533
        %v4535 = vpop.f32.mrb[0].mxu0
        %4536 = vdwg.mxu0
        %v4537 = vadd.f32 %v4191, %v4523
        %v4538 = vadd.f32 %v4192, %v4526
        %v4539 = vadd.f32 %v4193, %v4531
        %v4540 = vadd.f32 %v4194, %v4534
        %4541 = vst [vmem:[#allocation2] sm:$0xff] %v4537
        %4542 = vst [vmem:[#allocation2 + $0x8] sm:$0xff] %v4538
        %4543 = vst [vmem:[#allocation2 + $0x10] sm:$0xff] %v4539
        %4544 = vst [vmem:[#allocation2 + $0x18] sm:$0xff] %v4540
        %p4545 = scmp.eq.s32.totalorder %s121, 1
        // Predicated region
        $region361: #{srm_forward.1} parent=219 // pred_check
          %p4546 = pneg %p4545
        $region362: #{srm_forward.1} parent=219 // pred_check_branch
          %4548 = sbr.rel (%p4546) target = $region364
        $region363: #{srm_forward.1} parent=219 // pred_region
          %v4549 = vld [vmem:[#allocation2] sm:$0xff]
          %v4550 = vld [vmem:[#allocation2 + $0x10] sm:$0xff]
          %v4551 = vld [vmem:[#allocation34] sm:$0xf]
          %v4552 = vld [vmem:[#allocation34 + $0x4] sm:$0xf]
          %v4553 = vld [vmem:[#allocation34 + $0x8] sm:$0xf]
          %v4554 = vld [vmem:[#allocation34 + $0xc] sm:$0xf]
          %v4555 = vld [vmem:[#allocation34 + $0x10] sm:$0xf]
          %v4556 = vld [vmem:[#allocation34 + $0x14] sm:$0xf]
          %v4557 = vld [vmem:[#allocation34 + $0x18] sm:$0xf]
          %v4558 = vld [vmem:[#allocation34 + $0x1c] sm:$0xf]
          %v4559 = vld [vmem:[#allocation34 + $0x20] sm:$0xf]
          %v4560 = vld [vmem:[#allocation34 + $0x24] sm:$0xf]
          %v4561 = vld [vmem:[#allocation34 + $0x28] sm:$0xf]
          %v4562 = vld [vmem:[#allocation34 + $0x2c] sm:$0xf]
          %v4563 = vld [vmem:[#allocation34 + $0x30] sm:$0xf]
          %v4564 = vld [vmem:[#allocation34 + $0x34] sm:$0xf]
          %v4565 = vld [vmem:[#allocation34 + $0x38] sm:$0xf]
          %v4566 = vld [vmem:[#allocation34 + $0x3c] sm:$0xf]
          %v4567 = vld [vmem:[#allocation35] sm:$0x1]
          %v4568 = vpack.c.bf16 %v4550, %v4549
          %v4570 = vlaneseq
          %v4571 = vshrl.u32 %v4570, 7
          %v4572 = vsub.s32 0, %v4571
          %v4573 = vrot.slane %v4567, %v4572
          %v4591 = vunpack.c.l.b16 %v4551
          %v4592 = vunpack.c.l.b16 %v4552
          %v4593 = vunpack.c.l.b16 %v4553
          %v4594 = vunpack.c.l.b16 %v4554
          %v4595 = vunpack.c.l.b16 %v4555
          %v4596 = vunpack.c.l.b16 %v4556
          %v4597 = vunpack.c.l.b16 %v4557
          %v4598 = vunpack.c.l.b16 %v4558
          %v4599 = vunpack.c.l.b16 %v4559
          %v4600 = vunpack.c.l.b16 %v4560
          %v4601 = vunpack.c.l.b16 %v4561
          %v4602 = vunpack.c.l.b16 %v4562
          %v4603 = vunpack.c.l.b16 %v4563
          %v4604 = vunpack.c.l.b16 %v4564
          %v4605 = vunpack.c.l.b16 %v4565
          %v4606 = vunpack.c.l.b16 %v4566
          %v4607 = vpack.c.b16 %v4592, %v4591
          %v4608 = vpack.c.b16 %v4594, %v4593
          %v4609 = vpack.c.b16 %v4596, %v4595
          %v4610 = vpack.c.b16 %v4598, %v4597
          %v4611 = vpack.c.b16 %v4600, %v4599
          %v4612 = vpack.c.b16 %v4602, %v4601
          %v4613 = vpack.c.b16 %v4604, %v4603
          %v4614 = vpack.c.b16 %v4606, %v4605
          %4623 = vmatprep.subr.bf16.mxu0 0
          %4624 = vmatpush1.bf16.msra.mxu0 %v4607
          %4625 = vmatprep.subr.bf16.mxu0 0
          %4626 = vmatpush1.bf16.msra.mxu0 %v4608
          %4627 = vmatprep.subr.bf16.mxu0 0
          %4628 = vmatpush1.bf16.msra.mxu0 %v4609
          %4629 = vmatprep.subr.bf16.mxu0 0
          %4630 = vmatpush1.bf16.msra.mxu0 %v4610
          %4631 = vmatprep.subr.bf16.mxu0 0
          %4632 = vmatpush1.bf16.msra.mxu0 %v4611
          %4633 = vmatprep.subr.bf16.mxu0 0
          %4634 = vmatpush1.bf16.msra.mxu0 %v4612
          %4635 = vmatprep.subr.bf16.mxu0 0
          %4636 = vmatpush1.bf16.msra.mxu0 %v4613
          %4637 = vmatprep.subr.bf16.mxu0 0
          %4638 = vmatpush1.bf16.msra.mxu0 %v4614
          %4639 = vmatprep.subr.bf16.mxu0 0
          %4640 = vmatpush1.bf16.msra.mxu0 0
          %4641 = vmatprep.subr.bf16.mxu0 0
          %4642 = vmatpush1.bf16.msra.mxu0 0
          %4643 = vmatprep.subr.bf16.mxu0 0
          %4644 = vmatpush1.bf16.msra.mxu0 0
          %4645 = vmatprep.subr.bf16.mxu0 0
          %4646 = vmatpush1.bf16.msra.mxu0 0
          %4647 = vmatprep.subr.bf16.mxu0 0
          %4648 = vmatpush1.bf16.msra.mxu0 0
          %4649 = vmatprep.subr.bf16.mxu0 0
          %4650 = vmatpush1.bf16.msra.mxu0 0
          %4651 = vmatprep.subr.bf16.mxu0 0
          %4652 = vmatpush1.bf16.msra.mxu0 0
          %4653 = vmatprep.subr.bf16.mxu0 0
          %4654 = vmatpush1.bf16.msra.mxu0 0
          %4655 = vmatprep.mubr.bf16.mxu0 0
          %4656 = vmatmul.mubr.bf16.gmra.mrb[0].mxu0 %v4568
          %v4657 = vpop.f32.mrb[0].mxu0
          %v4658 = vadd.f32 %v4573, %v4657
          %v4659 = vpop.f32.mrb[0].mxu0
          %v4660 = vpop.f32.mrb[0].mxu0
          %v4661 = vadd.f32 %v4573, %v4660
          %v4662 = vpop.f32.mrb[0].mxu0
          %4663 = vdwg.mxu0
          %v4664 = vld [vmem:[#allocation36] sm:$0x1]
          %v4665 = vld [vmem:[#allocation37] sm:$0x1]
          %4666 = vadd.xlane.f32.xlu0 %v4658
          %v4667 = vpop.xlane.xlu0 %4666
          %4668 = vadd.xlane.f32.xlu0 %v4661
          %v4669 = vpop.xlane.xlu0 %4668
          %v4670 = vmul.f32 %v4667, 0.015625
          %v4671 = vmul.f32 %v4669, 0.015625
          %v4672 = vmul.f32 %v4658, %v4658
          %v4673 = vmul.f32 %v4661, %v4661
          %4674 = vadd.xlane.f32.xlu0 %v4672
          %v4675 = vpop.xlane.xlu0 %4674
          %4676 = vadd.xlane.f32.xlu0 %v4673
          %v4677 = vpop.xlane.xlu0 %4676
          %v4678 = vmul.f32 %v4675, 0.015625
          %v4679 = vmul.f32 %v4677, 0.015625
          %v4680 = vmul.f32 %v4670, %v4670
          %v4681 = vmul.f32 %v4671, %v4671
          %v4682 = vsub.f32 %v4678, %v4680
          %v4683 = vsub.f32 %v4679, %v4681
          %v4684 = vmax.f32 %v4682, 0.0
          %v4685 = vmax.f32 %v4683, 0.0
          %v4686 = vsub.f32 %v4658, %v4670
          %v4687 = vsub.f32 %v4661, %v4671
          %v4688 = vadd.f32 %v4684, 1e-05
          %v4689 = vadd.f32 %v4685, 1e-05
          %v4690 = vrsqrt.pop %v4688
          %v4691 = vrsqrt.pop %v4689
          %v4692 = vmul.f32 %v4686, %v4690
          %v4693 = vmul.f32 %v4687, %v4691
          %v4695 = vlaneseq
          %v4696 = vshrl.u32 %v4695, 7
          %v4697 = vsub.s32 0, %v4696
          %v4698 = vrot.slane %v4664, %v4697
          %v4700 = vmul.f32 %v4692, %v4698
          %v4701 = vmul.f32 %v4693, %v4698
          %v4703 = vlaneseq
          %v4704 = vshrl.u32 %v4703, 7
          %v4705 = vsub.s32 0, %v4704
          %v4706 = vrot.slane %v4665, %v4705
          %v4708 = vadd.f32 %v4700, %v4706
          %v4709 = vadd.f32 %v4701, %v4706
          %v4710 = vmul.f32 %v4708, 0.5
          %v4711 = vmul.f32 %v4709, 0.5
          %v4712 = vmul.f32 %v4708, 0.70710677
          %v4713 = vmul.f32 %v4709, 0.70710677
          %v4714 = verf.f32.pop %v4712
          %v4715 = verf.f32.pop %v4713
          %v4716 = vadd.f32 %v4714, 1.0
          %v4717 = vadd.f32 %v4715, 1.0
          %v4718 = vmul.f32 %v4710, %v4716
          %v4719 = vmul.f32 %v4711, %v4717
          %v4720 = vld [vmem:[#allocation38] sm:$0xf]
          %v4721 = vld [vmem:[#allocation38 + $0x4] sm:$0xf]
          %v4722 = vld [vmem:[#allocation38 + $0x8] sm:$0xf]
          %v4723 = vld [vmem:[#allocation38 + $0xc] sm:$0xf]
          %v4724 = vld [vmem:[#allocation38 + $0x10] sm:$0xf]
          %v4725 = vld [vmem:[#allocation38 + $0x14] sm:$0xf]
          %v4726 = vld [vmem:[#allocation38 + $0x18] sm:$0xf]
          %v4727 = vld [vmem:[#allocation38 + $0x1c] sm:$0xf]
          %v4728 = vld [vmem:[#allocation38 + $0x20] sm:$0xf]
          %v4729 = vld [vmem:[#allocation38 + $0x24] sm:$0xf]
          %v4730 = vld [vmem:[#allocation38 + $0x28] sm:$0xf]
          %v4731 = vld [vmem:[#allocation38 + $0x2c] sm:$0xf]
          %v4732 = vld [vmem:[#allocation38 + $0x30] sm:$0xf]
          %v4733 = vld [vmem:[#allocation38 + $0x34] sm:$0xf]
          %v4734 = vld [vmem:[#allocation38 + $0x38] sm:$0xf]
          %v4735 = vld [vmem:[#allocation38 + $0x3c] sm:$0xf]
          %v4736 = vld [vmem:[#allocation39] sm:$0x1]
          %v4737 = vpack.c.bf16 %v4719, %v4718
          %v4739 = vlaneseq
          %v4740 = vshrl.u32 %v4739, 7
          %v4741 = vsub.s32 0, %v4740
          %v4742 = vrot.slane %v4736, %v4741
          %v4760 = vunpack.c.l.b16 %v4720
          %v4761 = vunpack.c.l.b16 %v4721
          %v4762 = vunpack.c.l.b16 %v4722
          %v4763 = vunpack.c.l.b16 %v4723
          %v4764 = vunpack.c.l.b16 %v4724
          %v4765 = vunpack.c.l.b16 %v4725
          %v4766 = vunpack.c.l.b16 %v4726
          %v4767 = vunpack.c.l.b16 %v4727
          %v4768 = vunpack.c.l.b16 %v4728
          %v4769 = vunpack.c.l.b16 %v4729
          %v4770 = vunpack.c.l.b16 %v4730
          %v4771 = vunpack.c.l.b16 %v4731
          %v4772 = vunpack.c.l.b16 %v4732
          %v4773 = vunpack.c.l.b16 %v4733
          %v4774 = vunpack.c.l.b16 %v4734
          %v4775 = vunpack.c.l.b16 %v4735
          %v4776 = vpack.c.b16 %v4761, %v4760
          %v4777 = vpack.c.b16 %v4763, %v4762
          %v4778 = vpack.c.b16 %v4765, %v4764
          %v4779 = vpack.c.b16 %v4767, %v4766
          %v4780 = vpack.c.b16 %v4769, %v4768
          %v4781 = vpack.c.b16 %v4771, %v4770
          %v4782 = vpack.c.b16 %v4773, %v4772
          %v4783 = vpack.c.b16 %v4775, %v4774
          %4792 = vmatprep.subr.bf16.mxu0 0
          %4793 = vmatpush1.bf16.msra.mxu0 %v4776
          %4794 = vmatprep.subr.bf16.mxu0 0
          %4795 = vmatpush1.bf16.msra.mxu0 %v4777
          %4796 = vmatprep.subr.bf16.mxu0 0
          %4797 = vmatpush1.bf16.msra.mxu0 %v4778
          %4798 = vmatprep.subr.bf16.mxu0 0
          %4799 = vmatpush1.bf16.msra.mxu0 %v4779
          %4800 = vmatprep.subr.bf16.mxu0 0
          %4801 = vmatpush1.bf16.msra.mxu0 %v4780
          %4802 = vmatprep.subr.bf16.mxu0 0
          %4803 = vmatpush1.bf16.msra.mxu0 %v4781
          %4804 = vmatprep.subr.bf16.mxu0 0
          %4805 = vmatpush1.bf16.msra.mxu0 %v4782
          %4806 = vmatprep.subr.bf16.mxu0 0
          %4807 = vmatpush1.bf16.msra.mxu0 %v4783
          %4808 = vmatprep.subr.bf16.mxu0 0
          %4809 = vmatpush1.bf16.msra.mxu0 0
          %4810 = vmatprep.subr.bf16.mxu0 0
          %4811 = vmatpush1.bf16.msra.mxu0 0
          %4812 = vmatprep.subr.bf16.mxu0 0
          %4813 = vmatpush1.bf16.msra.mxu0 0
          %4814 = vmatprep.subr.bf16.mxu0 0
          %4815 = vmatpush1.bf16.msra.mxu0 0
          %4816 = vmatprep.subr.bf16.mxu0 0
          %4817 = vmatpush1.bf16.msra.mxu0 0
          %4818 = vmatprep.subr.bf16.mxu0 0
          %4819 = vmatpush1.bf16.msra.mxu0 0
          %4820 = vmatprep.subr.bf16.mxu0 0
          %4821 = vmatpush1.bf16.msra.mxu0 0
          %4822 = vmatprep.subr.bf16.mxu0 0
          %4823 = vmatpush1.bf16.msra.mxu0 0
          %4824 = vmatprep.mubr.bf16.mxu0 0
          %4825 = vmatmul.mubr.bf16.gmra.mrb[0].mxu0 %v4737
          %v4826 = vpop.f32.mrb[0].mxu0
          %v4827 = vadd.f32 %v4742, %v4826
          %v4828 = vpop.f32.mrb[0].mxu0
          %v4829 = vpop.f32.mrb[0].mxu0
          %v4830 = vadd.f32 %v4742, %v4829
          %v4831 = vpop.f32.mrb[0].mxu0
          %4832 = vdwg.mxu0
          %v4833 = vld [vmem:[#allocation40] sm:$0x1]
          %v4834 = vld [vmem:[#allocation42] sm:$0x1]
          %4835 = vadd.xlane.f32.xlu0 %v4827
          %v4836 = vpop.xlane.xlu0 %4835
          %4837 = vadd.xlane.f32.xlu0 %v4830
          %v4838 = vpop.xlane.xlu0 %4837
          %v4839 = vmul.f32 %v4836, 0.03125
          %v4840 = vmul.f32 %v4838, 0.03125
          %v4841 = vmul.f32 %v4827, %v4827
          %v4842 = vmul.f32 %v4830, %v4830
          %4843 = vadd.xlane.f32.xlu0 %v4841
          %v4844 = vpop.xlane.xlu0 %4843
          %4845 = vadd.xlane.f32.xlu0 %v4842
          %v4846 = vpop.xlane.xlu0 %4845
          %v4847 = vmul.f32 %v4844, 0.03125
          %v4848 = vmul.f32 %v4846, 0.03125
          %v4849 = vmul.f32 %v4839, %v4839
          %v4850 = vmul.f32 %v4840, %v4840
          %v4851 = vsub.f32 %v4847, %v4849
          %v4852 = vsub.f32 %v4848, %v4850
          %v4853 = vmax.f32 %v4851, 0.0
          %v4854 = vmax.f32 %v4852, 0.0
          %v4855 = vsub.f32 %v4827, %v4839
          %v4856 = vsub.f32 %v4830, %v4840
          %v4857 = vadd.f32 %v4853, 1e-05
          %v4858 = vadd.f32 %v4854, 1e-05
          %v4859 = vrsqrt.pop %v4857
          %v4860 = vrsqrt.pop %v4858
          %v4861 = vmul.f32 %v4855, %v4859
          %v4862 = vmul.f32 %v4856, %v4860
          %v4864 = vlaneseq
          %v4865 = vshrl.u32 %v4864, 7
          %v4866 = vsub.s32 0, %v4865
          %v4867 = vrot.slane %v4833, %v4866
          %v4869 = vmul.f32 %v4861, %v4867
          %v4870 = vmul.f32 %v4862, %v4867
          %v4872 = vlaneseq
          %v4873 = vshrl.u32 %v4872, 7
          %v4874 = vsub.s32 0, %v4873
          %v4875 = vrot.slane %v4834, %v4874
          %v4877 = vadd.f32 %v4869, %v4875
          %v4878 = vadd.f32 %v4870, %v4875
          %v4879 = vmul.f32 %v4877, 0.5
          %v4880 = vmul.f32 %v4878, 0.5
          %v4881 = vmul.f32 %v4877, 0.70710677
          %v4882 = vmul.f32 %v4878, 0.70710677
          %v4883 = verf.f32.pop %v4881
          %v4884 = verf.f32.pop %v4882
          %v4885 = vadd.f32 %v4883, 1.0
          %v4886 = vadd.f32 %v4884, 1.0
          %v4887 = vmul.f32 %v4879, %v4885
          %v4888 = vmul.f32 %v4880, %v4886
          %v4889 = vld [vmem:[#allocation43] sm:$0xf]
          %v4890 = vld [vmem:[#allocation43 + $0x4] sm:$0xf]
          %v4891 = vld [vmem:[#allocation43 + $0x8] sm:$0xf]
          %v4892 = vld [vmem:[#allocation43 + $0xc] sm:$0xf]
          %v4893 = vld [vmem:[#allocation43 + $0x10] sm:$0xf]
          %v4894 = vld [vmem:[#allocation43 + $0x14] sm:$0xf]
          %v4895 = vld [vmem:[#allocation43 + $0x18] sm:$0xf]
          %v4896 = vld [vmem:[#allocation43 + $0x1c] sm:$0xf]
          %v4897 = vld [vmem:[#allocation43 + $0x20] sm:$0xf]
          %v4898 = vld [vmem:[#allocation43 + $0x24] sm:$0xf]
          %v4899 = vld [vmem:[#allocation43 + $0x28] sm:$0xf]
          %v4900 = vld [vmem:[#allocation43 + $0x2c] sm:$0xf]
          %v4901 = vld [vmem:[#allocation43 + $0x30] sm:$0xf]
          %v4902 = vld [vmem:[#allocation43 + $0x34] sm:$0xf]
          %v4903 = vld [vmem:[#allocation43 + $0x38] sm:$0xf]
          %v4904 = vld [vmem:[#allocation43 + $0x3c] sm:$0xf]
          %v4905 = vld [vmem:[#allocation45] sm:$0x1]
          %v4906 = vpack.c.bf16 %v4888, %v4887
          %v4908 = vlaneseq
          %v4909 = vshrl.u32 %v4908, 7
          %v4910 = vsub.s32 0, %v4909
          %v4911 = vrot.slane %v4905, %v4910
          %v4929 = vunpack.c.l.b16 %v4889
          %v4930 = vunpack.c.l.b16 %v4890
          %v4931 = vunpack.c.l.b16 %v4891
          %v4932 = vunpack.c.l.b16 %v4892
          %v4933 = vunpack.c.l.b16 %v4893
          %v4934 = vunpack.c.l.b16 %v4894
          %v4935 = vunpack.c.l.b16 %v4895
          %v4936 = vunpack.c.l.b16 %v4896
          %v4937 = vunpack.c.l.b16 %v4897
          %v4938 = vunpack.c.l.b16 %v4898
          %v4939 = vunpack.c.l.b16 %v4899
          %v4940 = vunpack.c.l.b16 %v4900
          %v4941 = vunpack.c.l.b16 %v4901
          %v4942 = vunpack.c.l.b16 %v4902
          %v4943 = vunpack.c.l.b16 %v4903
          %v4944 = vunpack.c.l.b16 %v4904
          %v4945 = vpack.c.b16 %v4930, %v4929
          %v4946 = vpack.c.b16 %v4932, %v4931
          %v4947 = vpack.c.b16 %v4934, %v4933
          %v4948 = vpack.c.b16 %v4936, %v4935
          %v4949 = vpack.c.b16 %v4938, %v4937
          %v4950 = vpack.c.b16 %v4940, %v4939
          %v4951 = vpack.c.b16 %v4942, %v4941
          %v4952 = vpack.c.b16 %v4944, %v4943
          %4961 = vmatprep.subr.bf16.mxu0 0
          %4962 = vmatpush1.bf16.msra.mxu0 %v4945
          %4963 = vmatprep.subr.bf16.mxu0 0
          %4964 = vmatpush1.bf16.msra.mxu0 %v4946
          %4965 = vmatprep.subr.bf16.mxu0 0
          %4966 = vmatpush1.bf16.msra.mxu0 %v4947
          %4967 = vmatprep.subr.bf16.mxu0 0
          %4968 = vmatpush1.bf16.msra.mxu0 %v4948
          %4969 = vmatprep.subr.bf16.mxu0 0
          %4970 = vmatpush1.bf16.msra.mxu0 %v4949
          %4971 = vmatprep.subr.bf16.mxu0 0
          %4972 = vmatpush1.bf16.msra.mxu0 %v4950
          %4973 = vmatprep.subr.bf16.mxu0 0
          %4974 = vmatpush1.bf16.msra.mxu0 %v4951
          %4975 = vmatprep.subr.bf16.mxu0 0
          %4976 = vmatpush1.bf16.msra.mxu0 %v4952
          %4977 = vmatprep.subr.bf16.mxu0 0
          %4978 = vmatpush1.bf16.msra.mxu0 0
          %4979 = vmatprep.subr.bf16.mxu0 0
          %4980 = vmatpush1.bf16.msra.mxu0 0
          %4981 = vmatprep.subr.bf16.mxu0 0
          %4982 = vmatpush1.bf16.msra.mxu0 0
          %4983 = vmatprep.subr.bf16.mxu0 0
          %4984 = vmatpush1.bf16.msra.mxu0 0
          %4985 = vmatprep.subr.bf16.mxu0 0
          %4986 = vmatpush1.bf16.msra.mxu0 0
          %4987 = vmatprep.subr.bf16.mxu0 0
          %4988 = vmatpush1.bf16.msra.mxu0 0
          %4989 = vmatprep.subr.bf16.mxu0 0
          %4990 = vmatpush1.bf16.msra.mxu0 0
          %4991 = vmatprep.subr.bf16.mxu0 0
          %4992 = vmatpush1.bf16.msra.mxu0 0
          %4993 = vmatprep.mubr.bf16.mxu0 0
          %4994 = vmatmul.mubr.bf16.gmra.mrb[0].mxu0 %v4906
          %v4995 = vpop.f32.mrb[0].mxu0
          %v4996 = vadd.f32 %v4911, %v4995
          %v4997 = vpop.f32.mrb[0].mxu0
          %v4998 = vpop.f32.mrb[0].mxu0
          %v4999 = vadd.f32 %v4911, %v4998
          %v5000 = vpop.f32.mrb[0].mxu0
          %5001 = vdwg.mxu0
          %5002 = vst [vmem:[%s101] sm:$0xff] %v4996
          %5003 = vst [vmem:[%s101 + $0x8] sm:$0xff] %v4999
        $region364: #{srm_forward.1} parent=219 // pred_fallthru
          _
        // Predicated region
        $region365: #{srm_forward.1} parent=219 // pred_check
          %p5004 = pneg %p1264
        $region366: #{srm_forward.1} parent=219 // pred_check_branch
          %5006 = sbr.rel (%p5004) target = $region368
        $region367: #{srm_forward.1} parent=219 // pred_region
          _
        $region368: #{srm_forward.1} parent=219 // pred_fallthru
          _
        // Predicated region
        $region369: #{srm_forward.1} parent=219 // pred_check
          %p5007 = pneg %p1264
        $region370: #{srm_forward.1} parent=219 // pred_check_branch
          %5009 = sbr.rel (%p5007) target = $region372
        $region371: #{srm_forward.1} parent=219 // pred_region
          _
        $region372: #{srm_forward.1} parent=219 // pred_fallthru
          _
      $region220: #{srm_forward.1} parent=5 // pred_fallthru
        _
      %p5010 = scmp.le.s32.totalorder 2, %s116
      // Predicated region
      $region373: #{srm_forward.1} parent=5 // pred_check
        %p5011 = pneg %p5010
      $region374: #{srm_forward.1} parent=5 // pred_check_branch
        %5013 = sbr.rel (%p5011) target = $region376
      $region375: #{srm_forward.1} parent=5 // pred_region
        %s5014 = ssub.s32 %s116, 2
      $region376: #{srm_forward.1} parent=5 // pred_fallthru
        _
    $region6: #{srm_forward.1} parent=1 // loop_footer
      %s120 = sadd.s32 1, %s116
    $region7: #{srm_forward.1} parent=1 // loop_footer_branch
      %115 = sbr.rel target = $region3
    $region8: #{srm_forward.1} parent=1 // loop_exit
      _
    %5015 = vsyncpa [#allocation4], 1
    %s5016 = scalar_lea.sflag [#allocation4], 1
    %5017 = vsyncpa %s5016, 1
    %5018 = vsyncpa [#allocation6], 1
    %5019 = vsyncpa [#allocation9], 1
    %5020 = vsyncpa [#allocation12], 1
    %5021 = vsyncpa [#allocation15], 1
    %5022 = vsyncpa [#allocation18], 1
    %5023 = vsyncpa [#allocation21], 1
    %5024 = vsyncpa [#allocation41], 1
    %5025 = vsyncpa [#allocation44], 1

</llo_original>
